<compile_context>
chip_gen: v7x
topology: tpu7x:2x2x1
jax: 0.10.0
libtpu: 0.0.40
codegen_flags: <defaults>
</compile_context>

<pallas_src>
import functools

import jax
import jax.numpy as jnp
from jax.experimental import pallas as pl
from jax.experimental.pallas import tpu as pltpu


# ------------------------------ fused stage kernel ---------------------------

def _stage_kernel(x_ref, lane_mask_ref, pad_mask_ref,
                  w_in_ref, b_in_ref,
                  wd_ref, bd_ref, w1_ref, b1_ref,
                  w_out_ref, b_out_ref,
                  out_ref, final_ref,
                  *, dilations, ksize, apply_softmax):
    """Whole SingleStageModel forward on a (C, L) lane-dense tile in VMEM.

    x_ref:        (Cin, L)     stage input, batch folded onto the lane axis
    lane_mask:    (1, L)       user mask at valid columns, 0 at padding columns
    pad_mask:     (1, L)       1 at valid columns, 0 at padding columns
    wd_ref:       (nl, C, K*C) im2col-reshaped dilated-conv weights
    """
    x = x_ref[...].astype(jnp.float32)
    lane_mask = lane_mask_ref[...]
    pad_mask = pad_mask_ref[...]
    L = x.shape[-1]
    half = ksize // 2

    if apply_softmax:
        # channel softmax of the previous stage's logits, fused into this stage
        m = jnp.max(x, axis=0, keepdims=True)
        e = jnp.exp(x - m)
        s = jnp.sum(e, axis=0, keepdims=True)
        x = e * pl.reciprocal(s)        # exact; approx=True if test tol relaxed
        x = x * lane_mask

    # Input 1x1 conv (unmasked in torch); re-zero padding columns so the
    # dilated taps below always read zeros outside each batch segment.
    out = (jnp.dot(w_in_ref[...], x, preferred_element_type=jnp.float32)
           + b_in_ref[...]) * pad_mask

    # NOTE: on v6e/v7x, casting matmul operands to bf16 (keeping f32 accum)
    # roughly doubles MXU throughput; kept f32 so the 1e-4 check stays tight.
    for l, d in enumerate(dilations):
        # im2col: K lane-rotated copies stacked on the sublane axis -> 1 matmul
        taps = []
        for k in range(ksize):
            sh = ((half - k) * d) % L
            taps.append(out if sh == 0 else pltpu.roll(out, sh, 1))
        slab = jnp.concatenate(taps, axis=0)                    # (K*C, L)
        h = jnp.dot(wd_ref[l], slab,
                    preferred_element_type=jnp.float32) + bd_ref[l]
        h = jnp.maximum(h, 0.0)                                 # ReLU
        y = jnp.dot(w1_ref[l], h,
                    preferred_element_type=jnp.float32) + b1_ref[l]
        # Dropout: inference mode -> identity.
        out = (out + y) * lane_mask                             # residual+mask

    final = (jnp.dot(w_out_ref[...], out, preferred_element_type=jnp.float32)
             + b_out_ref[...]) * lane_mask
    out_ref[...] = out.astype(out_ref.dtype)
    final_ref[...] = final.astype(final_ref.dtype)


# ------------------------------ kernel wrapper --------------------------------

def fused_single_stage(p, x_lane, lane_mask, pad_mask, *, ksize, apply_softmax):
    nf = p['w_in'].shape[0]
    ncls = p['w_out'].shape[0]
    L = x_lane.shape[-1]
    nl = len(p['layers'])
    dilations = tuple(2 ** i for i in range(nl))

    # (Cout, Cin, K) -> (Cout, K*Cin), matching the kernel's tap stacking order
    wd_all = jnp.stack([jnp.transpose(lp['wd'], (0, 2, 1)).reshape(nf, ksize * nf)
                        for lp in p['layers']])
    bd_all = jnp.stack([lp['bd'].reshape(nf, 1) for lp in p['layers']])
    w1_all = jnp.stack([lp['w1'] for lp in p['layers']])
    b1_all = jnp.stack([lp['b1'].reshape(nf, 1) for lp in p['layers']])

    kernel = functools.partial(_stage_kernel, dilations=dilations,
                               ksize=ksize, apply_softmax=apply_softmax)
    # Everything fits in VMEM (tiny model): single invocation, no grid, all
    # operands land in VMEM once -> one HBM round trip per stage.
    # TODO(synk): for realistic T, tile the lane axis into 512-1024 wide blocks
    # with a max_halo halo and add a "parallel" grid axis (v7x two-TC sharding);
    # set vmem_limit_bytes via pltpu.CompilerParams if tiles grow.
    return pl.pallas_call(
        kernel,
        out_shape=(jax.ShapeDtypeStruct((nf, L), x_lane.dtype),
                   jax.ShapeDtypeStruct((ncls, L), x_lane.dtype)),
    )(x_lane, lane_mask, pad_mask,
      p['w_in'], p['b_in'].reshape(nf, 1),
      wd_all, bd_all, w1_all, b1_all,
      p['w_out'], p['b_out'].reshape(ncls, 1))


# ------------------------------ model (Pallas) --------------------------------

def _round_up(v, m):
    return (v + m - 1) // m * m


def multi_stage_forward(params, x, mask):
    n, _, t = x.shape
    nl = len(params['tower1']['layers'])
    # largest dilated-conv halo across all stages (K=3 and K=5 towers)
    max_halo = max((2 ** i) * (k // 2) for i in range(nl) for k in (3, 5))
    seg = t + 2 * max_halo
    L = _round_up(n * seg, 128)

    def to_lane(a):                        # (N, C, T) -> (C, L)
        c = a.shape[1]
        ap = jnp.pad(a, ((0, 0), (0, 0), (max_halo, seg - max_halo - t)))
        al = jnp.transpose(ap, (1, 0, 2)).reshape(c, n * seg)
        return jnp.pad(al, ((0, 0), (0, L - n * seg)))

    def from_lane(al):                     # (C, L) -> (N, C, T)
        c = al.shape[0]
        a = al[:, :n * seg].reshape(c, n, seg)[:, :, max_halo:max_halo + t]
        return jnp.transpose(a, (1, 0, 2))

    mask1 = mask[:, 0:1, :]
    lane_mask = to_lane(mask1)                                   # (1, L)
    pad_mask = to_lane(jnp.ones((n, 1, t), x.dtype))             # (1, L)
    x_lane = to_lane(x)

    o1, f1 = fused_single_stage(params['tower1'], x_lane, lane_mask, pad_mask,
                                ksize=3, apply_softmax=False)
    o2, f2 = fused_single_stage(params['tower2'], x_lane, lane_mask, pad_mask,
                                ksize=5, apply_softmax=False)
    middle = o1 + o2
    out = f1 + f2
    outs = [out]
    for sp in params['stages']:
        # softmax(out, dim=channel) * mask is fused into the stage kernel
        middle, out = fused_single_stage(sp, out, lane_mask, pad_mask,
                                         ksize=3, apply_softmax=True)
        outs.append(out)
    return from_lane(middle), jnp.stack([from_lane(o) for o in outs], axis=0)


# ------------------------------ reference (JAX) --------------------------------

def _conv1d_ref(x, w, b, dilation):
    k = w.shape[-1]
    pad = dilation * (k // 2)
    y = jax.lax.conv_general_dilated(
        x, w, window_strides=(1,), padding=[(pad, pad)],
        rhs_dilation=(dilation,), dimension_numbers=("NCH", "OIH", "NCH"))
    return y + b[None, :, None]


def _single_stage_ref(p, x, mask1):
    out = jnp.einsum('oc,nct->not', p['w_in'], x) + p['b_in'][None, :, None]
    for i, lp in enumerate(p['layers']):
        h = jax.nn.relu(_conv1d_ref(out, lp['wd'], lp['bd'], 2 ** i))
        y = jnp.einsum('oc,nct->not', lp['w1'], h) + lp['b1'][None, :, None]
        out = (out + y) * mask1
    final = (jnp.einsum('oc,nct->not', p['w_out'], out)
             + p['b_out'][None, :, None]) * mask1
    return out, final


def multi_stage_ref(params, x, mask):
    mask1 = mask[:, 0:1, :]
    o1, f1 = _single_stage_ref(params['tower1'], x, mask1)
    o2, f2 = _single_stage_ref(params['tower2'], x, mask1)
    middle = o1 + o2
    out = f1 + f2
    outs = [out]
    for sp in params['stages']:
        sm = jax.nn.softmax(out, axis=1) * mask1
        middle, out = _single_stage_ref(sp, sm, mask1)
        outs.append(out)
    return middle, jnp.stack(outs, axis=0)


# ------------------------------ params init -----------------------------------

def init_single_stage(key, num_layers, num_f_maps, dim, num_classes, ksize):
    ks = jax.random.split(key, 4 + 4 * num_layers)
    s = 0.3
    layers = []
    for i in range(num_layers):
        b = 4 + 4 * i
        layers.append({
            'wd': s * jax.random.normal(ks[b + 0], (num_f_maps, num_f_maps, ksize), jnp.float32),
            'bd': s * jax.random.normal(ks[b + 1], (num_f_maps,), jnp.float32),
            'w1': s * jax.random.normal(ks[b + 2], (num_f_maps, num_f_maps), jnp.float32),
            'b1': s * jax.random.normal(ks[b + 3], (num_f_maps,), jnp.float32),
        })
    return {
        'w_in': s * jax.random.normal(ks[0], (num_f_maps, dim), jnp.float32),
        'b_in': s * jax.random.normal(ks[1], (num_f_maps,), jnp.float32),
        'layers': layers,
        'w_out': s * jax.random.normal(ks[2], (num_classes, num_f_maps), jnp.float32),
        'b_out': s * jax.random.normal(ks[3], (num_classes,), jnp.float32),
    }


def init_params(key, num_stages, num_layers, num_f_maps, dim, num_classes):
    keys = jax.random.split(key, 2 + (num_stages - 1))
    return {
        'tower1': init_single_stage(keys[0], num_layers, num_f_maps, dim, num_classes, 3),
        'tower2': init_single_stage(keys[1], num_layers, num_f_maps, dim, num_classes, 5),
        'stages': [init_single_stage(k, num_layers, num_f_maps, num_classes, num_classes, 3)
                   for k in keys[2:]],
    }


# ---------------------------------- main ---------------------------------------

if __name__ == "__main__":
    num_stages, num_layers, num_f_maps, dim, num_classes = 3, 3, 8, 6, 5
    N, T = 2, 16

    key = jax.random.PRNGKey(0)
    k_p, k_x, k_m = jax.random.split(key, 3)
    params = init_params(k_p, num_stages, num_layers, num_f_maps, dim, num_classes)

    x = jax.random.normal(k_x, (N, dim, T), jnp.float32)
    mask = (jax.random.uniform(k_m, (N, num_classes, T)) > 0.2).astype(jnp.float32)

    middle, outputs = jax.jit(multi_stage_forward)(params, x, mask)
    jax.block_until_ready((middle, outputs))

    middle_ref, outputs_ref = multi_stage_ref(params, x, mask)
    assert middle.shape == (N, num_f_maps, T)
    assert outputs.shape == (num_stages, N, num_classes, T)
    assert jnp.allclose(middle, middle_ref, atol=1e-4, rtol=1e-4)
    assert jnp.allclose(outputs, outputs_ref, atol=1e-4, rtol=1e-4)

    print("KERNEL_OK")
</pallas_src>

<mosaic_0001>
module attributes {stable_mosaic.version = 11 : i64} {
  func.func @_stage_kernel(%arg0: memref<6x128xf32, #tpu.memory_space<vmem>>, %arg1: memref<1x128xf32, #tpu.memory_space<vmem>>, %arg2: memref<1x128xf32, #tpu.memory_space<vmem>>, %arg3: memref<8x6xf32, #tpu.memory_space<vmem>>, %arg4: memref<8x1xf32, #tpu.memory_space<vmem>>, %arg5: memref<3x8x40xf32, #tpu.memory_space<vmem>>, %arg6: memref<3x8x1xf32, #tpu.memory_space<vmem>>, %arg7: memref<3x8x8xf32, #tpu.memory_space<vmem>>, %arg8: memref<3x8x1xf32, #tpu.memory_space<vmem>>, %arg9: memref<5x8xf32, #tpu.memory_space<vmem>>, %arg10: memref<5x1xf32, #tpu.memory_space<vmem>>, %arg11: memref<8x128xf32, #tpu.memory_space<vmem>>, %arg12: memref<5x128xf32, #tpu.memory_space<vmem>>) attributes {dimension_semantics = [], scalar_prefetch = 0 : i64, scratch_operands = 0 : i64, tpu.core_type = #tpu.core_type<tc>} {
    %c0 = arith.constant 0 : index
    %c0_0 = arith.constant 0 : index
    %0 = vector.load %arg0[%c0, %c0_0] : memref<6x128xf32, #tpu.memory_space<vmem>>, vector<6x128xf32>
    %c0_1 = arith.constant 0 : index
    %c0_2 = arith.constant 0 : index
    %1 = vector.load %arg1[%c0_1, %c0_2] : memref<1x128xf32, #tpu.memory_space<vmem>>, vector<1x128xf32>
    %c0_3 = arith.constant 0 : index
    %c0_4 = arith.constant 0 : index
    %2 = vector.load %arg2[%c0_3, %c0_4] : memref<1x128xf32, #tpu.memory_space<vmem>>, vector<1x128xf32>
    %c0_5 = arith.constant 0 : index
    %c0_6 = arith.constant 0 : index
    %3 = vector.load %arg3[%c0_5, %c0_6] : memref<8x6xf32, #tpu.memory_space<vmem>>, vector<8x6xf32>
    %cst = arith.constant dense<0.000000e+00> : vector<8x128xf32>
    %4 = tpu.matmul %3, %0, %cst {dimension_numbers = #tpu.dot_dimension_numbers<[1], [0], [0], [1], [0, 0, 1, 1], [], []>} : vector<8x6xf32>, vector<6x128xf32>, vector<8x128xf32> -> vector<8x128xf32>
    %c0_7 = arith.constant 0 : index
    %c0_8 = arith.constant 0 : index
    %5 = vector.load %arg4[%c0_7, %c0_8] : memref<8x1xf32, #tpu.memory_space<vmem>>, vector<8x1xf32>
    %6 = vector.broadcast %5 : vector<8x1xf32> to vector<8x128xf32>
    %7 = arith.addf %4, %6 : vector<8x128xf32>
    %8 = vector.broadcast %2 : vector<1x128xf32> to vector<8x128xf32>
    %9 = arith.mulf %7, %8 : vector<8x128xf32>
    %c2_i32 = arith.constant 2 : i32
    %10 = tpu.dynamic_rotate %9 by %c2_i32 dim 1 : vector<8x128xf32>, i32 -> vector<8x128xf32>
    %c1_i32 = arith.constant 1 : i32
    %11 = tpu.dynamic_rotate %9 by %c1_i32 dim 1 : vector<8x128xf32>, i32 -> vector<8x128xf32>
    %c127_i32 = arith.constant 127 : i32
    %12 = tpu.dynamic_rotate %9 by %c127_i32 dim 1 : vector<8x128xf32>, i32 -> vector<8x128xf32>
    %c126_i32 = arith.constant 126 : i32
    %13 = tpu.dynamic_rotate %9 by %c126_i32 dim 1 : vector<8x128xf32>, i32 -> vector<8x128xf32>
    %14 = tpu.concatenate %10, %11, %9, %12, %13 in 0 : vector<8x128xf32>, vector<8x128xf32>, vector<8x128xf32>, vector<8x128xf32>, vector<8x128xf32> -> vector<40x128xf32>
    %c0_9 = arith.constant 0 : index
    %c0_10 = arith.constant 0 : index
    %c0_11 = arith.constant 0 : index
    %15 = vector.load %arg5[%c0_9, %c0_10, %c0_11] : memref<3x8x40xf32, #tpu.memory_space<vmem>>, vector<1x8x40xf32>
    %16 = vector.shape_cast %15 : vector<1x8x40xf32> to vector<8x40xf32>
    %cst_12 = arith.constant dense<0.000000e+00> : vector<8x128xf32>
    %17 = tpu.matmul %16, %14, %cst_12 {dimension_numbers = #tpu.dot_dimension_numbers<[1], [0], [0], [1], [0, 0, 1, 1], [], []>} : vector<8x40xf32>, vector<40x128xf32>, vector<8x128xf32> -> vector<8x128xf32>
    %c0_13 = arith.constant 0 : index
    %c0_14 = arith.constant 0 : index
    %c0_15 = arith.constant 0 : index
    %18 = vector.load %arg6[%c0_13, %c0_14, %c0_15] : memref<3x8x1xf32, #tpu.memory_space<vmem>>, vector<1x8x1xf32>
    %19 = vector.shape_cast %18 : vector<1x8x1xf32> to vector<8x1xf32>
    %20 = vector.broadcast %19 : vector<8x1xf32> to vector<8x128xf32>
    %21 = arith.addf %17, %20 : vector<8x128xf32>
    %cst_16 = arith.constant 0.000000e+00 : f32
    %22 = vector.broadcast %cst_16 : f32 to vector<8x128xf32>
    %23 = arith.maximumf %21, %22 : vector<8x128xf32>
    %c0_17 = arith.constant 0 : index
    %c0_18 = arith.constant 0 : index
    %c0_19 = arith.constant 0 : index
    %24 = vector.load %arg7[%c0_17, %c0_18, %c0_19] : memref<3x8x8xf32, #tpu.memory_space<vmem>>, vector<1x8x8xf32>
    %25 = vector.shape_cast %24 : vector<1x8x8xf32> to vector<8x8xf32>
    %cst_20 = arith.constant dense<0.000000e+00> : vector<8x128xf32>
    %26 = tpu.matmul %25, %23, %cst_20 {dimension_numbers = #tpu.dot_dimension_numbers<[1], [0], [0], [1], [0, 0, 1, 1], [], []>} : vector<8x8xf32>, vector<8x128xf32>, vector<8x128xf32> -> vector<8x128xf32>
    %c0_21 = arith.constant 0 : index
    %c0_22 = arith.constant 0 : index
    %c0_23 = arith.constant 0 : index
    %27 = vector.load %arg8[%c0_21, %c0_22, %c0_23] : memref<3x8x1xf32, #tpu.memory_space<vmem>>, vector<1x8x1xf32>
    %28 = vector.shape_cast %27 : vector<1x8x1xf32> to vector<8x1xf32>
    %29 = vector.broadcast %28 : vector<8x1xf32> to vector<8x128xf32>
    %30 = arith.addf %26, %29 : vector<8x128xf32>
    %31 = arith.addf %9, %30 : vector<8x128xf32>
    %32 = vector.broadcast %1 : vector<1x128xf32> to vector<8x128xf32>
    %33 = arith.mulf %31, %32 : vector<8x128xf32>
    %c4_i32 = arith.constant 4 : i32
    %34 = tpu.dynamic_rotate %33 by %c4_i32 dim 1 : vector<8x128xf32>, i32 -> vector<8x128xf32>
    %c2_i32_24 = arith.constant 2 : i32
    %35 = tpu.dynamic_rotate %33 by %c2_i32_24 dim 1 : vector<8x128xf32>, i32 -> vector<8x128xf32>
    %c126_i32_25 = arith.constant 126 : i32
    %36 = tpu.dynamic_rotate %33 by %c126_i32_25 dim 1 : vector<8x128xf32>, i32 -> vector<8x128xf32>
    %c124_i32 = arith.constant 124 : i32
    %37 = tpu.dynamic_rotate %33 by %c124_i32 dim 1 : vector<8x128xf32>, i32 -> vector<8x128xf32>
    %38 = tpu.concatenate %34, %35, %33, %36, %37 in 0 : vector<8x128xf32>, vector<8x128xf32>, vector<8x128xf32>, vector<8x128xf32>, vector<8x128xf32> -> vector<40x128xf32>
    %c1 = arith.constant 1 : index
    %c0_26 = arith.constant 0 : index
    %c0_27 = arith.constant 0 : index
    %39 = vector.load %arg5[%c1, %c0_26, %c0_27] : memref<3x8x40xf32, #tpu.memory_space<vmem>>, vector<1x8x40xf32>
    %40 = vector.shape_cast %39 : vector<1x8x40xf32> to vector<8x40xf32>
    %cst_28 = arith.constant dense<0.000000e+00> : vector<8x128xf32>
    %41 = tpu.matmul %40, %38, %cst_28 {dimension_numbers = #tpu.dot_dimension_numbers<[1], [0], [0], [1], [0, 0, 1, 1], [], []>} : vector<8x40xf32>, vector<40x128xf32>, vector<8x128xf32> -> vector<8x128xf32>
    %c1_29 = arith.constant 1 : index
    %c0_30 = arith.constant 0 : index
    %c0_31 = arith.constant 0 : index
    %42 = vector.load %arg6[%c1_29, %c0_30, %c0_31] : memref<3x8x1xf32, #tpu.memory_space<vmem>>, vector<1x8x1xf32>
    %43 = vector.shape_cast %42 : vector<1x8x1xf32> to vector<8x1xf32>
    %44 = vector.broadcast %43 : vector<8x1xf32> to vector<8x128xf32>
    %45 = arith.addf %41, %44 : vector<8x128xf32>
    %cst_32 = arith.constant 0.000000e+00 : f32
    %46 = vector.broadcast %cst_32 : f32 to vector<8x128xf32>
    %47 = arith.maximumf %45, %46 : vector<8x128xf32>
    %c1_33 = arith.constant 1 : index
    %c0_34 = arith.constant 0 : index
    %c0_35 = arith.constant 0 : index
    %48 = vector.load %arg7[%c1_33, %c0_34, %c0_35] : memref<3x8x8xf32, #tpu.memory_space<vmem>>, vector<1x8x8xf32>
    %49 = vector.shape_cast %48 : vector<1x8x8xf32> to vector<8x8xf32>
    %cst_36 = arith.constant dense<0.000000e+00> : vector<8x128xf32>
    %50 = tpu.matmul %49, %47, %cst_36 {dimension_numbers = #tpu.dot_dimension_numbers<[1], [0], [0], [1], [0, 0, 1, 1], [], []>} : vector<8x8xf32>, vector<8x128xf32>, vector<8x128xf32> -> vector<8x128xf32>
    %c1_37 = arith.constant 1 : index
    %c0_38 = arith.constant 0 : index
    %c0_39 = arith.constant 0 : index
    %51 = vector.load %arg8[%c1_37, %c0_38, %c0_39] : memref<3x8x1xf32, #tpu.memory_space<vmem>>, vector<1x8x1xf32>
    %52 = vector.shape_cast %51 : vector<1x8x1xf32> to vector<8x1xf32>
    %53 = vector.broadcast %52 : vector<8x1xf32> to vector<8x128xf32>
    %54 = arith.addf %50, %53 : vector<8x128xf32>
    %55 = arith.addf %33, %54 : vector<8x128xf32>
    %56 = vector.broadcast %1 : vector<1x128xf32> to vector<8x128xf32>
    %57 = arith.mulf %55, %56 : vector<8x128xf32>
    %c8_i32 = arith.constant 8 : i32
    %58 = tpu.dynamic_rotate %57 by %c8_i32 dim 1 : vector<8x128xf32>, i32 -> vector<8x128xf32>
    %c4_i32_40 = arith.constant 4 : i32
    %59 = tpu.dynamic_rotate %57 by %c4_i32_40 dim 1 : vector<8x128xf32>, i32 -> vector<8x128xf32>
    %c124_i32_41 = arith.constant 124 : i32
    %60 = tpu.dynamic_rotate %57 by %c124_i32_41 dim 1 : vector<8x128xf32>, i32 -> vector<8x128xf32>
    %c120_i32 = arith.constant 120 : i32
    %61 = tpu.dynamic_rotate %57 by %c120_i32 dim 1 : vector<8x128xf32>, i32 -> vector<8x128xf32>
    %62 = tpu.concatenate %58, %59, %57, %60, %61 in 0 : vector<8x128xf32>, vector<8x128xf32>, vector<8x128xf32>, vector<8x128xf32>, vector<8x128xf32> -> vector<40x128xf32>
    %c2 = arith.constant 2 : index
    %c0_42 = arith.constant 0 : index
    %c0_43 = arith.constant 0 : index
    %63 = vector.load %arg5[%c2, %c0_42, %c0_43] : memref<3x8x40xf32, #tpu.memory_space<vmem>>, vector<1x8x40xf32>
    %64 = vector.shape_cast %63 : vector<1x8x40xf32> to vector<8x40xf32>
    %cst_44 = arith.constant dense<0.000000e+00> : vector<8x128xf32>
    %65 = tpu.matmul %64, %62, %cst_44 {dimension_numbers = #tpu.dot_dimension_numbers<[1], [0], [0], [1], [0, 0, 1, 1], [], []>} : vector<8x40xf32>, vector<40x128xf32>, vector<8x128xf32> -> vector<8x128xf32>
    %c2_45 = arith.constant 2 : index
    %c0_46 = arith.constant 0 : index
    %c0_47 = arith.constant 0 : index
    %66 = vector.load %arg6[%c2_45, %c0_46, %c0_47] : memref<3x8x1xf32, #tpu.memory_space<vmem>>, vector<1x8x1xf32>
    %67 = vector.shape_cast %66 : vector<1x8x1xf32> to vector<8x1xf32>
    %68 = vector.broadcast %67 : vector<8x1xf32> to vector<8x128xf32>
    %69 = arith.addf %65, %68 : vector<8x128xf32>
    %cst_48 = arith.constant 0.000000e+00 : f32
    %70 = vector.broadcast %cst_48 : f32 to vector<8x128xf32>
    %71 = arith.maximumf %69, %70 : vector<8x128xf32>
    %c2_49 = arith.constant 2 : index
    %c0_50 = arith.constant 0 : index
    %c0_51 = arith.constant 0 : index
    %72 = vector.load %arg7[%c2_49, %c0_50, %c0_51] : memref<3x8x8xf32, #tpu.memory_space<vmem>>, vector<1x8x8xf32>
    %73 = vector.shape_cast %72 : vector<1x8x8xf32> to vector<8x8xf32>
    %cst_52 = arith.constant dense<0.000000e+00> : vector<8x128xf32>
    %74 = tpu.matmul %73, %71, %cst_52 {dimension_numbers = #tpu.dot_dimension_numbers<[1], [0], [0], [1], [0, 0, 1, 1], [], []>} : vector<8x8xf32>, vector<8x128xf32>, vector<8x128xf32> -> vector<8x128xf32>
    %c2_53 = arith.constant 2 : index
    %c0_54 = arith.constant 0 : index
    %c0_55 = arith.constant 0 : index
    %75 = vector.load %arg8[%c2_53, %c0_54, %c0_55] : memref<3x8x1xf32, #tpu.memory_space<vmem>>, vector<1x8x1xf32>
    %76 = vector.shape_cast %75 : vector<1x8x1xf32> to vector<8x1xf32>
    %77 = vector.broadcast %76 : vector<8x1xf32> to vector<8x128xf32>
    %78 = arith.addf %74, %77 : vector<8x128xf32>
    %79 = arith.addf %57, %78 : vector<8x128xf32>
    %80 = vector.broadcast %1 : vector<1x128xf32> to vector<8x128xf32>
    %81 = arith.mulf %79, %80 : vector<8x128xf32>
    %c0_56 = arith.constant 0 : index
    %c0_57 = arith.constant 0 : index
    %82 = vector.load %arg9[%c0_56, %c0_57] : memref<5x8xf32, #tpu.memory_space<vmem>>, vector<5x8xf32>
    %cst_58 = arith.constant dense<0.000000e+00> : vector<5x128xf32>
    %83 = tpu.matmul %82, %81, %cst_58 {dimension_numbers = #tpu.dot_dimension_numbers<[1], [0], [0], [1], [0, 0, 1, 1], [], []>} : vector<5x8xf32>, vector<8x128xf32>, vector<5x128xf32> -> vector<5x128xf32>
    %c0_59 = arith.constant 0 : index
    %c0_60 = arith.constant 0 : index
    %84 = vector.load %arg10[%c0_59, %c0_60] : memref<5x1xf32, #tpu.memory_space<vmem>>, vector<5x1xf32>
    %85 = vector.broadcast %84 : vector<5x1xf32> to vector<5x128xf32>
    %86 = arith.addf %83, %85 : vector<5x128xf32>
    %87 = vector.broadcast %1 : vector<1x128xf32> to vector<5x128xf32>
    %88 = arith.mulf %86, %87 : vector<5x128xf32>
    %c0_61 = arith.constant 0 : index
    %c0_62 = arith.constant 0 : index
    %89 = vector.load %arg11[%c0_61, %c0_62] : memref<8x128xf32, #tpu.memory_space<vmem>>, vector<8x128xf32>
    tpu.vector_store %arg11[%c0_61, %c0_62], %81 {strides = array<i32>} : memref<8x128xf32, #tpu.memory_space<vmem>>, vector<8x128xf32>,
    %c0_63 = arith.constant 0 : index
    %c0_64 = arith.constant 0 : index
    %90 = vector.load %arg12[%c0_63, %c0_64] : memref<5x128xf32, #tpu.memory_space<vmem>>, vector<5x128xf32>
    tpu.vector_store %arg12[%c0_63, %c0_64], %88 {strides = array<i32>} : memref<5x128xf32, #tpu.memory_space<vmem>>, vector<5x128xf32>,
    return
  }
}

module attributes {stable_mosaic.version = 11 : i64} {
  func.func @_stage_kernel(%arg0: memref<6x128xf32, #tpu.memory_space<vmem>>, %arg1: memref<1x128xf32, #tpu.memory_space<vmem>>, %arg2: memref<1x128xf32, #tpu.memory_space<vmem>>, %arg3: memref<8x6xf32, #tpu.memory_space<vmem>>, %arg4: memref<8x1xf32, #tpu.memory_space<vmem>>, %arg5: memref<3x8x24xf32, #tpu.memory_space<vmem>>, %arg6: memref<3x8x1xf32, #tpu.memory_space<vmem>>, %arg7: memref<3x8x8xf32, #tpu.memory_space<vmem>>, %arg8: memref<3x8x1xf32, #tpu.memory_space<vmem>>, %arg9: memref<5x8xf32, #tpu.memory_space<vmem>>, %arg10: memref<5x1xf32, #tpu.memory_space<vmem>>, %arg11: memref<8x128xf32, #tpu.memory_space<vmem>>, %arg12: memref<5x128xf32, #tpu.memory_space<vmem>>) attributes {dimension_semantics = [], scalar_prefetch = 0 : i64, scratch_operands = 0 : i64, tpu.core_type = #tpu.core_type<tc>} {
    %c0 = arith.constant 0 : index
    %c0_0 = arith.constant 0 : index
    %0 = vector.load %arg0[%c0, %c0_0] : memref<6x128xf32, #tpu.memory_space<vmem>>, vector<6x128xf32>
    %c0_1 = arith.constant 0 : index
    %c0_2 = arith.constant 0 : index
    %1 = vector.load %arg1[%c0_1, %c0_2] : memref<1x128xf32, #tpu.memory_space<vmem>>, vector<1x128xf32>
    %c0_3 = arith.constant 0 : index
    %c0_4 = arith.constant 0 : index
    %2 = vector.load %arg2[%c0_3, %c0_4] : memref<1x128xf32, #tpu.memory_space<vmem>>, vector<1x128xf32>
    %c0_5 = arith.constant 0 : index
    %c0_6 = arith.constant 0 : index
    %3 = vector.load %arg3[%c0_5, %c0_6] : memref<8x6xf32, #tpu.memory_space<vmem>>, vector<8x6xf32>
    %cst = arith.constant dense<0.000000e+00> : vector<8x128xf32>
    %4 = tpu.matmul %3, %0, %cst {dimension_numbers = #tpu.dot_dimension_numbers<[1], [0], [0], [1], [0, 0, 1, 1], [], []>} : vector<8x6xf32>, vector<6x128xf32>, vector<8x128xf32> -> vector<8x128xf32>
    %c0_7 = arith.constant 0 : index
    %c0_8 = arith.constant 0 : index
    %5 = vector.load %arg4[%c0_7, %c0_8] : memref<8x1xf32, #tpu.memory_space<vmem>>, vector<8x1xf32>
    %6 = vector.broadcast %5 : vector<8x1xf32> to vector<8x128xf32>
    %7 = arith.addf %4, %6 : vector<8x128xf32>
    %8 = vector.broadcast %2 : vector<1x128xf32> to vector<8x128xf32>
    %9 = arith.mulf %7, %8 : vector<8x128xf32>
    %c1_i32 = arith.constant 1 : i32
    %10 = tpu.dynamic_rotate %9 by %c1_i32 dim 1 : vector<8x128xf32>, i32 -> vector<8x128xf32>
    %c127_i32 = arith.constant 127 : i32
    %11 = tpu.dynamic_rotate %9 by %c127_i32 dim 1 : vector<8x128xf32>, i32 -> vector<8x128xf32>
    %12 = tpu.concatenate %10, %9, %11 in 0 : vector<8x128xf32>, vector<8x128xf32>, vector<8x128xf32> -> vector<24x128xf32>
    %c0_9 = arith.constant 0 : index
    %c0_10 = arith.constant 0 : index
    %c0_11 = arith.constant 0 : index
    %13 = vector.load %arg5[%c0_9, %c0_10, %c0_11] : memref<3x8x24xf32, #tpu.memory_space<vmem>>, vector<1x8x24xf32>
    %14 = vector.shape_cast %13 : vector<1x8x24xf32> to vector<8x24xf32>
    %cst_12 = arith.constant dense<0.000000e+00> : vector<8x128xf32>
    %15 = tpu.matmul %14, %12, %cst_12 {dimension_numbers = #tpu.dot_dimension_numbers<[1], [0], [0], [1], [0, 0, 1, 1], [], []>} : vector<8x24xf32>, vector<24x128xf32>, vector<8x128xf32> -> vector<8x128xf32>
    %c0_13 = arith.constant 0 : index
    %c0_14 = arith.constant 0 : index
    %c0_15 = arith.constant 0 : index
    %16 = vector.load %arg6[%c0_13, %c0_14, %c0_15] : memref<3x8x1xf32, #tpu.memory_space<vmem>>, vector<1x8x1xf32>
    %17 = vector.shape_cast %16 : vector<1x8x1xf32> to vector<8x1xf32>
    %18 = vector.broadcast %17 : vector<8x1xf32> to vector<8x128xf32>
    %19 = arith.addf %15, %18 : vector<8x128xf32>
    %cst_16 = arith.constant 0.000000e+00 : f32
    %20 = vector.broadcast %cst_16 : f32 to vector<8x128xf32>
    %21 = arith.maximumf %19, %20 : vector<8x128xf32>
    %c0_17 = arith.constant 0 : index
    %c0_18 = arith.constant 0 : index
    %c0_19 = arith.constant 0 : index
    %22 = vector.load %arg7[%c0_17, %c0_18, %c0_19] : memref<3x8x8xf32, #tpu.memory_space<vmem>>, vector<1x8x8xf32>
    %23 = vector.shape_cast %22 : vector<1x8x8xf32> to vector<8x8xf32>
    %cst_20 = arith.constant dense<0.000000e+00> : vector<8x128xf32>
    %24 = tpu.matmul %23, %21, %cst_20 {dimension_numbers = #tpu.dot_dimension_numbers<[1], [0], [0], [1], [0, 0, 1, 1], [], []>} : vector<8x8xf32>, vector<8x128xf32>, vector<8x128xf32> -> vector<8x128xf32>
    %c0_21 = arith.constant 0 : index
    %c0_22 = arith.constant 0 : index
    %c0_23 = arith.constant 0 : index
    %25 = vector.load %arg8[%c0_21, %c0_22, %c0_23] : memref<3x8x1xf32, #tpu.memory_space<vmem>>, vector<1x8x1xf32>
    %26 = vector.shape_cast %25 : vector<1x8x1xf32> to vector<8x1xf32>
    %27 = vector.broadcast %26 : vector<8x1xf32> to vector<8x128xf32>
    %28 = arith.addf %24, %27 : vector<8x128xf32>
    %29 = arith.addf %9, %28 : vector<8x128xf32>
    %30 = vector.broadcast %1 : vector<1x128xf32> to vector<8x128xf32>
    %31 = arith.mulf %29, %30 : vector<8x128xf32>
    %c2_i32 = arith.constant 2 : i32
    %32 = tpu.dynamic_rotate %31 by %c2_i32 dim 1 : vector<8x128xf32>, i32 -> vector<8x128xf32>
    %c126_i32 = arith.constant 126 : i32
    %33 = tpu.dynamic_rotate %31 by %c126_i32 dim 1 : vector<8x128xf32>, i32 -> vector<8x128xf32>
    %34 = tpu.concatenate %32, %31, %33 in 0 : vector<8x128xf32>, vector<8x128xf32>, vector<8x128xf32> -> vector<24x128xf32>
    %c1 = arith.constant 1 : index
    %c0_24 = arith.constant 0 : index
    %c0_25 = arith.constant 0 : index
    %35 = vector.load %arg5[%c1, %c0_24, %c0_25] : memref<3x8x24xf32, #tpu.memory_space<vmem>>, vector<1x8x24xf32>
    %36 = vector.shape_cast %35 : vector<1x8x24xf32> to vector<8x24xf32>
    %cst_26 = arith.constant dense<0.000000e+00> : vector<8x128xf32>
    %37 = tpu.matmul %36, %34, %cst_26 {dimension_numbers = #tpu.dot_dimension_numbers<[1], [0], [0], [1], [0, 0, 1, 1], [], []>} : vector<8x24xf32>, vector<24x128xf32>, vector<8x128xf32> -> vector<8x128xf32>
    %c1_27 = arith.constant 1 : index
    %c0_28 = arith.constant 0 : index
    %c0_29 = arith.constant 0 : index
    %38 = vector.load %arg6[%c1_27, %c0_28, %c0_29] : memref<3x8x1xf32, #tpu.memory_space<vmem>>, vector<1x8x1xf32>
    %39 = vector.shape_cast %38 : vector<1x8x1xf32> to vector<8x1xf32>
    %40 = vector.broadcast %39 : vector<8x1xf32> to vector<8x128xf32>
    %41 = arith.addf %37, %40 : vector<8x128xf32>
    %cst_30 = arith.constant 0.000000e+00 : f32
    %42 = vector.broadcast %cst_30 : f32 to vector<8x128xf32>
    %43 = arith.maximumf %41, %42 : vector<8x128xf32>
    %c1_31 = arith.constant 1 : index
    %c0_32 = arith.constant 0 : index
    %c0_33 = arith.constant 0 : index
    %44 = vector.load %arg7[%c1_31, %c0_32, %c0_33] : memref<3x8x8xf32, #tpu.memory_space<vmem>>, vector<1x8x8xf32>
    %45 = vector.shape_cast %44 : vector<1x8x8xf32> to vector<8x8xf32>
    %cst_34 = arith.constant dense<0.000000e+00> : vector<8x128xf32>
    %46 = tpu.matmul %45, %43, %cst_34 {dimension_numbers = #tpu.dot_dimension_numbers<[1], [0], [0], [1], [0, 0, 1, 1], [], []>} : vector<8x8xf32>, vector<8x128xf32>, vector<8x128xf32> -> vector<8x128xf32>
    %c1_35 = arith.constant 1 : index
    %c0_36 = arith.constant 0 : index
    %c0_37 = arith.constant 0 : index
    %47 = vector.load %arg8[%c1_35, %c0_36, %c0_37] : memref<3x8x1xf32, #tpu.memory_space<vmem>>, vector<1x8x1xf32>
    %48 = vector.shape_cast %47 : vector<1x8x1xf32> to vector<8x1xf32>
    %49 = vector.broadcast %48 : vector<8x1xf32> to vector<8x128xf32>
    %50 = arith.addf %46, %49 : vector<8x128xf32>
    %51 = arith.addf %31, %50 : vector<8x128xf32>
    %52 = vector.broadcast %1 : vector<1x128xf32> to vector<8x128xf32>
    %53 = arith.mulf %51, %52 : vector<8x128xf32>
    %c4_i32 = arith.constant 4 : i32
    %54 = tpu.dynamic_rotate %53 by %c4_i32 dim 1 : vector<8x128xf32>, i32 -> vector<8x128xf32>
    %c124_i32 = arith.constant 124 : i32
    %55 = tpu.dynamic_rotate %53 by %c124_i32 dim 1 : vector<8x128xf32>, i32 -> vector<8x128xf32>
    %56 = tpu.concatenate %54, %53, %55 in 0 : vector<8x128xf32>, vector<8x128xf32>, vector<8x128xf32> -> vector<24x128xf32>
    %c2 = arith.constant 2 : index
    %c0_38 = arith.constant 0 : index
    %c0_39 = arith.constant 0 : index
    %57 = vector.load %arg5[%c2, %c0_38, %c0_39] : memref<3x8x24xf32, #tpu.memory_space<vmem>>, vector<1x8x24xf32>
    %58 = vector.shape_cast %57 : vector<1x8x24xf32> to vector<8x24xf32>
    %cst_40 = arith.constant dense<0.000000e+00> : vector<8x128xf32>
    %59 = tpu.matmul %58, %56, %cst_40 {dimension_numbers = #tpu.dot_dimension_numbers<[1], [0], [0], [1], [0, 0, 1, 1], [], []>} : vector<8x24xf32>, vector<24x128xf32>, vector<8x128xf32> -> vector<8x128xf32>
    %c2_41 = arith.constant 2 : index
    %c0_42 = arith.constant 0 : index
    %c0_43 = arith.constant 0 : index
    %60 = vector.load %arg6[%c2_41, %c0_42, %c0_43] : memref<3x8x1xf32, #tpu.memory_space<vmem>>, vector<1x8x1xf32>
    %61 = vector.shape_cast %60 : vector<1x8x1xf32> to vector<8x1xf32>
    %62 = vector.broadcast %61 : vector<8x1xf32> to vector<8x128xf32>
    %63 = arith.addf %59, %62 : vector<8x128xf32>
    %cst_44 = arith.constant 0.000000e+00 : f32
    %64 = vector.broadcast %cst_44 : f32 to vector<8x128xf32>
    %65 = arith.maximumf %63, %64 : vector<8x128xf32>
    %c2_45 = arith.constant 2 : index
    %c0_46 = arith.constant 0 : index
    %c0_47 = arith.constant 0 : index
    %66 = vector.load %arg7[%c2_45, %c0_46, %c0_47] : memref<3x8x8xf32, #tpu.memory_space<vmem>>, vector<1x8x8xf32>
    %67 = vector.shape_cast %66 : vector<1x8x8xf32> to vector<8x8xf32>
    %cst_48 = arith.constant dense<0.000000e+00> : vector<8x128xf32>
    %68 = tpu.matmul %67, %65, %cst_48 {dimension_numbers = #tpu.dot_dimension_numbers<[1], [0], [0], [1], [0, 0, 1, 1], [], []>} : vector<8x8xf32>, vector<8x128xf32>, vector<8x128xf32> -> vector<8x128xf32>
    %c2_49 = arith.constant 2 : index
    %c0_50 = arith.constant 0 : index
    %c0_51 = arith.constant 0 : index
    %69 = vector.load %arg8[%c2_49, %c0_50, %c0_51] : memref<3x8x1xf32, #tpu.memory_space<vmem>>, vector<1x8x1xf32>
    %70 = vector.shape_cast %69 : vector<1x8x1xf32> to vector<8x1xf32>
    %71 = vector.broadcast %70 : vector<8x1xf32> to vector<8x128xf32>
    %72 = arith.addf %68, %71 : vector<8x128xf32>
    %73 = arith.addf %53, %72 : vector<8x128xf32>
    %74 = vector.broadcast %1 : vector<1x128xf32> to vector<8x128xf32>
    %75 = arith.mulf %73, %74 : vector<8x128xf32>
    %c0_52 = arith.constant 0 : index
    %c0_53 = arith.constant 0 : index
    %76 = vector.load %arg9[%c0_52, %c0_53] : memref<5x8xf32, #tpu.memory_space<vmem>>, vector<5x8xf32>
    %cst_54 = arith.constant dense<0.000000e+00> : vector<5x128xf32>
    %77 = tpu.matmul %76, %75, %cst_54 {dimension_numbers = #tpu.dot_dimension_numbers<[1], [0], [0], [1], [0, 0, 1, 1], [], []>} : vector<5x8xf32>, vector<8x128xf32>, vector<5x128xf32> -> vector<5x128xf32>
    %c0_55 = arith.constant 0 : index
    %c0_56 = arith.constant 0 : index
    %78 = vector.load %arg10[%c0_55, %c0_56] : memref<5x1xf32, #tpu.memory_space<vmem>>, vector<5x1xf32>
    %79 = vector.broadcast %78 : vector<5x1xf32> to vector<5x128xf32>
    %80 = arith.addf %77, %79 : vector<5x128xf32>
    %81 = vector.broadcast %1 : vector<1x128xf32> to vector<5x128xf32>
    %82 = arith.mulf %80, %81 : vector<5x128xf32>
    %c0_57 = arith.constant 0 : index
    %c0_58 = arith.constant 0 : index
    %83 = vector.load %arg11[%c0_57, %c0_58] : memref<8x128xf32, #tpu.memory_space<vmem>>, vector<8x128xf32>
    tpu.vector_store %arg11[%c0_57, %c0_58], %75 {strides = array<i32>} : memref<8x128xf32, #tpu.memory_space<vmem>>, vector<8x128xf32>,
    %c0_59 = arith.constant 0 : index
    %c0_60 = arith.constant 0 : index
    %84 = vector.load %arg12[%c0_59, %c0_60] : memref<5x128xf32, #tpu.memory_space<vmem>>, vector<5x128xf32>
    tpu.vector_store %arg12[%c0_59, %c0_60], %82 {strides = array<i32>} : memref<5x128xf32, #tpu.memory_space<vmem>>, vector<5x128xf32>,
    return
  }
}

module attributes {stable_mosaic.version = 11 : i64} {
  func.func @_stage_kernel(%arg0: memref<5x128xf32, #tpu.memory_space<vmem>>, %arg1: memref<1x128xf32, #tpu.memory_space<vmem>>, %arg2: memref<1x128xf32, #tpu.memory_space<vmem>>, %arg3: memref<8x5xf32, #tpu.memory_space<vmem>>, %arg4: memref<8x1xf32, #tpu.memory_space<vmem>>, %arg5: memref<3x8x24xf32, #tpu.memory_space<vmem>>, %arg6: memref<3x8x1xf32, #tpu.memory_space<vmem>>, %arg7: memref<3x8x8xf32, #tpu.memory_space<vmem>>, %arg8: memref<3x8x1xf32, #tpu.memory_space<vmem>>, %arg9: memref<5x8xf32, #tpu.memory_space<vmem>>, %arg10: memref<5x1xf32, #tpu.memory_space<vmem>>, %arg11: memref<8x128xf32, #tpu.memory_space<vmem>>, %arg12: memref<5x128xf32, #tpu.memory_space<vmem>>) attributes {dimension_semantics = [], scalar_prefetch = 0 : i64, scratch_operands = 0 : i64, tpu.core_type = #tpu.core_type<tc>} {
    %c0 = arith.constant 0 : index
    %c0_0 = arith.constant 0 : index
    %0 = vector.load %arg0[%c0, %c0_0] : memref<5x128xf32, #tpu.memory_space<vmem>>, vector<5x128xf32>
    %c0_1 = arith.constant 0 : index
    %c0_2 = arith.constant 0 : index
    %1 = vector.load %arg1[%c0_1, %c0_2] : memref<1x128xf32, #tpu.memory_space<vmem>>, vector<1x128xf32>
    %c0_3 = arith.constant 0 : index
    %c0_4 = arith.constant 0 : index
    %2 = vector.load %arg2[%c0_3, %c0_4] : memref<1x128xf32, #tpu.memory_space<vmem>>, vector<1x128xf32>
    %cst = arith.constant dense<0xFF800000> : vector<128xf32>
    %3 = vector.multi_reduction <maximumf>, %0, %cst [0] : vector<5x128xf32> to vector<128xf32>
    %4 = vector.shape_cast %3 : vector<128xf32> to vector<1x128xf32>
    %5 = vector.broadcast %4 : vector<1x128xf32> to vector<5x128xf32>
    %6 = arith.subf %0, %5 : vector<5x128xf32>
    %7 = math.exp %6 : vector<5x128xf32>
    %cst_5 = arith.constant dense<0.000000e+00> : vector<128xf32>
    %8 = vector.multi_reduction <add>, %7, %cst_5 [0] : vector<5x128xf32> to vector<128xf32>
    %9 = vector.shape_cast %8 : vector<128xf32> to vector<1x128xf32>
    %10 = tpu.reciprocal %9 : vector<1x128xf32> -> vector<1x128xf32>
    %11 = vector.broadcast %10 : vector<1x128xf32> to vector<5x128xf32>
    %12 = arith.mulf %7, %11 : vector<5x128xf32>
    %13 = vector.broadcast %1 : vector<1x128xf32> to vector<5x128xf32>
    %14 = arith.mulf %12, %13 : vector<5x128xf32>
    %c0_6 = arith.constant 0 : index
    %c0_7 = arith.constant 0 : index
    %15 = vector.load %arg3[%c0_6, %c0_7] : memref<8x5xf32, #tpu.memory_space<vmem>>, vector<8x5xf32>
    %cst_8 = arith.constant dense<0.000000e+00> : vector<8x128xf32>
    %16 = tpu.matmul %15, %14, %cst_8 {dimension_numbers = #tpu.dot_dimension_numbers<[1], [0], [0], [1], [0, 0, 1, 1], [], []>} : vector<8x5xf32>, vector<5x128xf32>, vector<8x128xf32> -> vector<8x128xf32>
    %c0_9 = arith.constant 0 : index
    %c0_10 = arith.constant 0 : index
    %17 = vector.load %arg4[%c0_9, %c0_10] : memref<8x1xf32, #tpu.memory_space<vmem>>, vector<8x1xf32>
    %18 = vector.broadcast %17 : vector<8x1xf32> to vector<8x128xf32>
    %19 = arith.addf %16, %18 : vector<8x128xf32>
    %20 = vector.broadcast %2 : vector<1x128xf32> to vector<8x128xf32>
    %21 = arith.mulf %19, %20 : vector<8x128xf32>
    %c1_i32 = arith.constant 1 : i32
    %22 = tpu.dynamic_rotate %21 by %c1_i32 dim 1 : vector<8x128xf32>, i32 -> vector<8x128xf32>
    %c127_i32 = arith.constant 127 : i32
    %23 = tpu.dynamic_rotate %21 by %c127_i32 dim 1 : vector<8x128xf32>, i32 -> vector<8x128xf32>
    %24 = tpu.concatenate %22, %21, %23 in 0 : vector<8x128xf32>, vector<8x128xf32>, vector<8x128xf32> -> vector<24x128xf32>
    %c0_11 = arith.constant 0 : index
    %c0_12 = arith.constant 0 : index
    %c0_13 = arith.constant 0 : index
    %25 = vector.load %arg5[%c0_11, %c0_12, %c0_13] : memref<3x8x24xf32, #tpu.memory_space<vmem>>, vector<1x8x24xf32>
    %26 = vector.shape_cast %25 : vector<1x8x24xf32> to vector<8x24xf32>
    %cst_14 = arith.constant dense<0.000000e+00> : vector<8x128xf32>
    %27 = tpu.matmul %26, %24, %cst_14 {dimension_numbers = #tpu.dot_dimension_numbers<[1], [0], [0], [1], [0, 0, 1, 1], [], []>} : vector<8x24xf32>, vector<24x128xf32>, vector<8x128xf32> -> vector<8x128xf32>
    %c0_15 = arith.constant 0 : index
    %c0_16 = arith.constant 0 : index
    %c0_17 = arith.constant 0 : index
    %28 = vector.load %arg6[%c0_15, %c0_16, %c0_17] : memref<3x8x1xf32, #tpu.memory_space<vmem>>, vector<1x8x1xf32>
    %29 = vector.shape_cast %28 : vector<1x8x1xf32> to vector<8x1xf32>
    %30 = vector.broadcast %29 : vector<8x1xf32> to vector<8x128xf32>
    %31 = arith.addf %27, %30 : vector<8x128xf32>
    %cst_18 = arith.constant 0.000000e+00 : f32
    %32 = vector.broadcast %cst_18 : f32 to vector<8x128xf32>
    %33 = arith.maximumf %31, %32 : vector<8x128xf32>
    %c0_19 = arith.constant 0 : index
    %c0_20 = arith.constant 0 : index
    %c0_21 = arith.constant 0 : index
    %34 = vector.load %arg7[%c0_19, %c0_20, %c0_21] : memref<3x8x8xf32, #tpu.memory_space<vmem>>, vector<1x8x8xf32>
    %35 = vector.shape_cast %34 : vector<1x8x8xf32> to vector<8x8xf32>
    %cst_22 = arith.constant dense<0.000000e+00> : vector<8x128xf32>
    %36 = tpu.matmul %35, %33, %cst_22 {dimension_numbers = #tpu.dot_dimension_numbers<[1], [0], [0], [1], [0, 0, 1, 1], [], []>} : vector<8x8xf32>, vector<8x128xf32>, vector<8x128xf32> -> vector<8x128xf32>
    %c0_23 = arith.constant 0 : index
    %c0_24 = arith.constant 0 : index
    %c0_25 = arith.constant 0 : index
    %37 = vector.load %arg8[%c0_23, %c0_24, %c0_25] : memref<3x8x1xf32, #tpu.memory_space<vmem>>, vector<1x8x1xf32>
    %38 = vector.shape_cast %37 : vector<1x8x1xf32> to vector<8x1xf32>
    %39 = vector.broadcast %38 : vector<8x1xf32> to vector<8x128xf32>
    %40 = arith.addf %36, %39 : vector<8x128xf32>
    %41 = arith.addf %21, %40 : vector<8x128xf32>
    %42 = vector.broadcast %1 : vector<1x128xf32> to vector<8x128xf32>
    %43 = arith.mulf %41, %42 : vector<8x128xf32>
    %c2_i32 = arith.constant 2 : i32
    %44 = tpu.dynamic_rotate %43 by %c2_i32 dim 1 : vector<8x128xf32>, i32 -> vector<8x128xf32>
    %c126_i32 = arith.constant 126 : i32
    %45 = tpu.dynamic_rotate %43 by %c126_i32 dim 1 : vector<8x128xf32>, i32 -> vector<8x128xf32>
    %46 = tpu.concatenate %44, %43, %45 in 0 : vector<8x128xf32>, vector<8x128xf32>, vector<8x128xf32> -> vector<24x128xf32>
    %c1 = arith.constant 1 : index
    %c0_26 = arith.constant 0 : index
    %c0_27 = arith.constant 0 : index
    %47 = vector.load %arg5[%c1, %c0_26, %c0_27] : memref<3x8x24xf32, #tpu.memory_space<vmem>>, vector<1x8x24xf32>
    %48 = vector.shape_cast %47 : vector<1x8x24xf32> to vector<8x24xf32>
    %cst_28 = arith.constant dense<0.000000e+00> : vector<8x128xf32>
    %49 = tpu.matmul %48, %46, %cst_28 {dimension_numbers = #tpu.dot_dimension_numbers<[1], [0], [0], [1], [0, 0, 1, 1], [], []>} : vector<8x24xf32>, vector<24x128xf32>, vector<8x128xf32> -> vector<8x128xf32>
    %c1_29 = arith.constant 1 : index
    %c0_30 = arith.constant 0 : index
    %c0_31 = arith.constant 0 : index
    %50 = vector.load %arg6[%c1_29, %c0_30, %c0_31] : memref<3x8x1xf32, #tpu.memory_space<vmem>>, vector<1x8x1xf32>
    %51 = vector.shape_cast %50 : vector<1x8x1xf32> to vector<8x1xf32>
    %52 = vector.broadcast %51 : vector<8x1xf32> to vector<8x128xf32>
    %53 = arith.addf %49, %52 : vector<8x128xf32>
    %cst_32 = arith.constant 0.000000e+00 : f32
    %54 = vector.broadcast %cst_32 : f32 to vector<8x128xf32>
    %55 = arith.maximumf %53, %54 : vector<8x128xf32>
    %c1_33 = arith.constant 1 : index
    %c0_34 = arith.constant 0 : index
    %c0_35 = arith.constant 0 : index
    %56 = vector.load %arg7[%c1_33, %c0_34, %c0_35] : memref<3x8x8xf32, #tpu.memory_space<vmem>>, vector<1x8x8xf32>
    %57 = vector.shape_cast %56 : vector<1x8x8xf32> to vector<8x8xf32>
    %cst_36 = arith.constant dense<0.000000e+00> : vector<8x128xf32>
    %58 = tpu.matmul %57, %55, %cst_36 {dimension_numbers = #tpu.dot_dimension_numbers<[1], [0], [0], [1], [0, 0, 1, 1], [], []>} : vector<8x8xf32>, vector<8x128xf32>, vector<8x128xf32> -> vector<8x128xf32>
    %c1_37 = arith.constant 1 : index
    %c0_38 = arith.constant 0 : index
    %c0_39 = arith.constant 0 : index
    %59 = vector.load %arg8[%c1_37, %c0_38, %c0_39] : memref<3x8x1xf32, #tpu.memory_space<vmem>>, vector<1x8x1xf32>
    %60 = vector.shape_cast %59 : vector<1x8x1xf32> to vector<8x1xf32>
    %61 = vector.broadcast %60 : vector<8x1xf32> to vector<8x128xf32>
    %62 = arith.addf %58, %61 : vector<8x128xf32>
    %63 = arith.addf %43, %62 : vector<8x128xf32>
    %64 = vector.broadcast %1 : vector<1x128xf32> to vector<8x128xf32>
    %65 = arith.mulf %63, %64 : vector<8x128xf32>
    %c4_i32 = arith.constant 4 : i32
    %66 = tpu.dynamic_rotate %65 by %c4_i32 dim 1 : vector<8x128xf32>, i32 -> vector<8x128xf32>
    %c124_i32 = arith.constant 124 : i32
    %67 = tpu.dynamic_rotate %65 by %c124_i32 dim 1 : vector<8x128xf32>, i32 -> vector<8x128xf32>
    %68 = tpu.concatenate %66, %65, %67 in 0 : vector<8x128xf32>, vector<8x128xf32>, vector<8x128xf32> -> vector<24x128xf32>
    %c2 = arith.constant 2 : index
    %c0_40 = arith.constant 0 : index
    %c0_41 = arith.constant 0 : index
    %69 = vector.load %arg5[%c2, %c0_40, %c0_41] : memref<3x8x24xf32, #tpu.memory_space<vmem>>, vector<1x8x24xf32>
    %70 = vector.shape_cast %69 : vector<1x8x24xf32> to vector<8x24xf32>
    %cst_42 = arith.constant dense<0.000000e+00> : vector<8x128xf32>
    %71 = tpu.matmul %70, %68, %cst_42 {dimension_numbers = #tpu.dot_dimension_numbers<[1], [0], [0], [1], [0, 0, 1, 1], [], []>} : vector<8x24xf32>, vector<24x128xf32>, vector<8x128xf32> -> vector<8x128xf32>
    %c2_43 = arith.constant 2 : index
    %c0_44 = arith.constant 0 : index
    %c0_45 = arith.constant 0 : index
    %72 = vector.load %arg6[%c2_43, %c0_44, %c0_45] : memref<3x8x1xf32, #tpu.memory_space<vmem>>, vector<1x8x1xf32>
    %73 = vector.shape_cast %72 : vector<1x8x1xf32> to vector<8x1xf32>
    %74 = vector.broadcast %73 : vector<8x1xf32> to vector<8x128xf32>
    %75 = arith.addf %71, %74 : vector<8x128xf32>
    %cst_46 = arith.constant 0.000000e+00 : f32
    %76 = vector.broadcast %cst_46 : f32 to vector<8x128xf32>
    %77 = arith.maximumf %75, %76 : vector<8x128xf32>
    %c2_47 = arith.constant 2 : index
    %c0_48 = arith.constant 0 : index
    %c0_49 = arith.constant 0 : index
    %78 = vector.load %arg7[%c2_47, %c0_48, %c0_49] : memref<3x8x8xf32, #tpu.memory_space<vmem>>, vector<1x8x8xf32>
    %79 = vector.shape_cast %78 : vector<1x8x8xf32> to vector<8x8xf32>
    %cst_50 = arith.constant dense<0.000000e+00> : vector<8x128xf32>
    %80 = tpu.matmul %79, %77, %cst_50 {dimension_numbers = #tpu.dot_dimension_numbers<[1], [0], [0], [1], [0, 0, 1, 1], [], []>} : vector<8x8xf32>, vector<8x128xf32>, vector<8x128xf32> -> vector<8x128xf32>
    %c2_51 = arith.constant 2 : index
    %c0_52 = arith.constant 0 : index
    %c0_53 = arith.constant 0 : index
    %81 = vector.load %arg8[%c2_51, %c0_52, %c0_53] : memref<3x8x1xf32, #tpu.memory_space<vmem>>, vector<1x8x1xf32>
    %82 = vector.shape_cast %81 : vector<1x8x1xf32> to vector<8x1xf32>
    %83 = vector.broadcast %82 : vector<8x1xf32> to vector<8x128xf32>
    %84 = arith.addf %80, %83 : vector<8x128xf32>
    %85 = arith.addf %65, %84 : vector<8x128xf32>
    %86 = vector.broadcast %1 : vector<1x128xf32> to vector<8x128xf32>
    %87 = arith.mulf %85, %86 : vector<8x128xf32>
    %c0_54 = arith.constant 0 : index
    %c0_55 = arith.constant 0 : index
    %88 = vector.load %arg9[%c0_54, %c0_55] : memref<5x8xf32, #tpu.memory_space<vmem>>, vector<5x8xf32>
    %cst_56 = arith.constant dense<0.000000e+00> : vector<5x128xf32>
    %89 = tpu.matmul %88, %87, %cst_56 {dimension_numbers = #tpu.dot_dimension_numbers<[1], [0], [0], [1], [0, 0, 1, 1], [], []>} : vector<5x8xf32>, vector<8x128xf32>, vector<5x128xf32> -> vector<5x128xf32>
    %c0_57 = arith.constant 0 : index
    %c0_58 = arith.constant 0 : index
    %90 = vector.load %arg10[%c0_57, %c0_58] : memref<5x1xf32, #tpu.memory_space<vmem>>, vector<5x1xf32>
    %91 = vector.broadcast %90 : vector<5x1xf32> to vector<5x128xf32>
    %92 = arith.addf %89, %91 : vector<5x128xf32>
    %93 = vector.broadcast %1 : vector<1x128xf32> to vector<5x128xf32>
    %94 = arith.mulf %92, %93 : vector<5x128xf32>
    %c0_59 = arith.constant 0 : index
    %c0_60 = arith.constant 0 : index
    %95 = vector.load %arg11[%c0_59, %c0_60] : memref<8x128xf32, #tpu.memory_space<vmem>>, vector<8x128xf32>
    tpu.vector_store %arg11[%c0_59, %c0_60], %87 {strides = array<i32>} : memref<8x128xf32, #tpu.memory_space<vmem>>, vector<8x128xf32>,
    %c0_61 = arith.constant 0 : index
    %c0_62 = arith.constant 0 : index
    %96 = vector.load %arg12[%c0_61, %c0_62] : memref<5x128xf32, #tpu.memory_space<vmem>>, vector<5x128xf32>
    tpu.vector_store %arg12[%c0_61, %c0_62], %94 {strides = array<i32>} : memref<5x128xf32, #tpu.memory_space<vmem>>, vector<5x128xf32>,
    return
  }
}

module attributes {stable_mosaic.version = 11 : i64} {
  func.func @_stage_kernel(%arg0: memref<5x128xf32, #tpu.memory_space<vmem>>, %arg1: memref<1x128xf32, #tpu.memory_space<vmem>>, %arg2: memref<1x128xf32, #tpu.memory_space<vmem>>, %arg3: memref<8x5xf32, #tpu.memory_space<vmem>>, %arg4: memref<8x1xf32, #tpu.memory_space<vmem>>, %arg5: memref<3x8x24xf32, #tpu.memory_space<vmem>>, %arg6: memref<3x8x1xf32, #tpu.memory_space<vmem>>, %arg7: memref<3x8x8xf32, #tpu.memory_space<vmem>>, %arg8: memref<3x8x1xf32, #tpu.memory_space<vmem>>, %arg9: memref<5x8xf32, #tpu.memory_space<vmem>>, %arg10: memref<5x1xf32, #tpu.memory_space<vmem>>, %arg11: memref<8x128xf32, #tpu.memory_space<vmem>>, %arg12: memref<5x128xf32, #tpu.memory_space<vmem>>) attributes {dimension_semantics = [], scalar_prefetch = 0 : i64, scratch_operands = 0 : i64, tpu.core_type = #tpu.core_type<tc>} {
    %c0 = arith.constant 0 : index
    %c0_0 = arith.constant 0 : index
    %0 = vector.load %arg0[%c0, %c0_0] : memref<5x128xf32, #tpu.memory_space<vmem>>, vector<5x128xf32>
    %c0_1 = arith.constant 0 : index
    %c0_2 = arith.constant 0 : index
    %1 = vector.load %arg1[%c0_1, %c0_2] : memref<1x128xf32, #tpu.memory_space<vmem>>, vector<1x128xf32>
    %c0_3 = arith.constant 0 : index
    %c0_4 = arith.constant 0 : index
    %2 = vector.load %arg2[%c0_3, %c0_4] : memref<1x128xf32, #tpu.memory_space<vmem>>, vector<1x128xf32>
    %cst = arith.constant dense<0xFF800000> : vector<128xf32>
    %3 = vector.multi_reduction <maximumf>, %0, %cst [0] : vector<5x128xf32> to vector<128xf32>
    %4 = vector.shape_cast %3 : vector<128xf32> to vector<1x128xf32>
    %5 = vector.broadcast %4 : vector<1x128xf32> to vector<5x128xf32>
    %6 = arith.subf %0, %5 : vector<5x128xf32>
    %7 = math.exp %6 : vector<5x128xf32>
    %cst_5 = arith.constant dense<0.000000e+00> : vector<128xf32>
    %8 = vector.multi_reduction <add>, %7, %cst_5 [0] : vector<5x128xf32> to vector<128xf32>
    %9 = vector.shape_cast %8 : vector<128xf32> to vector<1x128xf32>
    %10 = tpu.reciprocal %9 : vector<1x128xf32> -> vector<1x128xf32>
    %11 = vector.broadcast %10 : vector<1x128xf32> to vector<5x128xf32>
    %12 = arith.mulf %7, %11 : vector<5x128xf32>
    %13 = vector.broadcast %1 : vector<1x128xf32> to vector<5x128xf32>
    %14 = arith.mulf %12, %13 : vector<5x128xf32>
    %c0_6 = arith.constant 0 : index
    %c0_7 = arith.constant 0 : index
    %15 = vector.load %arg3[%c0_6, %c0_7] : memref<8x5xf32, #tpu.memory_space<vmem>>, vector<8x5xf32>
    %cst_8 = arith.constant dense<0.000000e+00> : vector<8x128xf32>
    %16 = tpu.matmul %15, %14, %cst_8 {dimension_numbers = #tpu.dot_dimension_numbers<[1], [0], [0], [1], [0, 0, 1, 1], [], []>} : vector<8x5xf32>, vector<5x128xf32>, vector<8x128xf32> -> vector<8x128xf32>
    %c0_9 = arith.constant 0 : index
    %c0_10 = arith.constant 0 : index
    %17 = vector.load %arg4[%c0_9, %c0_10] : memref<8x1xf32, #tpu.memory_space<vmem>>, vector<8x1xf32>
    %18 = vector.broadcast %17 : vector<8x1xf32> to vector<8x128xf32>
    %19 = arith.addf %16, %18 : vector<8x128xf32>
    %20 = vector.broadcast %2 : vector<1x128xf32> to vector<8x128xf32>
    %21 = arith.mulf %19, %20 : vector<8x128xf32>
    %c1_i32 = arith.constant 1 : i32
    %22 = tpu.dynamic_rotate %21 by %c1_i32 dim 1 : vector<8x128xf32>, i32 -> vector<8x128xf32>
    %c127_i32 = arith.constant 127 : i32
    %23 = tpu.dynamic_rotate %21 by %c127_i32 dim 1 : vector<8x128xf32>, i32 -> vector<8x128xf32>
    %24 = tpu.concatenate %22, %21, %23 in 0 : vector<8x128xf32>, vector<8x128xf32>, vector<8x128xf32> -> vector<24x128xf32>
    %c0_11 = arith.constant 0 : index
    %c0_12 = arith.constant 0 : index
    %c0_13 = arith.constant 0 : index
    %25 = vector.load %arg5[%c0_11, %c0_12, %c0_13] : memref<3x8x24xf32, #tpu.memory_space<vmem>>, vector<1x8x24xf32>
    %26 = vector.shape_cast %25 : vector<1x8x24xf32> to vector<8x24xf32>
    %cst_14 = arith.constant dense<0.000000e+00> : vector<8x128xf32>
    %27 = tpu.matmul %26, %24, %cst_14 {dimension_numbers = #tpu.dot_dimension_numbers<[1], [0], [0], [1], [0, 0, 1, 1], [], []>} : vector<8x24xf32>, vector<24x128xf32>, vector<8x128xf32> -> vector<8x128xf32>
    %c0_15 = arith.constant 0 : index
    %c0_16 = arith.constant 0 : index
    %c0_17 = arith.constant 0 : index
    %28 = vector.load %arg6[%c0_15, %c0_16, %c0_17] : memref<3x8x1xf32, #tpu.memory_space<vmem>>, vector<1x8x1xf32>
    %29 = vector.shape_cast %28 : vector<1x8x1xf32> to vector<8x1xf32>
    %30 = vector.broadcast %29 : vector<8x1xf32> to vector<8x128xf32>
    %31 = arith.addf %27, %30 : vector<8x128xf32>
    %cst_18 = arith.constant 0.000000e+00 : f32
    %32 = vector.broadcast %cst_18 : f32 to vector<8x128xf32>
    %33 = arith.maximumf %31, %32 : vector<8x128xf32>
    %c0_19 = arith.constant 0 : index
    %c0_20 = arith.constant 0 : index
    %c0_21 = arith.constant 0 : index
    %34 = vector.load %arg7[%c0_19, %c0_20, %c0_21] : memref<3x8x8xf32, #tpu.memory_space<vmem>>, vector<1x8x8xf32>
    %35 = vector.shape_cast %34 : vector<1x8x8xf32> to vector<8x8xf32>
    %cst_22 = arith.constant dense<0.000000e+00> : vector<8x128xf32>
    %36 = tpu.matmul %35, %33, %cst_22 {dimension_numbers = #tpu.dot_dimension_numbers<[1], [0], [0], [1], [0, 0, 1, 1], [], []>} : vector<8x8xf32>, vector<8x128xf32>, vector<8x128xf32> -> vector<8x128xf32>
    %c0_23 = arith.constant 0 : index
    %c0_24 = arith.constant 0 : index
    %c0_25 = arith.constant 0 : index
    %37 = vector.load %arg8[%c0_23, %c0_24, %c0_25] : memref<3x8x1xf32, #tpu.memory_space<vmem>>, vector<1x8x1xf32>
    %38 = vector.shape_cast %37 : vector<1x8x1xf32> to vector<8x1xf32>
    %39 = vector.broadcast %38 : vector<8x1xf32> to vector<8x128xf32>
    %40 = arith.addf %36, %39 : vector<8x128xf32>
    %41 = arith.addf %21, %40 : vector<8x128xf32>
    %42 = vector.broadcast %1 : vector<1x128xf32> to vector<8x128xf32>
    %43 = arith.mulf %41, %42 : vector<8x128xf32>
    %c2_i32 = arith.constant 2 : i32
    %44 = tpu.dynamic_rotate %43 by %c2_i32 dim 1 : vector<8x128xf32>, i32 -> vector<8x128xf32>
    %c126_i32 = arith.constant 126 : i32
    %45 = tpu.dynamic_rotate %43 by %c126_i32 dim 1 : vector<8x128xf32>, i32 -> vector<8x128xf32>
    %46 = tpu.concatenate %44, %43, %45 in 0 : vector<8x128xf32>, vector<8x128xf32>, vector<8x128xf32> -> vector<24x128xf32>
    %c1 = arith.constant 1 : index
    %c0_26 = arith.constant 0 : index
    %c0_27 = arith.constant 0 : index
    %47 = vector.load %arg5[%c1, %c0_26, %c0_27] : memref<3x8x24xf32, #tpu.memory_space<vmem>>, vector<1x8x24xf32>
    %48 = vector.shape_cast %47 : vector<1x8x24xf32> to vector<8x24xf32>
    %cst_28 = arith.constant dense<0.000000e+00> : vector<8x128xf32>
    %49 = tpu.matmul %48, %46, %cst_28 {dimension_numbers = #tpu.dot_dimension_numbers<[1], [0], [0], [1], [0, 0, 1, 1], [], []>} : vector<8x24xf32>, vector<24x128xf32>, vector<8x128xf32> -> vector<8x128xf32>
    %c1_29 = arith.constant 1 : index
    %c0_30 = arith.constant 0 : index
    %c0_31 = arith.constant 0 : index
    %50 = vector.load %arg6[%c1_29, %c0_30, %c0_31] : memref<3x8x1xf32, #tpu.memory_space<vmem>>, vector<1x8x1xf32>
    %51 = vector.shape_cast %50 : vector<1x8x1xf32> to vector<8x1xf32>
    %52 = vector.broadcast %51 : vector<8x1xf32> to vector<8x128xf32>
    %53 = arith.addf %49, %52 : vector<8x128xf32>
    %cst_32 = arith.constant 0.000000e+00 : f32
    %54 = vector.broadcast %cst_32 : f32 to vector<8x128xf32>
    %55 = arith.maximumf %53, %54 : vector<8x128xf32>
    %c1_33 = arith.constant 1 : index
    %c0_34 = arith.constant 0 : index
    %c0_35 = arith.constant 0 : index
    %56 = vector.load %arg7[%c1_33, %c0_34, %c0_35] : memref<3x8x8xf32, #tpu.memory_space<vmem>>, vector<1x8x8xf32>
    %57 = vector.shape_cast %56 : vector<1x8x8xf32> to vector<8x8xf32>
    %cst_36 = arith.constant dense<0.000000e+00> : vector<8x128xf32>
    %58 = tpu.matmul %57, %55, %cst_36 {dimension_numbers = #tpu.dot_dimension_numbers<[1], [0], [0], [1], [0, 0, 1, 1], [], []>} : vector<8x8xf32>, vector<8x128xf32>, vector<8x128xf32> -> vector<8x128xf32>
    %c1_37 = arith.constant 1 : index
    %c0_38 = arith.constant 0 : index
    %c0_39 = arith.constant 0 : index
    %59 = vector.load %arg8[%c1_37, %c0_38, %c0_39] : memref<3x8x1xf32, #tpu.memory_space<vmem>>, vector<1x8x1xf32>
    %60 = vector.shape_cast %59 : vector<1x8x1xf32> to vector<8x1xf32>
    %61 = vector.broadcast %60 : vector<8x1xf32> to vector<8x128xf32>
    %62 = arith.addf %58, %61 : vector<8x128xf32>
    %63 = arith.addf %43, %62 : vector<8x128xf32>
    %64 = vector.broadcast %1 : vector<1x128xf32> to vector<8x128xf32>
    %65 = arith.mulf %63, %64 : vector<8x128xf32>
    %c4_i32 = arith.constant 4 : i32
    %66 = tpu.dynamic_rotate %65 by %c4_i32 dim 1 : vector<8x128xf32>, i32 -> vector<8x128xf32>
    %c124_i32 = arith.constant 124 : i32
    %67 = tpu.dynamic_rotate %65 by %c124_i32 dim 1 : vector<8x128xf32>, i32 -> vector<8x128xf32>
    %68 = tpu.concatenate %66, %65, %67 in 0 : vector<8x128xf32>, vector<8x128xf32>, vector<8x128xf32> -> vector<24x128xf32>
    %c2 = arith.constant 2 : index
    %c0_40 = arith.constant 0 : index
    %c0_41 = arith.constant 0 : index
    %69 = vector.load %arg5[%c2, %c0_40, %c0_41] : memref<3x8x24xf32, #tpu.memory_space<vmem>>, vector<1x8x24xf32>
    %70 = vector.shape_cast %69 : vector<1x8x24xf32> to vector<8x24xf32>
    %cst_42 = arith.constant dense<0.000000e+00> : vector<8x128xf32>
    %71 = tpu.matmul %70, %68, %cst_42 {dimension_numbers = #tpu.dot_dimension_numbers<[1], [0], [0], [1], [0, 0, 1, 1], [], []>} : vector<8x24xf32>, vector<24x128xf32>, vector<8x128xf32> -> vector<8x128xf32>
    %c2_43 = arith.constant 2 : index
    %c0_44 = arith.constant 0 : index
    %c0_45 = arith.constant 0 : index
    %72 = vector.load %arg6[%c2_43, %c0_44, %c0_45] : memref<3x8x1xf32, #tpu.memory_space<vmem>>, vector<1x8x1xf32>
    %73 = vector.shape_cast %72 : vector<1x8x1xf32> to vector<8x1xf32>
    %74 = vector.broadcast %73 : vector<8x1xf32> to vector<8x128xf32>
    %75 = arith.addf %71, %74 : vector<8x128xf32>
    %cst_46 = arith.constant 0.000000e+00 : f32
    %76 = vector.broadcast %cst_46 : f32 to vector<8x128xf32>
    %77 = arith.maximumf %75, %76 : vector<8x128xf32>
    %c2_47 = arith.constant 2 : index
    %c0_48 = arith.constant 0 : index
    %c0_49 = arith.constant 0 : index
    %78 = vector.load %arg7[%c2_47, %c0_48, %c0_49] : memref<3x8x8xf32, #tpu.memory_space<vmem>>, vector<1x8x8xf32>
    %79 = vector.shape_cast %78 : vector<1x8x8xf32> to vector<8x8xf32>
    %cst_50 = arith.constant dense<0.000000e+00> : vector<8x128xf32>
    %80 = tpu.matmul %79, %77, %cst_50 {dimension_numbers = #tpu.dot_dimension_numbers<[1], [0], [0], [1], [0, 0, 1, 1], [], []>} : vector<8x8xf32>, vector<8x128xf32>, vector<8x128xf32> -> vector<8x128xf32>
    %c2_51 = arith.constant 2 : index
    %c0_52 = arith.constant 0 : index
    %c0_53 = arith.constant 0 : index
    %81 = vector.load %arg8[%c2_51, %c0_52, %c0_53] : memref<3x8x1xf32, #tpu.memory_space<vmem>>, vector<1x8x1xf32>
    %82 = vector.shape_cast %81 : vector<1x8x1xf32> to vector<8x1xf32>
    %83 = vector.broadcast %82 : vector<8x1xf32> to vector<8x128xf32>
    %84 = arith.addf %80, %83 : vector<8x128xf32>
    %85 = arith.addf %65, %84 : vector<8x128xf32>
    %86 = vector.broadcast %1 : vector<1x128xf32> to vector<8x128xf32>
    %87 = arith.mulf %85, %86 : vector<8x128xf32>
    %c0_54 = arith.constant 0 : index
    %c0_55 = arith.constant 0 : index
    %88 = vector.load %arg9[%c0_54, %c0_55] : memref<5x8xf32, #tpu.memory_space<vmem>>, vector<5x8xf32>
    %cst_56 = arith.constant dense<0.000000e+00> : vector<5x128xf32>
    %89 = tpu.matmul %88, %87, %cst_56 {dimension_numbers = #tpu.dot_dimension_numbers<[1], [0], [0], [1], [0, 0, 1, 1], [], []>} : vector<5x8xf32>, vector<8x128xf32>, vector<5x128xf32> -> vector<5x128xf32>
    %c0_57 = arith.constant 0 : index
    %c0_58 = arith.constant 0 : index
    %90 = vector.load %arg10[%c0_57, %c0_58] : memref<5x1xf32, #tpu.memory_space<vmem>>, vector<5x1xf32>
    %91 = vector.broadcast %90 : vector<5x1xf32> to vector<5x128xf32>
    %92 = arith.addf %89, %91 : vector<5x128xf32>
    %93 = vector.broadcast %1 : vector<1x128xf32> to vector<5x128xf32>
    %94 = arith.mulf %92, %93 : vector<5x128xf32>
    %c0_59 = arith.constant 0 : index
    %c0_60 = arith.constant 0 : index
    %95 = vector.load %arg11[%c0_59, %c0_60] : memref<8x128xf32, #tpu.memory_space<vmem>>, vector<8x128xf32>
    tpu.vector_store %arg11[%c0_59, %c0_60], %87 {strides = array<i32>} : memref<8x128xf32, #tpu.memory_space<vmem>>, vector<8x128xf32>,
    %c0_61 = arith.constant 0 : index
    %c0_62 = arith.constant 0 : index
    %96 = vector.load %arg12[%c0_61, %c0_62] : memref<5x128xf32, #tpu.memory_space<vmem>>, vector<5x128xf32>
    tpu.vector_store %arg12[%c0_61, %c0_62], %94 {strides = array<i32>} : memref<5x128xf32, #tpu.memory_space<vmem>>, vector<5x128xf32>,
    return
  }
}

</mosaic_0001>

<llo_original>
// kernel: multi_stage_forward.4
$region0: #{multi_stage_forward.4}
  #allocation0 [shape = 'u32[]', space=smem, size = 0x4, offset = 0x4, fixed_abs, tag = 'smem constant byte address 0x4 - core index']
  #allocation1 [shape = 'u32[144,128]{1,0:T(1,128)}', space=vmem, size = 0x12000, scoped, tag = 'internal scratch']
  %s0 = inlined_call_operand.vmem [shape: f32[6,128], index: 0, kind: input, shape index: {}]
  %s1 = inlined_call_operand.vmem [shape: f32[1,128], index: 1, kind: input, shape index: {}]
  %s2 = inlined_call_operand.vmem [shape: f32[1,128], index: 2, kind: input, shape index: {}]
  %s3 = inlined_call_operand.vmem [shape: f32[8,6], index: 3, kind: input, shape index: {}]
  %s4 = inlined_call_operand.vmem [shape: f32[8,1], index: 4, kind: input, shape index: {}]
  %s5 = inlined_call_operand.vmem [shape: f32[3,8,24], index: 5, kind: input, shape index: {}]
  %s6 = inlined_call_operand.vmem [shape: f32[3,8,1], index: 6, kind: input, shape index: {}]
  %s7 = inlined_call_operand.vmem [shape: f32[3,8,8], index: 7, kind: input, shape index: {}]
  %s8 = inlined_call_operand.vmem [shape: f32[3,8,1], index: 8, kind: input, shape index: {}]
  %s9 = inlined_call_operand.vmem [shape: f32[5,8], index: 9, kind: input, shape index: {}]
  %s10 = inlined_call_operand.vmem [shape: f32[5,1], index: 10, kind: input, shape index: {}]
  %s11 = inlined_call_operand.hbm [shape: f32[8,128], index: 11, kind: output, shape index: {0}]
  %s12 = inlined_call_operand.vmem [shape: f32[5,128], index: 12, kind: output, shape index: {1}]
  %13 = xla_tuple %s11, %s12
  %s14 = sld [smem:[#allocation0]]
  $region62: #{multi_stage_forward.4} parent=0
    _
  %s16 = ssub.s32 1, %s14
  %s17 = scalar_select 0, %s16, %s14
  $region1: #{multi_stage_forward.4} parent=0
    #allocation2 [shape = 'u8[4096]{0}', space=vmem, size = 0x1000, scoped, tag = 'output window, operand 0, single buffered']
    #allocation3 [shape = 's32[1]{0}', space=sflag, size = 0x4, scoped, tag = 'scoped memory for multi_stage_forward.4']
    %18 = vsyncpa [#allocation3], 0
    // Predicated region
    $region2: #{multi_stage_forward.4} parent=1 // pred_check
      _
    $region3: #{multi_stage_forward.4} parent=1 // pred_check_branch
      %20 = sbr.rel (0) target = $region5
    $region4: #{multi_stage_forward.4} parent=1 // pred_region
      _
    $region5: #{multi_stage_forward.4} parent=1 // pred_fallthru
      _
    // Predicated region
    $region6: #{multi_stage_forward.4} parent=1 // pred_check
      _
    $region7: #{multi_stage_forward.4} parent=1 // pred_check_branch
      %22 = sbr.rel (0) target = $region9
    $region8: #{multi_stage_forward.4} parent=1 // pred_region
      _
    $region9: #{multi_stage_forward.4} parent=1 // pred_fallthru
      _
    // Predicated region
    $region10: #{multi_stage_forward.4} parent=1 // pred_check
      _
    $region11: #{multi_stage_forward.4} parent=1 // pred_check_branch
      %24 = sbr.rel (0) target = $region13
    $region12: #{multi_stage_forward.4} parent=1 // pred_region
      _
    $region13: #{multi_stage_forward.4} parent=1 // pred_fallthru
      _
    // Predicated region
    $region14: #{multi_stage_forward.4} parent=1 // pred_check
      _
    $region15: #{multi_stage_forward.4} parent=1 // pred_check_branch
      %26 = sbr.rel (0) target = $region17
    $region16: #{multi_stage_forward.4} parent=1 // pred_region
      _
    $region17: #{multi_stage_forward.4} parent=1 // pred_fallthru
      _
    // Predicated region
    $region18: #{multi_stage_forward.4} parent=1 // pred_check
      _
    $region19: #{multi_stage_forward.4} parent=1 // pred_check_branch
      %28 = sbr.rel (0) target = $region21
    $region20: #{multi_stage_forward.4} parent=1 // pred_region
      _
    $region21: #{multi_stage_forward.4} parent=1 // pred_fallthru
      _
    // Predicated region
    $region22: #{multi_stage_forward.4} parent=1 // pred_check
      _
    $region23: #{multi_stage_forward.4} parent=1 // pred_check_branch
      %30 = sbr.rel (0) target = $region25
    $region24: #{multi_stage_forward.4} parent=1 // pred_region
      _
    $region25: #{multi_stage_forward.4} parent=1 // pred_fallthru
      _
    // Predicated region
    $region26: #{multi_stage_forward.4} parent=1 // pred_check
      _
    $region27: #{multi_stage_forward.4} parent=1 // pred_check_branch
      %32 = sbr.rel (0) target = $region29
    $region28: #{multi_stage_forward.4} parent=1 // pred_region
      _
    $region29: #{multi_stage_forward.4} parent=1 // pred_fallthru
      _
    // Predicated region
    $region30: #{multi_stage_forward.4} parent=1 // pred_check
      _
    $region31: #{multi_stage_forward.4} parent=1 // pred_check_branch
      %34 = sbr.rel (0) target = $region33
    $region32: #{multi_stage_forward.4} parent=1 // pred_region
      _
    $region33: #{multi_stage_forward.4} parent=1 // pred_fallthru
      _
    // Predicated region
    $region34: #{multi_stage_forward.4} parent=1 // pred_check
      _
    $region35: #{multi_stage_forward.4} parent=1 // pred_check_branch
      %36 = sbr.rel (0) target = $region37
    $region36: #{multi_stage_forward.4} parent=1 // pred_region
      _
    $region37: #{multi_stage_forward.4} parent=1 // pred_fallthru
      _
    // Predicated region
    $region38: #{multi_stage_forward.4} parent=1 // pred_check
      _
    $region39: #{multi_stage_forward.4} parent=1 // pred_check_branch
      %38 = sbr.rel (0) target = $region41
    $region40: #{multi_stage_forward.4} parent=1 // pred_region
      _
    $region41: #{multi_stage_forward.4} parent=1 // pred_fallthru
      _
    // Predicated region
    $region42: #{multi_stage_forward.4} parent=1 // pred_check
      _
    $region43: #{multi_stage_forward.4} parent=1 // pred_check_branch
      %40 = sbr.rel (0) target = $region45
    $region44: #{multi_stage_forward.4} parent=1 // pred_region
      _
    $region45: #{multi_stage_forward.4} parent=1 // pred_fallthru
      _
    %v41 = vld [vmem:[%s0] sm:$0x3f]
    %v42 = vld [vmem:[%s1] sm:$0x1]
    %v43 = vld [vmem:[%s2] sm:$0x1]
    %v44 = vld [vmem:[%s3] sm:$0xff]
    %v45 = vld [vmem:[%s4] sm:$0xff]
    %47 = vset.pattern.permute.xlu0 0
    %48 = vperm.xlu0 %47, %v45
    %v49 = vpop.permute.xlu0 %48
    %vm51 = vcmask 48128
    %v53 = vsel %vm51, %v44, 0
    %vm55 = vcmask 1045504
    %v57 = vsel %vm55, %v41, 0
    %59 = vmatprep.subr.mxu0 0.0
    %60 = vmatpush1.msra.mxu0 %v57
    %61 = vmatprep.subr.mxu0 0.0
    %62 = vmatpush1.msra.mxu0 0.0
    %63 = vmatprep.subr.mxu0 0.0
    %64 = vmatpush1.msra.mxu0 0.0
    %65 = vmatprep.subr.mxu0 0.0
    %66 = vmatpush1.msra.mxu0 0.0
    %67 = vmatprep.subr.mxu0 0.0
    %68 = vmatpush1.msra.mxu0 0.0
    %69 = vmatprep.subr.mxu0 0.0
    %70 = vmatpush1.msra.mxu0 0.0
    %71 = vmatprep.subr.mxu0 0.0
    %72 = vmatpush1.msra.mxu0 0.0
    %73 = vmatprep.subr.mxu0 0.0
    %74 = vmatpush1.msra.mxu0 0.0
    %75 = vmatprep.subr.mxu0 0.0
    %76 = vmatpush1.msra.mxu0 0.0
    %77 = vmatprep.subr.mxu0 0.0
    %78 = vmatpush1.msra.mxu0 0.0
    %79 = vmatprep.subr.mxu0 0.0
    %80 = vmatpush1.msra.mxu0 0.0
    %81 = vmatprep.subr.mxu0 0.0
    %82 = vmatpush1.msra.mxu0 0.0
    %83 = vmatprep.subr.mxu0 0.0
    %84 = vmatpush1.msra.mxu0 0.0
    %85 = vmatprep.subr.mxu0 0.0
    %86 = vmatpush1.msra.mxu0 0.0
    %87 = vmatprep.subr.mxu0 0.0
    %88 = vmatpush1.msra.mxu0 0.0
    %89 = vmatprep.subr.mxu0 0.0
    %90 = vmatpush1.msra.mxu0 0.0
    %91 = vmatprep.subr.mxu0 0.0
    %92 = vmatpush1.msra.mxu0 0.0
    %93 = vmatprep.subr.mxu0 0.0
    %94 = vmatpush1.msra.mxu0 0.0
    %95 = vmatprep.subr.mxu0 0.0
    %96 = vmatpush1.msra.mxu0 0.0
    %97 = vmatprep.subr.mxu0 0.0
    %98 = vmatpush1.msra.mxu0 0.0
    %99 = vmatprep.subr.mxu0 0.0
    %100 = vmatpush1.msra.mxu0 0.0
    %101 = vmatprep.subr.mxu0 0.0
    %102 = vmatpush1.msra.mxu0 0.0
    %103 = vmatprep.subr.mxu0 0.0
    %104 = vmatpush1.msra.mxu0 0.0
    %105 = vmatprep.subr.mxu0 0.0
    %106 = vmatpush1.msra.mxu0 0.0
    %107 = vmatprep.subr.mxu0 0.0
    %108 = vmatpush1.msra.mxu0 0.0
    %109 = vmatprep.subr.mxu0 0.0
    %110 = vmatpush1.msra.mxu0 0.0
    %111 = vmatprep.subr.mxu0 0.0
    %112 = vmatpush1.msra.mxu0 0.0
    %113 = vmatprep.subr.mxu0 0.0
    %114 = vmatpush1.msra.mxu0 0.0
    %115 = vmatprep.subr.mxu0 0.0
    %116 = vmatpush1.msra.mxu0 0.0
    %117 = vmatprep.subr.mxu0 0.0
    %118 = vmatpush1.msra.mxu0 0.0
    %119 = vmatprep.subr.mxu0 0.0
    %120 = vmatpush1.msra.mxu0 0.0
    %121 = vmatprep.subr.mxu0 0.0
    %122 = vmatpush1.msra.mxu0 0.0
    %123 = vmatprep.mubr.f32.mxu0 0.0
    %124 = vmatmul.mubr.f32.gmra.mrb[0].mxu0 %v53
    %v125 = vpop.f32.mrb[0].mxu0
    %v126 = vadd.f32 %v49, %v125
    %v127 = vpop.f32.mrb[0].mxu0
    %128 = vdwg.mxu0
    %v130 = vlaneseq
    %v131 = vshrl.u32 %v130, 7
    %v132 = vsub.s32 0, %v131
    %v133 = vrot.slane %v43, %v132
    %v135 = vmul.f32 %v126, %v133
    %136 = vrot.lane.b32.xlu0 %v135, 1
    %v137 = vpop.permute.xlu0 %136
    %138 = vrot.lane.b32.xlu0 %v135, 127
    %v139 = vpop.permute.xlu0 %138
    %v140 = vld [vmem:[%s5] sm:$0xff]
    %v141 = vld [vmem:[%s6] sm:$0xff]
    %143 = vset.pattern.permute.xlu0 0
    %144 = vperm.xlu0 %143, %v141
    %v145 = vpop.permute.xlu0 %144
    %vm147 = vcmask 195584
    %v149 = vsel %vm147, %v140, 0
    %151 = vmatprep.subr.mxu0 0.0
    %152 = vmatpush1.msra.mxu0 %v137
    %153 = vmatprep.subr.mxu0 0.0
    %154 = vmatpush1.msra.mxu0 %v135
    %155 = vmatprep.subr.mxu0 0.0
    %156 = vmatpush1.msra.mxu0 %v139
    %157 = vmatprep.subr.mxu0 0.0
    %158 = vmatpush1.msra.mxu0 0.0
    %159 = vmatprep.subr.mxu0 0.0
    %160 = vmatpush1.msra.mxu0 0.0
    %161 = vmatprep.subr.mxu0 0.0
    %162 = vmatpush1.msra.mxu0 0.0
    %163 = vmatprep.subr.mxu0 0.0
    %164 = vmatpush1.msra.mxu0 0.0
    %165 = vmatprep.subr.mxu0 0.0
    %166 = vmatpush1.msra.mxu0 0.0
    %167 = vmatprep.subr.mxu0 0.0
    %168 = vmatpush1.msra.mxu0 0.0
    %169 = vmatprep.subr.mxu0 0.0
    %170 = vmatpush1.msra.mxu0 0.0
    %171 = vmatprep.subr.mxu0 0.0
    %172 = vmatpush1.msra.mxu0 0.0
    %173 = vmatprep.subr.mxu0 0.0
    %174 = vmatpush1.msra.mxu0 0.0
    %175 = vmatprep.subr.mxu0 0.0
    %176 = vmatpush1.msra.mxu0 0.0
    %177 = vmatprep.subr.mxu0 0.0
    %178 = vmatpush1.msra.mxu0 0.0
    %179 = vmatprep.subr.mxu0 0.0
    %180 = vmatpush1.msra.mxu0 0.0
    %181 = vmatprep.subr.mxu0 0.0
    %182 = vmatpush1.msra.mxu0 0.0
    %183 = vmatprep.subr.mxu0 0.0
    %184 = vmatpush1.msra.mxu0 0.0
    %185 = vmatprep.subr.mxu0 0.0
    %186 = vmatpush1.msra.mxu0 0.0
    %187 = vmatprep.subr.mxu0 0.0
    %188 = vmatpush1.msra.mxu0 0.0
    %189 = vmatprep.subr.mxu0 0.0
    %190 = vmatpush1.msra.mxu0 0.0
    %191 = vmatprep.subr.mxu0 0.0
    %192 = vmatpush1.msra.mxu0 0.0
    %193 = vmatprep.subr.mxu0 0.0
    %194 = vmatpush1.msra.mxu0 0.0
    %195 = vmatprep.subr.mxu0 0.0
    %196 = vmatpush1.msra.mxu0 0.0
    %197 = vmatprep.subr.mxu0 0.0
    %198 = vmatpush1.msra.mxu0 0.0
    %199 = vmatprep.subr.mxu0 0.0
    %200 = vmatpush1.msra.mxu0 0.0
    %201 = vmatprep.subr.mxu0 0.0
    %202 = vmatpush1.msra.mxu0 0.0
    %203 = vmatprep.subr.mxu0 0.0
    %204 = vmatpush1.msra.mxu0 0.0
    %205 = vmatprep.subr.mxu0 0.0
    %206 = vmatpush1.msra.mxu0 0.0
    %207 = vmatprep.subr.mxu0 0.0
    %208 = vmatpush1.msra.mxu0 0.0
    %209 = vmatprep.subr.mxu0 0.0
    %210 = vmatpush1.msra.mxu0 0.0
    %211 = vmatprep.subr.mxu0 0.0
    %212 = vmatpush1.msra.mxu0 0.0
    %213 = vmatprep.subr.mxu0 0.0
    %214 = vmatpush1.msra.mxu0 0.0
    %215 = vmatprep.mubr.f32.mxu0 0.0
    %216 = vmatmul.mubr.f32.gmra.mrb[0].mxu0 %v149
    %v217 = vpop.f32.mrb[0].mxu0
    %v218 = vadd.f32 %v145, %v217
    %v219 = vpop.f32.mrb[0].mxu0
    %220 = vdwg.mxu0
    %v221 = vmax.f32 %v218, 0.0
    %v222 = vld [vmem:[%s7] sm:$0xff]
    %v223 = vld [vmem:[%s8] sm:$0xff]
    %225 = vset.pattern.permute.xlu0 0
    %226 = vperm.xlu0 %225, %v223
    %v227 = vpop.permute.xlu0 %226
    %vm229 = vcmask 64512
    %v231 = vsel %vm229, %v222, 0
    %233 = vmatprep.subr.mxu0 0.0
    %234 = vmatpush1.msra.mxu0 %v221
    %235 = vmatprep.subr.mxu0 0.0
    %236 = vmatpush1.msra.mxu0 0.0
    %237 = vmatprep.subr.mxu0 0.0
    %238 = vmatpush1.msra.mxu0 0.0
    %239 = vmatprep.subr.mxu0 0.0
    %240 = vmatpush1.msra.mxu0 0.0
    %241 = vmatprep.subr.mxu0 0.0
    %242 = vmatpush1.msra.mxu0 0.0
    %243 = vmatprep.subr.mxu0 0.0
    %244 = vmatpush1.msra.mxu0 0.0
    %245 = vmatprep.subr.mxu0 0.0
    %246 = vmatpush1.msra.mxu0 0.0
    %247 = vmatprep.subr.mxu0 0.0
    %248 = vmatpush1.msra.mxu0 0.0
    %249 = vmatprep.subr.mxu0 0.0
    %250 = vmatpush1.msra.mxu0 0.0
    %251 = vmatprep.subr.mxu0 0.0
    %252 = vmatpush1.msra.mxu0 0.0
    %253 = vmatprep.subr.mxu0 0.0
    %254 = vmatpush1.msra.mxu0 0.0
    %255 = vmatprep.subr.mxu0 0.0
    %256 = vmatpush1.msra.mxu0 0.0
    %257 = vmatprep.subr.mxu0 0.0
    %258 = vmatpush1.msra.mxu0 0.0
    %259 = vmatprep.subr.mxu0 0.0
    %260 = vmatpush1.msra.mxu0 0.0
    %261 = vmatprep.subr.mxu0 0.0
    %262 = vmatpush1.msra.mxu0 0.0
    %263 = vmatprep.subr.mxu0 0.0
    %264 = vmatpush1.msra.mxu0 0.0
    %265 = vmatprep.subr.mxu0 0.0
    %266 = vmatpush1.msra.mxu0 0.0
    %267 = vmatprep.subr.mxu0 0.0
    %268 = vmatpush1.msra.mxu0 0.0
    %269 = vmatprep.subr.mxu0 0.0
    %270 = vmatpush1.msra.mxu0 0.0
    %271 = vmatprep.subr.mxu0 0.0
    %272 = vmatpush1.msra.mxu0 0.0
    %273 = vmatprep.subr.mxu0 0.0
    %274 = vmatpush1.msra.mxu0 0.0
    %275 = vmatprep.subr.mxu0 0.0
    %276 = vmatpush1.msra.mxu0 0.0
    %277 = vmatprep.subr.mxu0 0.0
    %278 = vmatpush1.msra.mxu0 0.0
    %279 = vmatprep.subr.mxu0 0.0
    %280 = vmatpush1.msra.mxu0 0.0
    %281 = vmatprep.subr.mxu0 0.0
    %282 = vmatpush1.msra.mxu0 0.0
    %283 = vmatprep.subr.mxu0 0.0
    %284 = vmatpush1.msra.mxu0 0.0
    %285 = vmatprep.subr.mxu0 0.0
    %286 = vmatpush1.msra.mxu0 0.0
    %287 = vmatprep.subr.mxu0 0.0
    %288 = vmatpush1.msra.mxu0 0.0
    %289 = vmatprep.subr.mxu0 0.0
    %290 = vmatpush1.msra.mxu0 0.0
    %291 = vmatprep.subr.mxu0 0.0
    %292 = vmatpush1.msra.mxu0 0.0
    %293 = vmatprep.subr.mxu0 0.0
    %294 = vmatpush1.msra.mxu0 0.0
    %295 = vmatprep.subr.mxu0 0.0
    %296 = vmatpush1.msra.mxu0 0.0
    %297 = vmatprep.mubr.f32.mxu0 0.0
    %298 = vmatmul.mubr.f32.gmra.mrb[0].mxu0 %v231
    %v299 = vpop.f32.mrb[0].mxu0
    %v300 = vadd.f32 %v227, %v299
    %v301 = vpop.f32.mrb[0].mxu0
    %302 = vdwg.mxu0
    %v303 = vadd.f32 %v135, %v300
    %v305 = vlaneseq
    %v306 = vshrl.u32 %v305, 7
    %v307 = vsub.s32 0, %v306
    %v308 = vrot.slane %v42, %v307
    %v310 = vmul.f32 %v303, %v308
    %311 = vrot.lane.b32.xlu0 %v310, 2
    %v312 = vpop.permute.xlu0 %311
    %313 = vrot.lane.b32.xlu0 %v310, 126
    %v314 = vpop.permute.xlu0 %313
    %s315 = scalar_lea.vmem %s5, 8
    %v316 = vld [vmem:[%s315] sm:$0xff]
    %s317 = scalar_lea.vmem %s6, 8
    %v318 = vld [vmem:[%s317] sm:$0xff]
    %320 = vset.pattern.permute.xlu0 0
    %321 = vperm.xlu0 %320, %v318
    %v322 = vpop.permute.xlu0 %321
    %v325 = vsel %vm147, %v316, 0
    %327 = vmatprep.subr.mxu0 0.0
    %328 = vmatpush1.msra.mxu0 %v312
    %329 = vmatprep.subr.mxu0 0.0
    %330 = vmatpush1.msra.mxu0 %v310
    %331 = vmatprep.subr.mxu0 0.0
    %332 = vmatpush1.msra.mxu0 %v314
    %333 = vmatprep.subr.mxu0 0.0
    %334 = vmatpush1.msra.mxu0 0.0
    %335 = vmatprep.subr.mxu0 0.0
    %336 = vmatpush1.msra.mxu0 0.0
    %337 = vmatprep.subr.mxu0 0.0
    %338 = vmatpush1.msra.mxu0 0.0
    %339 = vmatprep.subr.mxu0 0.0
    %340 = vmatpush1.msra.mxu0 0.0
    %341 = vmatprep.subr.mxu0 0.0
    %342 = vmatpush1.msra.mxu0 0.0
    %343 = vmatprep.subr.mxu0 0.0
    %344 = vmatpush1.msra.mxu0 0.0
    %345 = vmatprep.subr.mxu0 0.0
    %346 = vmatpush1.msra.mxu0 0.0
    %347 = vmatprep.subr.mxu0 0.0
    %348 = vmatpush1.msra.mxu0 0.0
    %349 = vmatprep.subr.mxu0 0.0
    %350 = vmatpush1.msra.mxu0 0.0
    %351 = vmatprep.subr.mxu0 0.0
    %352 = vmatpush1.msra.mxu0 0.0
    %353 = vmatprep.subr.mxu0 0.0
    %354 = vmatpush1.msra.mxu0 0.0
    %355 = vmatprep.subr.mxu0 0.0
    %356 = vmatpush1.msra.mxu0 0.0
    %357 = vmatprep.subr.mxu0 0.0
    %358 = vmatpush1.msra.mxu0 0.0
    %359 = vmatprep.subr.mxu0 0.0
    %360 = vmatpush1.msra.mxu0 0.0
    %361 = vmatprep.subr.mxu0 0.0
    %362 = vmatpush1.msra.mxu0 0.0
    %363 = vmatprep.subr.mxu0 0.0
    %364 = vmatpush1.msra.mxu0 0.0
    %365 = vmatprep.subr.mxu0 0.0
    %366 = vmatpush1.msra.mxu0 0.0
    %367 = vmatprep.subr.mxu0 0.0
    %368 = vmatpush1.msra.mxu0 0.0
    %369 = vmatprep.subr.mxu0 0.0
    %370 = vmatpush1.msra.mxu0 0.0
    %371 = vmatprep.subr.mxu0 0.0
    %372 = vmatpush1.msra.mxu0 0.0
    %373 = vmatprep.subr.mxu0 0.0
    %374 = vmatpush1.msra.mxu0 0.0
    %375 = vmatprep.subr.mxu0 0.0
    %376 = vmatpush1.msra.mxu0 0.0
    %377 = vmatprep.subr.mxu0 0.0
    %378 = vmatpush1.msra.mxu0 0.0
    %379 = vmatprep.subr.mxu0 0.0
    %380 = vmatpush1.msra.mxu0 0.0
    %381 = vmatprep.subr.mxu0 0.0
    %382 = vmatpush1.msra.mxu0 0.0
    %383 = vmatprep.subr.mxu0 0.0
    %384 = vmatpush1.msra.mxu0 0.0
    %385 = vmatprep.subr.mxu0 0.0
    %386 = vmatpush1.msra.mxu0 0.0
    %387 = vmatprep.subr.mxu0 0.0
    %388 = vmatpush1.msra.mxu0 0.0
    %389 = vmatprep.subr.mxu0 0.0
    %390 = vmatpush1.msra.mxu0 0.0
    %391 = vmatprep.mubr.f32.mxu0 0.0
    %392 = vmatmul.mubr.f32.gmra.mrb[0].mxu0 %v325
    %v393 = vpop.f32.mrb[0].mxu0
    %v394 = vadd.f32 %v322, %v393
    %v395 = vpop.f32.mrb[0].mxu0
    %396 = vdwg.mxu0
    %v397 = vmax.f32 %v394, 0.0
    %s398 = scalar_lea.vmem %s7, 8
    %v399 = vld [vmem:[%s398] sm:$0xff]
    %s400 = scalar_lea.vmem %s8, 8
    %v401 = vld [vmem:[%s400] sm:$0xff]
    %403 = vset.pattern.permute.xlu0 0
    %404 = vperm.xlu0 %403, %v401
    %v405 = vpop.permute.xlu0 %404
    %v408 = vsel %vm229, %v399, 0
    %410 = vmatprep.subr.mxu0 0.0
    %411 = vmatpush1.msra.mxu0 %v397
    %412 = vmatprep.subr.mxu0 0.0
    %413 = vmatpush1.msra.mxu0 0.0
    %414 = vmatprep.subr.mxu0 0.0
    %415 = vmatpush1.msra.mxu0 0.0
    %416 = vmatprep.subr.mxu0 0.0
    %417 = vmatpush1.msra.mxu0 0.0
    %418 = vmatprep.subr.mxu0 0.0
    %419 = vmatpush1.msra.mxu0 0.0
    %420 = vmatprep.subr.mxu0 0.0
    %421 = vmatpush1.msra.mxu0 0.0
    %422 = vmatprep.subr.mxu0 0.0
    %423 = vmatpush1.msra.mxu0 0.0
    %424 = vmatprep.subr.mxu0 0.0
    %425 = vmatpush1.msra.mxu0 0.0
    %426 = vmatprep.subr.mxu0 0.0
    %427 = vmatpush1.msra.mxu0 0.0
    %428 = vmatprep.subr.mxu0 0.0
    %429 = vmatpush1.msra.mxu0 0.0
    %430 = vmatprep.subr.mxu0 0.0
    %431 = vmatpush1.msra.mxu0 0.0
    %432 = vmatprep.subr.mxu0 0.0
    %433 = vmatpush1.msra.mxu0 0.0
    %434 = vmatprep.subr.mxu0 0.0
    %435 = vmatpush1.msra.mxu0 0.0
    %436 = vmatprep.subr.mxu0 0.0
    %437 = vmatpush1.msra.mxu0 0.0
    %438 = vmatprep.subr.mxu0 0.0
    %439 = vmatpush1.msra.mxu0 0.0
    %440 = vmatprep.subr.mxu0 0.0
    %441 = vmatpush1.msra.mxu0 0.0
    %442 = vmatprep.subr.mxu0 0.0
    %443 = vmatpush1.msra.mxu0 0.0
    %444 = vmatprep.subr.mxu0 0.0
    %445 = vmatpush1.msra.mxu0 0.0
    %446 = vmatprep.subr.mxu0 0.0
    %447 = vmatpush1.msra.mxu0 0.0
    %448 = vmatprep.subr.mxu0 0.0
    %449 = vmatpush1.msra.mxu0 0.0
    %450 = vmatprep.subr.mxu0 0.0
    %451 = vmatpush1.msra.mxu0 0.0
    %452 = vmatprep.subr.mxu0 0.0
    %453 = vmatpush1.msra.mxu0 0.0
    %454 = vmatprep.subr.mxu0 0.0
    %455 = vmatpush1.msra.mxu0 0.0
    %456 = vmatprep.subr.mxu0 0.0
    %457 = vmatpush1.msra.mxu0 0.0
    %458 = vmatprep.subr.mxu0 0.0
    %459 = vmatpush1.msra.mxu0 0.0
    %460 = vmatprep.subr.mxu0 0.0
    %461 = vmatpush1.msra.mxu0 0.0
    %462 = vmatprep.subr.mxu0 0.0
    %463 = vmatpush1.msra.mxu0 0.0
    %464 = vmatprep.subr.mxu0 0.0
    %465 = vmatpush1.msra.mxu0 0.0
    %466 = vmatprep.subr.mxu0 0.0
    %467 = vmatpush1.msra.mxu0 0.0
    %468 = vmatprep.subr.mxu0 0.0
    %469 = vmatpush1.msra.mxu0 0.0
    %470 = vmatprep.subr.mxu0 0.0
    %471 = vmatpush1.msra.mxu0 0.0
    %472 = vmatprep.subr.mxu0 0.0
    %473 = vmatpush1.msra.mxu0 0.0
    %474 = vmatprep.mubr.f32.mxu0 0.0
    %475 = vmatmul.mubr.f32.gmra.mrb[0].mxu0 %v408
    %v476 = vpop.f32.mrb[0].mxu0
    %v477 = vadd.f32 %v405, %v476
    %v478 = vpop.f32.mrb[0].mxu0
    %479 = vdwg.mxu0
    %v480 = vadd.f32 %v310, %v477
    %v481 = vmul.f32 %v480, %v308
    %482 = vrot.lane.b32.xlu0 %v481, 4
    %v483 = vpop.permute.xlu0 %482
    %484 = vrot.lane.b32.xlu0 %v481, 124
    %v485 = vpop.permute.xlu0 %484
    %s486 = scalar_lea.vmem %s5, 16
    %v487 = vld [vmem:[%s486] sm:$0xff]
    %s488 = scalar_lea.vmem %s6, 16
    %v489 = vld [vmem:[%s488] sm:$0xff]
    %491 = vset.pattern.permute.xlu0 0
    %492 = vperm.xlu0 %491, %v489
    %v493 = vpop.permute.xlu0 %492
    %v496 = vsel %vm147, %v487, 0
    %498 = vmatprep.subr.mxu0 0.0
    %499 = vmatpush1.msra.mxu0 %v483
    %500 = vmatprep.subr.mxu0 0.0
    %501 = vmatpush1.msra.mxu0 %v481
    %502 = vmatprep.subr.mxu0 0.0
    %503 = vmatpush1.msra.mxu0 %v485
    %504 = vmatprep.subr.mxu0 0.0
    %505 = vmatpush1.msra.mxu0 0.0
    %506 = vmatprep.subr.mxu0 0.0
    %507 = vmatpush1.msra.mxu0 0.0
    %508 = vmatprep.subr.mxu0 0.0
    %509 = vmatpush1.msra.mxu0 0.0
    %510 = vmatprep.subr.mxu0 0.0
    %511 = vmatpush1.msra.mxu0 0.0
    %512 = vmatprep.subr.mxu0 0.0
    %513 = vmatpush1.msra.mxu0 0.0
    %514 = vmatprep.subr.mxu0 0.0
    %515 = vmatpush1.msra.mxu0 0.0
    %516 = vmatprep.subr.mxu0 0.0
    %517 = vmatpush1.msra.mxu0 0.0
    %518 = vmatprep.subr.mxu0 0.0
    %519 = vmatpush1.msra.mxu0 0.0
    %520 = vmatprep.subr.mxu0 0.0
    %521 = vmatpush1.msra.mxu0 0.0
    %522 = vmatprep.subr.mxu0 0.0
    %523 = vmatpush1.msra.mxu0 0.0
    %524 = vmatprep.subr.mxu0 0.0
    %525 = vmatpush1.msra.mxu0 0.0
    %526 = vmatprep.subr.mxu0 0.0
    %527 = vmatpush1.msra.mxu0 0.0
    %528 = vmatprep.subr.mxu0 0.0
    %529 = vmatpush1.msra.mxu0 0.0
    %530 = vmatprep.subr.mxu0 0.0
    %531 = vmatpush1.msra.mxu0 0.0
    %532 = vmatprep.subr.mxu0 0.0
    %533 = vmatpush1.msra.mxu0 0.0
    %534 = vmatprep.subr.mxu0 0.0
    %535 = vmatpush1.msra.mxu0 0.0
    %536 = vmatprep.subr.mxu0 0.0
    %537 = vmatpush1.msra.mxu0 0.0
    %538 = vmatprep.subr.mxu0 0.0
    %539 = vmatpush1.msra.mxu0 0.0
    %540 = vmatprep.subr.mxu0 0.0
    %541 = vmatpush1.msra.mxu0 0.0
    %542 = vmatprep.subr.mxu0 0.0
    %543 = vmatpush1.msra.mxu0 0.0
    %544 = vmatprep.subr.mxu0 0.0
    %545 = vmatpush1.msra.mxu0 0.0
    %546 = vmatprep.subr.mxu0 0.0
    %547 = vmatpush1.msra.mxu0 0.0
    %548 = vmatprep.subr.mxu0 0.0
    %549 = vmatpush1.msra.mxu0 0.0
    %550 = vmatprep.subr.mxu0 0.0
    %551 = vmatpush1.msra.mxu0 0.0
    %552 = vmatprep.subr.mxu0 0.0
    %553 = vmatpush1.msra.mxu0 0.0
    %554 = vmatprep.subr.mxu0 0.0
    %555 = vmatpush1.msra.mxu0 0.0
    %556 = vmatprep.subr.mxu0 0.0
    %557 = vmatpush1.msra.mxu0 0.0
    %558 = vmatprep.subr.mxu0 0.0
    %559 = vmatpush1.msra.mxu0 0.0
    %560 = vmatprep.subr.mxu0 0.0
    %561 = vmatpush1.msra.mxu0 0.0
    %562 = vmatprep.mubr.f32.mxu0 0.0
    %563 = vmatmul.mubr.f32.gmra.mrb[0].mxu0 %v496
    %v564 = vpop.f32.mrb[0].mxu0
    %v565 = vadd.f32 %v493, %v564
    %v566 = vpop.f32.mrb[0].mxu0
    %567 = vdwg.mxu0
    %v568 = vmax.f32 %v565, 0.0
    %s569 = scalar_lea.vmem %s7, 16
    %v570 = vld [vmem:[%s569] sm:$0xff]
    %s571 = scalar_lea.vmem %s8, 16
    %v572 = vld [vmem:[%s571] sm:$0xff]
    %574 = vset.pattern.permute.xlu0 0
    %575 = vperm.xlu0 %574, %v572
    %v576 = vpop.permute.xlu0 %575
    %v579 = vsel %vm229, %v570, 0
    %581 = vmatprep.subr.mxu0 0.0
    %582 = vmatpush1.msra.mxu0 %v568
    %583 = vmatprep.subr.mxu0 0.0
    %584 = vmatpush1.msra.mxu0 0.0
    %585 = vmatprep.subr.mxu0 0.0
    %586 = vmatpush1.msra.mxu0 0.0
    %587 = vmatprep.subr.mxu0 0.0
    %588 = vmatpush1.msra.mxu0 0.0
    %589 = vmatprep.subr.mxu0 0.0
    %590 = vmatpush1.msra.mxu0 0.0
    %591 = vmatprep.subr.mxu0 0.0
    %592 = vmatpush1.msra.mxu0 0.0
    %593 = vmatprep.subr.mxu0 0.0
    %594 = vmatpush1.msra.mxu0 0.0
    %595 = vmatprep.subr.mxu0 0.0
    %596 = vmatpush1.msra.mxu0 0.0
    %597 = vmatprep.subr.mxu0 0.0
    %598 = vmatpush1.msra.mxu0 0.0
    %599 = vmatprep.subr.mxu0 0.0
    %600 = vmatpush1.msra.mxu0 0.0
    %601 = vmatprep.subr.mxu0 0.0
    %602 = vmatpush1.msra.mxu0 0.0
    %603 = vmatprep.subr.mxu0 0.0
    %604 = vmatpush1.msra.mxu0 0.0
    %605 = vmatprep.subr.mxu0 0.0
    %606 = vmatpush1.msra.mxu0 0.0
    %607 = vmatprep.subr.mxu0 0.0
    %608 = vmatpush1.msra.mxu0 0.0
    %609 = vmatprep.subr.mxu0 0.0
    %610 = vmatpush1.msra.mxu0 0.0
    %611 = vmatprep.subr.mxu0 0.0
    %612 = vmatpush1.msra.mxu0 0.0
    %613 = vmatprep.subr.mxu0 0.0
    %614 = vmatpush1.msra.mxu0 0.0
    %615 = vmatprep.subr.mxu0 0.0
    %616 = vmatpush1.msra.mxu0 0.0
    %617 = vmatprep.subr.mxu0 0.0
    %618 = vmatpush1.msra.mxu0 0.0
    %619 = vmatprep.subr.mxu0 0.0
    %620 = vmatpush1.msra.mxu0 0.0
    %621 = vmatprep.subr.mxu0 0.0
    %622 = vmatpush1.msra.mxu0 0.0
    %623 = vmatprep.subr.mxu0 0.0
    %624 = vmatpush1.msra.mxu0 0.0
    %625 = vmatprep.subr.mxu0 0.0
    %626 = vmatpush1.msra.mxu0 0.0
    %627 = vmatprep.subr.mxu0 0.0
    %628 = vmatpush1.msra.mxu0 0.0
    %629 = vmatprep.subr.mxu0 0.0
    %630 = vmatpush1.msra.mxu0 0.0
    %631 = vmatprep.subr.mxu0 0.0
    %632 = vmatpush1.msra.mxu0 0.0
    %633 = vmatprep.subr.mxu0 0.0
    %634 = vmatpush1.msra.mxu0 0.0
    %635 = vmatprep.subr.mxu0 0.0
    %636 = vmatpush1.msra.mxu0 0.0
    %637 = vmatprep.subr.mxu0 0.0
    %638 = vmatpush1.msra.mxu0 0.0
    %639 = vmatprep.subr.mxu0 0.0
    %640 = vmatpush1.msra.mxu0 0.0
    %641 = vmatprep.subr.mxu0 0.0
    %642 = vmatpush1.msra.mxu0 0.0
    %643 = vmatprep.subr.mxu0 0.0
    %644 = vmatpush1.msra.mxu0 0.0
    %645 = vmatprep.mubr.f32.mxu0 0.0
    %646 = vmatmul.mubr.f32.gmra.mrb[0].mxu0 %v579
    %v647 = vpop.f32.mrb[0].mxu0
    %v648 = vadd.f32 %v576, %v647
    %v649 = vpop.f32.mrb[0].mxu0
    %650 = vdwg.mxu0
    %v651 = vadd.f32 %v481, %v648
    %v652 = vmul.f32 %v651, %v308
    %v653 = vld [vmem:[%s9] sm:$0x1f]
    %v654 = vld [vmem:[%s10] sm:$0x1f]
    %656 = vset.pattern.permute.xlu0 0
    %657 = vperm.xlu0 %656, %v654
    %v658 = vpop.permute.xlu0 %657
    %v661 = vsel %vm229, %v653, 0
    %663 = vmatprep.subr.mxu0 0.0
    %664 = vmatpush1.msra.mxu0 %v652
    %665 = vmatprep.subr.mxu0 0.0
    %666 = vmatpush1.msra.mxu0 0.0
    %667 = vmatprep.subr.mxu0 0.0
    %668 = vmatpush1.msra.mxu0 0.0
    %669 = vmatprep.subr.mxu0 0.0
    %670 = vmatpush1.msra.mxu0 0.0
    %671 = vmatprep.subr.mxu0 0.0
    %672 = vmatpush1.msra.mxu0 0.0
    %673 = vmatprep.subr.mxu0 0.0
    %674 = vmatpush1.msra.mxu0 0.0
    %675 = vmatprep.subr.mxu0 0.0
    %676 = vmatpush1.msra.mxu0 0.0
    %677 = vmatprep.subr.mxu0 0.0
    %678 = vmatpush1.msra.mxu0 0.0
    %679 = vmatprep.subr.mxu0 0.0
    %680 = vmatpush1.msra.mxu0 0.0
    %681 = vmatprep.subr.mxu0 0.0
    %682 = vmatpush1.msra.mxu0 0.0
    %683 = vmatprep.subr.mxu0 0.0
    %684 = vmatpush1.msra.mxu0 0.0
    %685 = vmatprep.subr.mxu0 0.0
    %686 = vmatpush1.msra.mxu0 0.0
    %687 = vmatprep.subr.mxu0 0.0
    %688 = vmatpush1.msra.mxu0 0.0
    %689 = vmatprep.subr.mxu0 0.0
    %690 = vmatpush1.msra.mxu0 0.0
    %691 = vmatprep.subr.mxu0 0.0
    %692 = vmatpush1.msra.mxu0 0.0
    %693 = vmatprep.subr.mxu0 0.0
    %694 = vmatpush1.msra.mxu0 0.0
    %695 = vmatprep.subr.mxu0 0.0
    %696 = vmatpush1.msra.mxu0 0.0
    %697 = vmatprep.subr.mxu0 0.0
    %698 = vmatpush1.msra.mxu0 0.0
    %699 = vmatprep.subr.mxu0 0.0
    %700 = vmatpush1.msra.mxu0 0.0
    %701 = vmatprep.subr.mxu0 0.0
    %702 = vmatpush1.msra.mxu0 0.0
    %703 = vmatprep.subr.mxu0 0.0
    %704 = vmatpush1.msra.mxu0 0.0
    %705 = vmatprep.subr.mxu0 0.0
    %706 = vmatpush1.msra.mxu0 0.0
    %707 = vmatprep.subr.mxu0 0.0
    %708 = vmatpush1.msra.mxu0 0.0
    %709 = vmatprep.subr.mxu0 0.0
    %710 = vmatpush1.msra.mxu0 0.0
    %711 = vmatprep.subr.mxu0 0.0
    %712 = vmatpush1.msra.mxu0 0.0
    %713 = vmatprep.subr.mxu0 0.0
    %714 = vmatpush1.msra.mxu0 0.0
    %715 = vmatprep.subr.mxu0 0.0
    %716 = vmatpush1.msra.mxu0 0.0
    %717 = vmatprep.subr.mxu0 0.0
    %718 = vmatpush1.msra.mxu0 0.0
    %719 = vmatprep.subr.mxu0 0.0
    %720 = vmatpush1.msra.mxu0 0.0
    %721 = vmatprep.subr.mxu0 0.0
    %722 = vmatpush1.msra.mxu0 0.0
    %723 = vmatprep.subr.mxu0 0.0
    %724 = vmatpush1.msra.mxu0 0.0
    %725 = vmatprep.subr.mxu0 0.0
    %726 = vmatpush1.msra.mxu0 0.0
    %727 = vmatprep.mubr.f32.mxu0 0.0
    %728 = vmatmul.mubr.f32.gmra.mrb[0].mxu0 %v661
    %v729 = vpop.f32.mrb[0].mxu0
    %v730 = vadd.f32 %v658, %v729
    %v731 = vpop.f32.mrb[0].mxu0
    %732 = vdwg.mxu0
    %v733 = vmul.f32 %v730, %v308
    %734 = vst [vmem:[#allocation2] sm:$0xff] %v652
    %735 = vst [vmem:[%s12] sm:$0x1f] %v733
    // Predicated region
    $region46: #{multi_stage_forward.4} parent=1 // pred_check
      _
    $region47: #{multi_stage_forward.4} parent=1 // pred_check_branch
      %737 = sbr.rel (0) target = $region49
    $region48: #{multi_stage_forward.4} parent=1 // pred_region
      %s739 = ssub.s32 128, 128
      %740 = vsyncadd [#allocation3], %s739
      %s742 = sshll.u32 [#allocation2], 4
      %s743 = int_to_ptr.vmem [resolvable:$true] %s742
      %745 = dma.vmem_to_hbm [thread:$0]  %s743, 128, %s11, [#allocation3]
    $region49: #{multi_stage_forward.4} parent=1 // pred_fallthru
      _
    // Predicated region
    $region50: #{multi_stage_forward.4} parent=1 // pred_check
      _
    $region51: #{multi_stage_forward.4} parent=1 // pred_check_branch
      %747 = sbr.rel (0) target = $region53
    $region52: #{multi_stage_forward.4} parent=1 // pred_region
      _
    $region53: #{multi_stage_forward.4} parent=1 // pred_fallthru
      _
    // Predicated region
    $region54: #{multi_stage_forward.4} parent=1 // pred_check
      _
    $region55: #{multi_stage_forward.4} parent=1 // pred_check_branch
      %749 = sbr.rel (0) target = $region57
    $region56: #{multi_stage_forward.4} parent=1 // pred_region
      %750 = dma.done [#allocation3], 128
    $region57: #{multi_stage_forward.4} parent=1 // pred_fallthru
      _
    // Predicated region
    $region58: #{multi_stage_forward.4} parent=1 // pred_check
      _
    $region59: #{multi_stage_forward.4} parent=1 // pred_check_branch
      %752 = sbr.rel (0) target = $region61
    $region60: #{multi_stage_forward.4} parent=1 // pred_region
      _
    $region61: #{multi_stage_forward.4} parent=1 // pred_fallthru
      _
    %753 = vsyncpa [#allocation3], 1

// kernel: multi_stage_forward.5
$region0: #{multi_stage_forward.5}
  #allocation0 [shape = 'u32[]', space=smem, size = 0x4, offset = 0x4, fixed_abs, tag = 'smem constant byte address 0x4 - core index']
  #allocation1 [shape = 'u32[144,128]{1,0:T(1,128)}', space=vmem, size = 0x12000, scoped, tag = 'internal scratch']
  %s0 = inlined_call_operand.vmem [shape: f32[6,128], index: 0, kind: input, shape index: {}]
  %s1 = inlined_call_operand.vmem [shape: f32[1,128], index: 1, kind: input, shape index: {}]
  %s2 = inlined_call_operand.vmem [shape: f32[1,128], index: 2, kind: input, shape index: {}]
  %s3 = inlined_call_operand.vmem [shape: f32[8,6], index: 3, kind: input, shape index: {}]
  %s4 = inlined_call_operand.vmem [shape: f32[8,1], index: 4, kind: input, shape index: {}]
  %s5 = inlined_call_operand.vmem [shape: f32[3,8,40], index: 5, kind: input, shape index: {}]
  %s6 = inlined_call_operand.vmem [shape: f32[3,8,1], index: 6, kind: input, shape index: {}]
  %s7 = inlined_call_operand.vmem [shape: f32[3,8,8], index: 7, kind: input, shape index: {}]
  %s8 = inlined_call_operand.vmem [shape: f32[3,8,1], index: 8, kind: input, shape index: {}]
  %s9 = inlined_call_operand.vmem [shape: f32[5,8], index: 9, kind: input, shape index: {}]
  %s10 = inlined_call_operand.vmem [shape: f32[5,1], index: 10, kind: input, shape index: {}]
  %s11 = inlined_call_operand.hbm [shape: f32[8,128], index: 11, kind: output, shape index: {0}]
  %s12 = inlined_call_operand.vmem [shape: f32[5,128], index: 12, kind: output, shape index: {1}]
  %13 = xla_tuple %s11, %s12
  %s14 = sld [smem:[#allocation0]]
  $region62: #{multi_stage_forward.5} parent=0
    _
  %s16 = ssub.s32 1, %s14
  %s17 = scalar_select 0, %s16, %s14
  $region1: #{multi_stage_forward.5} parent=0
    #allocation2 [shape = 'u8[4096]{0}', space=vmem, size = 0x1000, scoped, tag = 'output window, operand 0, single buffered']
    #allocation3 [shape = 's32[1]{0}', space=sflag, size = 0x4, scoped, tag = 'scoped memory for multi_stage_forward.5']
    %18 = vsyncpa [#allocation3], 0
    // Predicated region
    $region2: #{multi_stage_forward.5} parent=1 // pred_check
      _
    $region3: #{multi_stage_forward.5} parent=1 // pred_check_branch
      %20 = sbr.rel (0) target = $region5
    $region4: #{multi_stage_forward.5} parent=1 // pred_region
      _
    $region5: #{multi_stage_forward.5} parent=1 // pred_fallthru
      _
    // Predicated region
    $region6: #{multi_stage_forward.5} parent=1 // pred_check
      _
    $region7: #{multi_stage_forward.5} parent=1 // pred_check_branch
      %22 = sbr.rel (0) target = $region9
    $region8: #{multi_stage_forward.5} parent=1 // pred_region
      _
    $region9: #{multi_stage_forward.5} parent=1 // pred_fallthru
      _
    // Predicated region
    $region10: #{multi_stage_forward.5} parent=1 // pred_check
      _
    $region11: #{multi_stage_forward.5} parent=1 // pred_check_branch
      %24 = sbr.rel (0) target = $region13
    $region12: #{multi_stage_forward.5} parent=1 // pred_region
      _
    $region13: #{multi_stage_forward.5} parent=1 // pred_fallthru
      _
    // Predicated region
    $region14: #{multi_stage_forward.5} parent=1 // pred_check
      _
    $region15: #{multi_stage_forward.5} parent=1 // pred_check_branch
      %26 = sbr.rel (0) target = $region17
    $region16: #{multi_stage_forward.5} parent=1 // pred_region
      _
    $region17: #{multi_stage_forward.5} parent=1 // pred_fallthru
      _
    // Predicated region
    $region18: #{multi_stage_forward.5} parent=1 // pred_check
      _
    $region19: #{multi_stage_forward.5} parent=1 // pred_check_branch
      %28 = sbr.rel (0) target = $region21
    $region20: #{multi_stage_forward.5} parent=1 // pred_region
      _
    $region21: #{multi_stage_forward.5} parent=1 // pred_fallthru
      _
    // Predicated region
    $region22: #{multi_stage_forward.5} parent=1 // pred_check
      _
    $region23: #{multi_stage_forward.5} parent=1 // pred_check_branch
      %30 = sbr.rel (0) target = $region25
    $region24: #{multi_stage_forward.5} parent=1 // pred_region
      _
    $region25: #{multi_stage_forward.5} parent=1 // pred_fallthru
      _
    // Predicated region
    $region26: #{multi_stage_forward.5} parent=1 // pred_check
      _
    $region27: #{multi_stage_forward.5} parent=1 // pred_check_branch
      %32 = sbr.rel (0) target = $region29
    $region28: #{multi_stage_forward.5} parent=1 // pred_region
      _
    $region29: #{multi_stage_forward.5} parent=1 // pred_fallthru
      _
    // Predicated region
    $region30: #{multi_stage_forward.5} parent=1 // pred_check
      _
    $region31: #{multi_stage_forward.5} parent=1 // pred_check_branch
      %34 = sbr.rel (0) target = $region33
    $region32: #{multi_stage_forward.5} parent=1 // pred_region
      _
    $region33: #{multi_stage_forward.5} parent=1 // pred_fallthru
      _
    // Predicated region
    $region34: #{multi_stage_forward.5} parent=1 // pred_check
      _
    $region35: #{multi_stage_forward.5} parent=1 // pred_check_branch
      %36 = sbr.rel (0) target = $region37
    $region36: #{multi_stage_forward.5} parent=1 // pred_region
      _
    $region37: #{multi_stage_forward.5} parent=1 // pred_fallthru
      _
    // Predicated region
    $region38: #{multi_stage_forward.5} parent=1 // pred_check
      _
    $region39: #{multi_stage_forward.5} parent=1 // pred_check_branch
      %38 = sbr.rel (0) target = $region41
    $region40: #{multi_stage_forward.5} parent=1 // pred_region
      _
    $region41: #{multi_stage_forward.5} parent=1 // pred_fallthru
      _
    // Predicated region
    $region42: #{multi_stage_forward.5} parent=1 // pred_check
      _
    $region43: #{multi_stage_forward.5} parent=1 // pred_check_branch
      %40 = sbr.rel (0) target = $region45
    $region44: #{multi_stage_forward.5} parent=1 // pred_region
      _
    $region45: #{multi_stage_forward.5} parent=1 // pred_fallthru
      _
    %v41 = vld [vmem:[%s0] sm:$0x3f]
    %v42 = vld [vmem:[%s1] sm:$0x1]
    %v43 = vld [vmem:[%s2] sm:$0x1]
    %v44 = vld [vmem:[%s3] sm:$0xff]
    %v45 = vld [vmem:[%s4] sm:$0xff]
    %47 = vset.pattern.permute.xlu0 0
    %48 = vperm.xlu0 %47, %v45
    %v49 = vpop.permute.xlu0 %48
    %vm51 = vcmask 48128
    %v53 = vsel %vm51, %v44, 0
    %vm55 = vcmask 1045504
    %v57 = vsel %vm55, %v41, 0
    %59 = vmatprep.subr.mxu0 0.0
    %60 = vmatpush1.msra.mxu0 %v57
    %61 = vmatprep.subr.mxu0 0.0
    %62 = vmatpush1.msra.mxu0 0.0
    %63 = vmatprep.subr.mxu0 0.0
    %64 = vmatpush1.msra.mxu0 0.0
    %65 = vmatprep.subr.mxu0 0.0
    %66 = vmatpush1.msra.mxu0 0.0
    %67 = vmatprep.subr.mxu0 0.0
    %68 = vmatpush1.msra.mxu0 0.0
    %69 = vmatprep.subr.mxu0 0.0
    %70 = vmatpush1.msra.mxu0 0.0
    %71 = vmatprep.subr.mxu0 0.0
    %72 = vmatpush1.msra.mxu0 0.0
    %73 = vmatprep.subr.mxu0 0.0
    %74 = vmatpush1.msra.mxu0 0.0
    %75 = vmatprep.subr.mxu0 0.0
    %76 = vmatpush1.msra.mxu0 0.0
    %77 = vmatprep.subr.mxu0 0.0
    %78 = vmatpush1.msra.mxu0 0.0
    %79 = vmatprep.subr.mxu0 0.0
    %80 = vmatpush1.msra.mxu0 0.0
    %81 = vmatprep.subr.mxu0 0.0
    %82 = vmatpush1.msra.mxu0 0.0
    %83 = vmatprep.subr.mxu0 0.0
    %84 = vmatpush1.msra.mxu0 0.0
    %85 = vmatprep.subr.mxu0 0.0
    %86 = vmatpush1.msra.mxu0 0.0
    %87 = vmatprep.subr.mxu0 0.0
    %88 = vmatpush1.msra.mxu0 0.0
    %89 = vmatprep.subr.mxu0 0.0
    %90 = vmatpush1.msra.mxu0 0.0
    %91 = vmatprep.subr.mxu0 0.0
    %92 = vmatpush1.msra.mxu0 0.0
    %93 = vmatprep.subr.mxu0 0.0
    %94 = vmatpush1.msra.mxu0 0.0
    %95 = vmatprep.subr.mxu0 0.0
    %96 = vmatpush1.msra.mxu0 0.0
    %97 = vmatprep.subr.mxu0 0.0
    %98 = vmatpush1.msra.mxu0 0.0
    %99 = vmatprep.subr.mxu0 0.0
    %100 = vmatpush1.msra.mxu0 0.0
    %101 = vmatprep.subr.mxu0 0.0
    %102 = vmatpush1.msra.mxu0 0.0
    %103 = vmatprep.subr.mxu0 0.0
    %104 = vmatpush1.msra.mxu0 0.0
    %105 = vmatprep.subr.mxu0 0.0
    %106 = vmatpush1.msra.mxu0 0.0
    %107 = vmatprep.subr.mxu0 0.0
    %108 = vmatpush1.msra.mxu0 0.0
    %109 = vmatprep.subr.mxu0 0.0
    %110 = vmatpush1.msra.mxu0 0.0
    %111 = vmatprep.subr.mxu0 0.0
    %112 = vmatpush1.msra.mxu0 0.0
    %113 = vmatprep.subr.mxu0 0.0
    %114 = vmatpush1.msra.mxu0 0.0
    %115 = vmatprep.subr.mxu0 0.0
    %116 = vmatpush1.msra.mxu0 0.0
    %117 = vmatprep.subr.mxu0 0.0
    %118 = vmatpush1.msra.mxu0 0.0
    %119 = vmatprep.subr.mxu0 0.0
    %120 = vmatpush1.msra.mxu0 0.0
    %121 = vmatprep.subr.mxu0 0.0
    %122 = vmatpush1.msra.mxu0 0.0
    %123 = vmatprep.mubr.f32.mxu0 0.0
    %124 = vmatmul.mubr.f32.gmra.mrb[0].mxu0 %v53
    %v125 = vpop.f32.mrb[0].mxu0
    %v126 = vadd.f32 %v49, %v125
    %v127 = vpop.f32.mrb[0].mxu0
    %128 = vdwg.mxu0
    %v130 = vlaneseq
    %v131 = vshrl.u32 %v130, 7
    %v132 = vsub.s32 0, %v131
    %v133 = vrot.slane %v43, %v132
    %v135 = vmul.f32 %v126, %v133
    %136 = vrot.lane.b32.xlu0 %v135, 2
    %v137 = vpop.permute.xlu0 %136
    %138 = vrot.lane.b32.xlu0 %v135, 1
    %v139 = vpop.permute.xlu0 %138
    %140 = vrot.lane.b32.xlu0 %v135, 127
    %v141 = vpop.permute.xlu0 %140
    %142 = vrot.lane.b32.xlu0 %v135, 126
    %v143 = vpop.permute.xlu0 %142
    %v144 = vld [vmem:[%s5] sm:$0xff]
    %v145 = vld [vmem:[%s6] sm:$0xff]
    %147 = vset.pattern.permute.xlu0 0
    %148 = vperm.xlu0 %147, %v145
    %v149 = vpop.permute.xlu0 %148
    %vm151 = vcmask 326656
    %v153 = vsel %vm151, %v144, 0
    %155 = vmatprep.subr.mxu0 0.0
    %156 = vmatpush1.msra.mxu0 %v137
    %157 = vmatprep.subr.mxu0 0.0
    %158 = vmatpush1.msra.mxu0 %v139
    %159 = vmatprep.subr.mxu0 0.0
    %160 = vmatpush1.msra.mxu0 %v135
    %161 = vmatprep.subr.mxu0 0.0
    %162 = vmatpush1.msra.mxu0 %v141
    %163 = vmatprep.subr.mxu0 0.0
    %164 = vmatpush1.msra.mxu0 %v143
    %165 = vmatprep.subr.mxu0 0.0
    %166 = vmatpush1.msra.mxu0 0.0
    %167 = vmatprep.subr.mxu0 0.0
    %168 = vmatpush1.msra.mxu0 0.0
    %169 = vmatprep.subr.mxu0 0.0
    %170 = vmatpush1.msra.mxu0 0.0
    %171 = vmatprep.subr.mxu0 0.0
    %172 = vmatpush1.msra.mxu0 0.0
    %173 = vmatprep.subr.mxu0 0.0
    %174 = vmatpush1.msra.mxu0 0.0
    %175 = vmatprep.subr.mxu0 0.0
    %176 = vmatpush1.msra.mxu0 0.0
    %177 = vmatprep.subr.mxu0 0.0
    %178 = vmatpush1.msra.mxu0 0.0
    %179 = vmatprep.subr.mxu0 0.0
    %180 = vmatpush1.msra.mxu0 0.0
    %181 = vmatprep.subr.mxu0 0.0
    %182 = vmatpush1.msra.mxu0 0.0
    %183 = vmatprep.subr.mxu0 0.0
    %184 = vmatpush1.msra.mxu0 0.0
    %185 = vmatprep.subr.mxu0 0.0
    %186 = vmatpush1.msra.mxu0 0.0
    %187 = vmatprep.subr.mxu0 0.0
    %188 = vmatpush1.msra.mxu0 0.0
    %189 = vmatprep.subr.mxu0 0.0
    %190 = vmatpush1.msra.mxu0 0.0
    %191 = vmatprep.subr.mxu0 0.0
    %192 = vmatpush1.msra.mxu0 0.0
    %193 = vmatprep.subr.mxu0 0.0
    %194 = vmatpush1.msra.mxu0 0.0
    %195 = vmatprep.subr.mxu0 0.0
    %196 = vmatpush1.msra.mxu0 0.0
    %197 = vmatprep.subr.mxu0 0.0
    %198 = vmatpush1.msra.mxu0 0.0
    %199 = vmatprep.subr.mxu0 0.0
    %200 = vmatpush1.msra.mxu0 0.0
    %201 = vmatprep.subr.mxu0 0.0
    %202 = vmatpush1.msra.mxu0 0.0
    %203 = vmatprep.subr.mxu0 0.0
    %204 = vmatpush1.msra.mxu0 0.0
    %205 = vmatprep.subr.mxu0 0.0
    %206 = vmatpush1.msra.mxu0 0.0
    %207 = vmatprep.subr.mxu0 0.0
    %208 = vmatpush1.msra.mxu0 0.0
    %209 = vmatprep.subr.mxu0 0.0
    %210 = vmatpush1.msra.mxu0 0.0
    %211 = vmatprep.subr.mxu0 0.0
    %212 = vmatpush1.msra.mxu0 0.0
    %213 = vmatprep.subr.mxu0 0.0
    %214 = vmatpush1.msra.mxu0 0.0
    %215 = vmatprep.subr.mxu0 0.0
    %216 = vmatpush1.msra.mxu0 0.0
    %217 = vmatprep.subr.mxu0 0.0
    %218 = vmatpush1.msra.mxu0 0.0
    %219 = vmatprep.mubr.f32.mxu0 0.0
    %220 = vmatmul.mubr.f32.gmra.mrb[0].mxu0 %v153
    %v221 = vpop.f32.mrb[0].mxu0
    %v222 = vadd.f32 %v149, %v221
    %v223 = vpop.f32.mrb[0].mxu0
    %224 = vdwg.mxu0
    %v225 = vmax.f32 %v222, 0.0
    %v226 = vld [vmem:[%s7] sm:$0xff]
    %v227 = vld [vmem:[%s8] sm:$0xff]
    %229 = vset.pattern.permute.xlu0 0
    %230 = vperm.xlu0 %229, %v227
    %v231 = vpop.permute.xlu0 %230
    %vm233 = vcmask 64512
    %v235 = vsel %vm233, %v226, 0
    %237 = vmatprep.subr.mxu0 0.0
    %238 = vmatpush1.msra.mxu0 %v225
    %239 = vmatprep.subr.mxu0 0.0
    %240 = vmatpush1.msra.mxu0 0.0
    %241 = vmatprep.subr.mxu0 0.0
    %242 = vmatpush1.msra.mxu0 0.0
    %243 = vmatprep.subr.mxu0 0.0
    %244 = vmatpush1.msra.mxu0 0.0
    %245 = vmatprep.subr.mxu0 0.0
    %246 = vmatpush1.msra.mxu0 0.0
    %247 = vmatprep.subr.mxu0 0.0
    %248 = vmatpush1.msra.mxu0 0.0
    %249 = vmatprep.subr.mxu0 0.0
    %250 = vmatpush1.msra.mxu0 0.0
    %251 = vmatprep.subr.mxu0 0.0
    %252 = vmatpush1.msra.mxu0 0.0
    %253 = vmatprep.subr.mxu0 0.0
    %254 = vmatpush1.msra.mxu0 0.0
    %255 = vmatprep.subr.mxu0 0.0
    %256 = vmatpush1.msra.mxu0 0.0
    %257 = vmatprep.subr.mxu0 0.0
    %258 = vmatpush1.msra.mxu0 0.0
    %259 = vmatprep.subr.mxu0 0.0
    %260 = vmatpush1.msra.mxu0 0.0
    %261 = vmatprep.subr.mxu0 0.0
    %262 = vmatpush1.msra.mxu0 0.0
    %263 = vmatprep.subr.mxu0 0.0
    %264 = vmatpush1.msra.mxu0 0.0
    %265 = vmatprep.subr.mxu0 0.0
    %266 = vmatpush1.msra.mxu0 0.0
    %267 = vmatprep.subr.mxu0 0.0
    %268 = vmatpush1.msra.mxu0 0.0
    %269 = vmatprep.subr.mxu0 0.0
    %270 = vmatpush1.msra.mxu0 0.0
    %271 = vmatprep.subr.mxu0 0.0
    %272 = vmatpush1.msra.mxu0 0.0
    %273 = vmatprep.subr.mxu0 0.0
    %274 = vmatpush1.msra.mxu0 0.0
    %275 = vmatprep.subr.mxu0 0.0
    %276 = vmatpush1.msra.mxu0 0.0
    %277 = vmatprep.subr.mxu0 0.0
    %278 = vmatpush1.msra.mxu0 0.0
    %279 = vmatprep.subr.mxu0 0.0
    %280 = vmatpush1.msra.mxu0 0.0
    %281 = vmatprep.subr.mxu0 0.0
    %282 = vmatpush1.msra.mxu0 0.0
    %283 = vmatprep.subr.mxu0 0.0
    %284 = vmatpush1.msra.mxu0 0.0
    %285 = vmatprep.subr.mxu0 0.0
    %286 = vmatpush1.msra.mxu0 0.0
    %287 = vmatprep.subr.mxu0 0.0
    %288 = vmatpush1.msra.mxu0 0.0
    %289 = vmatprep.subr.mxu0 0.0
    %290 = vmatpush1.msra.mxu0 0.0
    %291 = vmatprep.subr.mxu0 0.0
    %292 = vmatpush1.msra.mxu0 0.0
    %293 = vmatprep.subr.mxu0 0.0
    %294 = vmatpush1.msra.mxu0 0.0
    %295 = vmatprep.subr.mxu0 0.0
    %296 = vmatpush1.msra.mxu0 0.0
    %297 = vmatprep.subr.mxu0 0.0
    %298 = vmatpush1.msra.mxu0 0.0
    %299 = vmatprep.subr.mxu0 0.0
    %300 = vmatpush1.msra.mxu0 0.0
    %301 = vmatprep.mubr.f32.mxu0 0.0
    %302 = vmatmul.mubr.f32.gmra.mrb[0].mxu0 %v235
    %v303 = vpop.f32.mrb[0].mxu0
    %v304 = vadd.f32 %v231, %v303
    %v305 = vpop.f32.mrb[0].mxu0
    %306 = vdwg.mxu0
    %v307 = vadd.f32 %v135, %v304
    %v309 = vlaneseq
    %v310 = vshrl.u32 %v309, 7
    %v311 = vsub.s32 0, %v310
    %v312 = vrot.slane %v42, %v311
    %v314 = vmul.f32 %v307, %v312
    %315 = vrot.lane.b32.xlu0 %v314, 4
    %v316 = vpop.permute.xlu0 %315
    %317 = vrot.lane.b32.xlu0 %v314, 2
    %v318 = vpop.permute.xlu0 %317
    %319 = vrot.lane.b32.xlu0 %v314, 126
    %v320 = vpop.permute.xlu0 %319
    %321 = vrot.lane.b32.xlu0 %v314, 124
    %v322 = vpop.permute.xlu0 %321
    %s323 = scalar_lea.vmem %s5, 8
    %v324 = vld [vmem:[%s323] sm:$0xff]
    %s325 = scalar_lea.vmem %s6, 8
    %v326 = vld [vmem:[%s325] sm:$0xff]
    %328 = vset.pattern.permute.xlu0 0
    %329 = vperm.xlu0 %328, %v326
    %v330 = vpop.permute.xlu0 %329
    %v333 = vsel %vm151, %v324, 0
    %335 = vmatprep.subr.mxu0 0.0
    %336 = vmatpush1.msra.mxu0 %v316
    %337 = vmatprep.subr.mxu0 0.0
    %338 = vmatpush1.msra.mxu0 %v318
    %339 = vmatprep.subr.mxu0 0.0
    %340 = vmatpush1.msra.mxu0 %v314
    %341 = vmatprep.subr.mxu0 0.0
    %342 = vmatpush1.msra.mxu0 %v320
    %343 = vmatprep.subr.mxu0 0.0
    %344 = vmatpush1.msra.mxu0 %v322
    %345 = vmatprep.subr.mxu0 0.0
    %346 = vmatpush1.msra.mxu0 0.0
    %347 = vmatprep.subr.mxu0 0.0
    %348 = vmatpush1.msra.mxu0 0.0
    %349 = vmatprep.subr.mxu0 0.0
    %350 = vmatpush1.msra.mxu0 0.0
    %351 = vmatprep.subr.mxu0 0.0
    %352 = vmatpush1.msra.mxu0 0.0
    %353 = vmatprep.subr.mxu0 0.0
    %354 = vmatpush1.msra.mxu0 0.0
    %355 = vmatprep.subr.mxu0 0.0
    %356 = vmatpush1.msra.mxu0 0.0
    %357 = vmatprep.subr.mxu0 0.0
    %358 = vmatpush1.msra.mxu0 0.0
    %359 = vmatprep.subr.mxu0 0.0
    %360 = vmatpush1.msra.mxu0 0.0
    %361 = vmatprep.subr.mxu0 0.0
    %362 = vmatpush1.msra.mxu0 0.0
    %363 = vmatprep.subr.mxu0 0.0
    %364 = vmatpush1.msra.mxu0 0.0
    %365 = vmatprep.subr.mxu0 0.0
    %366 = vmatpush1.msra.mxu0 0.0
    %367 = vmatprep.subr.mxu0 0.0
    %368 = vmatpush1.msra.mxu0 0.0
    %369 = vmatprep.subr.mxu0 0.0
    %370 = vmatpush1.msra.mxu0 0.0
    %371 = vmatprep.subr.mxu0 0.0
    %372 = vmatpush1.msra.mxu0 0.0
    %373 = vmatprep.subr.mxu0 0.0
    %374 = vmatpush1.msra.mxu0 0.0
    %375 = vmatprep.subr.mxu0 0.0
    %376 = vmatpush1.msra.mxu0 0.0
    %377 = vmatprep.subr.mxu0 0.0
    %378 = vmatpush1.msra.mxu0 0.0
    %379 = vmatprep.subr.mxu0 0.0
    %380 = vmatpush1.msra.mxu0 0.0
    %381 = vmatprep.subr.mxu0 0.0
    %382 = vmatpush1.msra.mxu0 0.0
    %383 = vmatprep.subr.mxu0 0.0
    %384 = vmatpush1.msra.mxu0 0.0
    %385 = vmatprep.subr.mxu0 0.0
    %386 = vmatpush1.msra.mxu0 0.0
    %387 = vmatprep.subr.mxu0 0.0
    %388 = vmatpush1.msra.mxu0 0.0
    %389 = vmatprep.subr.mxu0 0.0
    %390 = vmatpush1.msra.mxu0 0.0
    %391 = vmatprep.subr.mxu0 0.0
    %392 = vmatpush1.msra.mxu0 0.0
    %393 = vmatprep.subr.mxu0 0.0
    %394 = vmatpush1.msra.mxu0 0.0
    %395 = vmatprep.subr.mxu0 0.0
    %396 = vmatpush1.msra.mxu0 0.0
    %397 = vmatprep.subr.mxu0 0.0
    %398 = vmatpush1.msra.mxu0 0.0
    %399 = vmatprep.mubr.f32.mxu0 0.0
    %400 = vmatmul.mubr.f32.gmra.mrb[0].mxu0 %v333
    %v401 = vpop.f32.mrb[0].mxu0
    %v402 = vadd.f32 %v330, %v401
    %v403 = vpop.f32.mrb[0].mxu0
    %404 = vdwg.mxu0
    %v405 = vmax.f32 %v402, 0.0
    %s406 = scalar_lea.vmem %s7, 8
    %v407 = vld [vmem:[%s406] sm:$0xff]
    %s408 = scalar_lea.vmem %s8, 8
    %v409 = vld [vmem:[%s408] sm:$0xff]
    %411 = vset.pattern.permute.xlu0 0
    %412 = vperm.xlu0 %411, %v409
    %v413 = vpop.permute.xlu0 %412
    %v416 = vsel %vm233, %v407, 0
    %418 = vmatprep.subr.mxu0 0.0
    %419 = vmatpush1.msra.mxu0 %v405
    %420 = vmatprep.subr.mxu0 0.0
    %421 = vmatpush1.msra.mxu0 0.0
    %422 = vmatprep.subr.mxu0 0.0
    %423 = vmatpush1.msra.mxu0 0.0
    %424 = vmatprep.subr.mxu0 0.0
    %425 = vmatpush1.msra.mxu0 0.0
    %426 = vmatprep.subr.mxu0 0.0
    %427 = vmatpush1.msra.mxu0 0.0
    %428 = vmatprep.subr.mxu0 0.0
    %429 = vmatpush1.msra.mxu0 0.0
    %430 = vmatprep.subr.mxu0 0.0
    %431 = vmatpush1.msra.mxu0 0.0
    %432 = vmatprep.subr.mxu0 0.0
    %433 = vmatpush1.msra.mxu0 0.0
    %434 = vmatprep.subr.mxu0 0.0
    %435 = vmatpush1.msra.mxu0 0.0
    %436 = vmatprep.subr.mxu0 0.0
    %437 = vmatpush1.msra.mxu0 0.0
    %438 = vmatprep.subr.mxu0 0.0
    %439 = vmatpush1.msra.mxu0 0.0
    %440 = vmatprep.subr.mxu0 0.0
    %441 = vmatpush1.msra.mxu0 0.0
    %442 = vmatprep.subr.mxu0 0.0
    %443 = vmatpush1.msra.mxu0 0.0
    %444 = vmatprep.subr.mxu0 0.0
    %445 = vmatpush1.msra.mxu0 0.0
    %446 = vmatprep.subr.mxu0 0.0
    %447 = vmatpush1.msra.mxu0 0.0
    %448 = vmatprep.subr.mxu0 0.0
    %449 = vmatpush1.msra.mxu0 0.0
    %450 = vmatprep.subr.mxu0 0.0
    %451 = vmatpush1.msra.mxu0 0.0
    %452 = vmatprep.subr.mxu0 0.0
    %453 = vmatpush1.msra.mxu0 0.0
    %454 = vmatprep.subr.mxu0 0.0
    %455 = vmatpush1.msra.mxu0 0.0
    %456 = vmatprep.subr.mxu0 0.0
    %457 = vmatpush1.msra.mxu0 0.0
    %458 = vmatprep.subr.mxu0 0.0
    %459 = vmatpush1.msra.mxu0 0.0
    %460 = vmatprep.subr.mxu0 0.0
    %461 = vmatpush1.msra.mxu0 0.0
    %462 = vmatprep.subr.mxu0 0.0
    %463 = vmatpush1.msra.mxu0 0.0
    %464 = vmatprep.subr.mxu0 0.0
    %465 = vmatpush1.msra.mxu0 0.0
    %466 = vmatprep.subr.mxu0 0.0
    %467 = vmatpush1.msra.mxu0 0.0
    %468 = vmatprep.subr.mxu0 0.0
    %469 = vmatpush1.msra.mxu0 0.0
    %470 = vmatprep.subr.mxu0 0.0
    %471 = vmatpush1.msra.mxu0 0.0
    %472 = vmatprep.subr.mxu0 0.0
    %473 = vmatpush1.msra.mxu0 0.0
    %474 = vmatprep.subr.mxu0 0.0
    %475 = vmatpush1.msra.mxu0 0.0
    %476 = vmatprep.subr.mxu0 0.0
    %477 = vmatpush1.msra.mxu0 0.0
    %478 = vmatprep.subr.mxu0 0.0
    %479 = vmatpush1.msra.mxu0 0.0
    %480 = vmatprep.subr.mxu0 0.0
    %481 = vmatpush1.msra.mxu0 0.0
    %482 = vmatprep.mubr.f32.mxu0 0.0
    %483 = vmatmul.mubr.f32.gmra.mrb[0].mxu0 %v416
    %v484 = vpop.f32.mrb[0].mxu0
    %v485 = vadd.f32 %v413, %v484
    %v486 = vpop.f32.mrb[0].mxu0
    %487 = vdwg.mxu0
    %v488 = vadd.f32 %v314, %v485
    %v489 = vmul.f32 %v488, %v312
    %490 = vrot.lane.b32.xlu0 %v489, 8
    %v491 = vpop.permute.xlu0 %490
    %492 = vrot.lane.b32.xlu0 %v489, 4
    %v493 = vpop.permute.xlu0 %492
    %494 = vrot.lane.b32.xlu0 %v489, 124
    %v495 = vpop.permute.xlu0 %494
    %496 = vrot.lane.b32.xlu0 %v489, 120
    %v497 = vpop.permute.xlu0 %496
    %s498 = scalar_lea.vmem %s5, 16
    %v499 = vld [vmem:[%s498] sm:$0xff]
    %s500 = scalar_lea.vmem %s6, 16
    %v501 = vld [vmem:[%s500] sm:$0xff]
    %503 = vset.pattern.permute.xlu0 0
    %504 = vperm.xlu0 %503, %v501
    %v505 = vpop.permute.xlu0 %504
    %v508 = vsel %vm151, %v499, 0
    %510 = vmatprep.subr.mxu0 0.0
    %511 = vmatpush1.msra.mxu0 %v491
    %512 = vmatprep.subr.mxu0 0.0
    %513 = vmatpush1.msra.mxu0 %v493
    %514 = vmatprep.subr.mxu0 0.0
    %515 = vmatpush1.msra.mxu0 %v489
    %516 = vmatprep.subr.mxu0 0.0
    %517 = vmatpush1.msra.mxu0 %v495
    %518 = vmatprep.subr.mxu0 0.0
    %519 = vmatpush1.msra.mxu0 %v497
    %520 = vmatprep.subr.mxu0 0.0
    %521 = vmatpush1.msra.mxu0 0.0
    %522 = vmatprep.subr.mxu0 0.0
    %523 = vmatpush1.msra.mxu0 0.0
    %524 = vmatprep.subr.mxu0 0.0
    %525 = vmatpush1.msra.mxu0 0.0
    %526 = vmatprep.subr.mxu0 0.0
    %527 = vmatpush1.msra.mxu0 0.0
    %528 = vmatprep.subr.mxu0 0.0
    %529 = vmatpush1.msra.mxu0 0.0
    %530 = vmatprep.subr.mxu0 0.0
    %531 = vmatpush1.msra.mxu0 0.0
    %532 = vmatprep.subr.mxu0 0.0
    %533 = vmatpush1.msra.mxu0 0.0
    %534 = vmatprep.subr.mxu0 0.0
    %535 = vmatpush1.msra.mxu0 0.0
    %536 = vmatprep.subr.mxu0 0.0
    %537 = vmatpush1.msra.mxu0 0.0
    %538 = vmatprep.subr.mxu0 0.0
    %539 = vmatpush1.msra.mxu0 0.0
    %540 = vmatprep.subr.mxu0 0.0
    %541 = vmatpush1.msra.mxu0 0.0
    %542 = vmatprep.subr.mxu0 0.0
    %543 = vmatpush1.msra.mxu0 0.0
    %544 = vmatprep.subr.mxu0 0.0
    %545 = vmatpush1.msra.mxu0 0.0
    %546 = vmatprep.subr.mxu0 0.0
    %547 = vmatpush1.msra.mxu0 0.0
    %548 = vmatprep.subr.mxu0 0.0
    %549 = vmatpush1.msra.mxu0 0.0
    %550 = vmatprep.subr.mxu0 0.0
    %551 = vmatpush1.msra.mxu0 0.0
    %552 = vmatprep.subr.mxu0 0.0
    %553 = vmatpush1.msra.mxu0 0.0
    %554 = vmatprep.subr.mxu0 0.0
    %555 = vmatpush1.msra.mxu0 0.0
    %556 = vmatprep.subr.mxu0 0.0
    %557 = vmatpush1.msra.mxu0 0.0
    %558 = vmatprep.subr.mxu0 0.0
    %559 = vmatpush1.msra.mxu0 0.0
    %560 = vmatprep.subr.mxu0 0.0
    %561 = vmatpush1.msra.mxu0 0.0
    %562 = vmatprep.subr.mxu0 0.0
    %563 = vmatpush1.msra.mxu0 0.0
    %564 = vmatprep.subr.mxu0 0.0
    %565 = vmatpush1.msra.mxu0 0.0
    %566 = vmatprep.subr.mxu0 0.0
    %567 = vmatpush1.msra.mxu0 0.0
    %568 = vmatprep.subr.mxu0 0.0
    %569 = vmatpush1.msra.mxu0 0.0
    %570 = vmatprep.subr.mxu0 0.0
    %571 = vmatpush1.msra.mxu0 0.0
    %572 = vmatprep.subr.mxu0 0.0
    %573 = vmatpush1.msra.mxu0 0.0
    %574 = vmatprep.mubr.f32.mxu0 0.0
    %575 = vmatmul.mubr.f32.gmra.mrb[0].mxu0 %v508
    %v576 = vpop.f32.mrb[0].mxu0
    %v577 = vadd.f32 %v505, %v576
    %v578 = vpop.f32.mrb[0].mxu0
    %579 = vdwg.mxu0
    %v580 = vmax.f32 %v577, 0.0
    %s581 = scalar_lea.vmem %s7, 16
    %v582 = vld [vmem:[%s581] sm:$0xff]
    %s583 = scalar_lea.vmem %s8, 16
    %v584 = vld [vmem:[%s583] sm:$0xff]
    %586 = vset.pattern.permute.xlu0 0
    %587 = vperm.xlu0 %586, %v584
    %v588 = vpop.permute.xlu0 %587
    %v591 = vsel %vm233, %v582, 0
    %593 = vmatprep.subr.mxu0 0.0
    %594 = vmatpush1.msra.mxu0 %v580
    %595 = vmatprep.subr.mxu0 0.0
    %596 = vmatpush1.msra.mxu0 0.0
    %597 = vmatprep.subr.mxu0 0.0
    %598 = vmatpush1.msra.mxu0 0.0
    %599 = vmatprep.subr.mxu0 0.0
    %600 = vmatpush1.msra.mxu0 0.0
    %601 = vmatprep.subr.mxu0 0.0
    %602 = vmatpush1.msra.mxu0 0.0
    %603 = vmatprep.subr.mxu0 0.0
    %604 = vmatpush1.msra.mxu0 0.0
    %605 = vmatprep.subr.mxu0 0.0
    %606 = vmatpush1.msra.mxu0 0.0
    %607 = vmatprep.subr.mxu0 0.0
    %608 = vmatpush1.msra.mxu0 0.0
    %609 = vmatprep.subr.mxu0 0.0
    %610 = vmatpush1.msra.mxu0 0.0
    %611 = vmatprep.subr.mxu0 0.0
    %612 = vmatpush1.msra.mxu0 0.0
    %613 = vmatprep.subr.mxu0 0.0
    %614 = vmatpush1.msra.mxu0 0.0
    %615 = vmatprep.subr.mxu0 0.0
    %616 = vmatpush1.msra.mxu0 0.0
    %617 = vmatprep.subr.mxu0 0.0
    %618 = vmatpush1.msra.mxu0 0.0
    %619 = vmatprep.subr.mxu0 0.0
    %620 = vmatpush1.msra.mxu0 0.0
    %621 = vmatprep.subr.mxu0 0.0
    %622 = vmatpush1.msra.mxu0 0.0
    %623 = vmatprep.subr.mxu0 0.0
    %624 = vmatpush1.msra.mxu0 0.0
    %625 = vmatprep.subr.mxu0 0.0
    %626 = vmatpush1.msra.mxu0 0.0
    %627 = vmatprep.subr.mxu0 0.0
    %628 = vmatpush1.msra.mxu0 0.0
    %629 = vmatprep.subr.mxu0 0.0
    %630 = vmatpush1.msra.mxu0 0.0
    %631 = vmatprep.subr.mxu0 0.0
    %632 = vmatpush1.msra.mxu0 0.0
    %633 = vmatprep.subr.mxu0 0.0
    %634 = vmatpush1.msra.mxu0 0.0
    %635 = vmatprep.subr.mxu0 0.0
    %636 = vmatpush1.msra.mxu0 0.0
    %637 = vmatprep.subr.mxu0 0.0
    %638 = vmatpush1.msra.mxu0 0.0
    %639 = vmatprep.subr.mxu0 0.0
    %640 = vmatpush1.msra.mxu0 0.0
    %641 = vmatprep.subr.mxu0 0.0
    %642 = vmatpush1.msra.mxu0 0.0
    %643 = vmatprep.subr.mxu0 0.0
    %644 = vmatpush1.msra.mxu0 0.0
    %645 = vmatprep.subr.mxu0 0.0
    %646 = vmatpush1.msra.mxu0 0.0
    %647 = vmatprep.subr.mxu0 0.0
    %648 = vmatpush1.msra.mxu0 0.0
    %649 = vmatprep.subr.mxu0 0.0
    %650 = vmatpush1.msra.mxu0 0.0
    %651 = vmatprep.subr.mxu0 0.0
    %652 = vmatpush1.msra.mxu0 0.0
    %653 = vmatprep.subr.mxu0 0.0
    %654 = vmatpush1.msra.mxu0 0.0
    %655 = vmatprep.subr.mxu0 0.0
    %656 = vmatpush1.msra.mxu0 0.0
    %657 = vmatprep.mubr.f32.mxu0 0.0
    %658 = vmatmul.mubr.f32.gmra.mrb[0].mxu0 %v591
    %v659 = vpop.f32.mrb[0].mxu0
    %v660 = vadd.f32 %v588, %v659
    %v661 = vpop.f32.mrb[0].mxu0
    %662 = vdwg.mxu0
    %v663 = vadd.f32 %v489, %v660
    %v664 = vmul.f32 %v663, %v312
    %v665 = vld [vmem:[%s9] sm:$0x1f]
    %v666 = vld [vmem:[%s10] sm:$0x1f]
    %668 = vset.pattern.permute.xlu0 0
    %669 = vperm.xlu0 %668, %v666
    %v670 = vpop.permute.xlu0 %669
    %v673 = vsel %vm233, %v665, 0
    %675 = vmatprep.subr.mxu0 0.0
    %676 = vmatpush1.msra.mxu0 %v664
    %677 = vmatprep.subr.mxu0 0.0
    %678 = vmatpush1.msra.mxu0 0.0
    %679 = vmatprep.subr.mxu0 0.0
    %680 = vmatpush1.msra.mxu0 0.0
    %681 = vmatprep.subr.mxu0 0.0
    %682 = vmatpush1.msra.mxu0 0.0
    %683 = vmatprep.subr.mxu0 0.0
    %684 = vmatpush1.msra.mxu0 0.0
    %685 = vmatprep.subr.mxu0 0.0
    %686 = vmatpush1.msra.mxu0 0.0
    %687 = vmatprep.subr.mxu0 0.0
    %688 = vmatpush1.msra.mxu0 0.0
    %689 = vmatprep.subr.mxu0 0.0
    %690 = vmatpush1.msra.mxu0 0.0
    %691 = vmatprep.subr.mxu0 0.0
    %692 = vmatpush1.msra.mxu0 0.0
    %693 = vmatprep.subr.mxu0 0.0
    %694 = vmatpush1.msra.mxu0 0.0
    %695 = vmatprep.subr.mxu0 0.0
    %696 = vmatpush1.msra.mxu0 0.0
    %697 = vmatprep.subr.mxu0 0.0
    %698 = vmatpush1.msra.mxu0 0.0
    %699 = vmatprep.subr.mxu0 0.0
    %700 = vmatpush1.msra.mxu0 0.0
    %701 = vmatprep.subr.mxu0 0.0
    %702 = vmatpush1.msra.mxu0 0.0
    %703 = vmatprep.subr.mxu0 0.0
    %704 = vmatpush1.msra.mxu0 0.0
    %705 = vmatprep.subr.mxu0 0.0
    %706 = vmatpush1.msra.mxu0 0.0
    %707 = vmatprep.subr.mxu0 0.0
    %708 = vmatpush1.msra.mxu0 0.0
    %709 = vmatprep.subr.mxu0 0.0
    %710 = vmatpush1.msra.mxu0 0.0
    %711 = vmatprep.subr.mxu0 0.0
    %712 = vmatpush1.msra.mxu0 0.0
    %713 = vmatprep.subr.mxu0 0.0
    %714 = vmatpush1.msra.mxu0 0.0
    %715 = vmatprep.subr.mxu0 0.0
    %716 = vmatpush1.msra.mxu0 0.0
    %717 = vmatprep.subr.mxu0 0.0
    %718 = vmatpush1.msra.mxu0 0.0
    %719 = vmatprep.subr.mxu0 0.0
    %720 = vmatpush1.msra.mxu0 0.0
    %721 = vmatprep.subr.mxu0 0.0
    %722 = vmatpush1.msra.mxu0 0.0
    %723 = vmatprep.subr.mxu0 0.0
    %724 = vmatpush1.msra.mxu0 0.0
    %725 = vmatprep.subr.mxu0 0.0
    %726 = vmatpush1.msra.mxu0 0.0
    %727 = vmatprep.subr.mxu0 0.0
    %728 = vmatpush1.msra.mxu0 0.0
    %729 = vmatprep.subr.mxu0 0.0
    %730 = vmatpush1.msra.mxu0 0.0
    %731 = vmatprep.subr.mxu0 0.0
    %732 = vmatpush1.msra.mxu0 0.0
    %733 = vmatprep.subr.mxu0 0.0
    %734 = vmatpush1.msra.mxu0 0.0
    %735 = vmatprep.subr.mxu0 0.0
    %736 = vmatpush1.msra.mxu0 0.0
    %737 = vmatprep.subr.mxu0 0.0
    %738 = vmatpush1.msra.mxu0 0.0
    %739 = vmatprep.mubr.f32.mxu0 0.0
    %740 = vmatmul.mubr.f32.gmra.mrb[0].mxu0 %v673
    %v741 = vpop.f32.mrb[0].mxu0
    %v742 = vadd.f32 %v670, %v741
    %v743 = vpop.f32.mrb[0].mxu0
    %744 = vdwg.mxu0
    %v745 = vmul.f32 %v742, %v312
    %746 = vst [vmem:[#allocation2] sm:$0xff] %v664
    %747 = vst [vmem:[%s12] sm:$0x1f] %v745
    // Predicated region
    $region46: #{multi_stage_forward.5} parent=1 // pred_check
      _
    $region47: #{multi_stage_forward.5} parent=1 // pred_check_branch
      %749 = sbr.rel (0) target = $region49
    $region48: #{multi_stage_forward.5} parent=1 // pred_region
      %s751 = ssub.s32 128, 128
      %752 = vsyncadd [#allocation3], %s751
      %s754 = sshll.u32 [#allocation2], 4
      %s755 = int_to_ptr.vmem [resolvable:$true] %s754
      %757 = dma.vmem_to_hbm [thread:$0]  %s755, 128, %s11, [#allocation3]
    $region49: #{multi_stage_forward.5} parent=1 // pred_fallthru
      _
    // Predicated region
    $region50: #{multi_stage_forward.5} parent=1 // pred_check
      _
    $region51: #{multi_stage_forward.5} parent=1 // pred_check_branch
      %759 = sbr.rel (0) target = $region53
    $region52: #{multi_stage_forward.5} parent=1 // pred_region
      _
    $region53: #{multi_stage_forward.5} parent=1 // pred_fallthru
      _
    // Predicated region
    $region54: #{multi_stage_forward.5} parent=1 // pred_check
      _
    $region55: #{multi_stage_forward.5} parent=1 // pred_check_branch
      %761 = sbr.rel (0) target = $region57
    $region56: #{multi_stage_forward.5} parent=1 // pred_region
      %762 = dma.done [#allocation3], 128
    $region57: #{multi_stage_forward.5} parent=1 // pred_fallthru
      _
    // Predicated region
    $region58: #{multi_stage_forward.5} parent=1 // pred_check
      _
    $region59: #{multi_stage_forward.5} parent=1 // pred_check_branch
      %764 = sbr.rel (0) target = $region61
    $region60: #{multi_stage_forward.5} parent=1 // pred_region
      _
    $region61: #{multi_stage_forward.5} parent=1 // pred_fallthru
      _
    %765 = vsyncpa [#allocation3], 1

// kernel: multi_stage_forward.6
$region0: #{multi_stage_forward.6}
  #allocation0 [shape = 'u32[]', space=smem, size = 0x4, offset = 0x4, fixed_abs, tag = 'smem constant byte address 0x4 - core index']
  #allocation1 [shape = 'u32[144,128]{1,0:T(1,128)}', space=vmem, size = 0x12000, scoped, tag = 'internal scratch']
  %s0 = inlined_call_operand.vmem [shape: f32[5,128], index: 0, kind: input, shape index: {}]
  %s1 = inlined_call_operand.vmem [shape: f32[1,128], index: 1, kind: input, shape index: {}]
  %s2 = inlined_call_operand.vmem [shape: f32[1,128], index: 2, kind: input, shape index: {}]
  %s3 = inlined_call_operand.vmem [shape: f32[8,5], index: 3, kind: input, shape index: {}]
  %s4 = inlined_call_operand.vmem [shape: f32[8,1], index: 4, kind: input, shape index: {}]
  %s5 = inlined_call_operand.vmem [shape: f32[3,8,24], index: 5, kind: input, shape index: {}]
  %s6 = inlined_call_operand.vmem [shape: f32[3,8,1], index: 6, kind: input, shape index: {}]
  %s7 = inlined_call_operand.vmem [shape: f32[3,8,8], index: 7, kind: input, shape index: {}]
  %s8 = inlined_call_operand.vmem [shape: f32[3,8,1], index: 8, kind: input, shape index: {}]
  %s9 = inlined_call_operand.vmem [shape: f32[5,8], index: 9, kind: input, shape index: {}]
  %s10 = inlined_call_operand.vmem [shape: f32[5,1], index: 10, kind: input, shape index: {}]
  %s11 = inlined_call_operand.hbm [shape: f32[8,128], index: 11, kind: output, shape index: {0}]
  %s12 = inlined_call_operand.vmem [shape: f32[5,128], index: 12, kind: output, shape index: {1}]
  %13 = xla_tuple %s11, %s12
  %s14 = sld [smem:[#allocation0]]
  $region62: #{multi_stage_forward.6} parent=0
    _
  %s16 = ssub.s32 1, %s14
  %s17 = scalar_select 0, %s16, %s14
  $region1: #{multi_stage_forward.6} parent=0
    #allocation2 [shape = 'u8[4096]{0}', space=vmem, size = 0x1000, scoped, tag = 'output window, operand 0, single buffered']
    #allocation3 [shape = 's32[1]{0}', space=sflag, size = 0x4, scoped, tag = 'scoped memory for multi_stage_forward.6']
    %18 = vsyncpa [#allocation3], 0
    // Predicated region
    $region2: #{multi_stage_forward.6} parent=1 // pred_check
      _
    $region3: #{multi_stage_forward.6} parent=1 // pred_check_branch
      %20 = sbr.rel (0) target = $region5
    $region4: #{multi_stage_forward.6} parent=1 // pred_region
      _
    $region5: #{multi_stage_forward.6} parent=1 // pred_fallthru
      _
    // Predicated region
    $region6: #{multi_stage_forward.6} parent=1 // pred_check
      _
    $region7: #{multi_stage_forward.6} parent=1 // pred_check_branch
      %22 = sbr.rel (0) target = $region9
    $region8: #{multi_stage_forward.6} parent=1 // pred_region
      _
    $region9: #{multi_stage_forward.6} parent=1 // pred_fallthru
      _
    // Predicated region
    $region10: #{multi_stage_forward.6} parent=1 // pred_check
      _
    $region11: #{multi_stage_forward.6} parent=1 // pred_check_branch
      %24 = sbr.rel (0) target = $region13
    $region12: #{multi_stage_forward.6} parent=1 // pred_region
      _
    $region13: #{multi_stage_forward.6} parent=1 // pred_fallthru
      _
    // Predicated region
    $region14: #{multi_stage_forward.6} parent=1 // pred_check
      _
    $region15: #{multi_stage_forward.6} parent=1 // pred_check_branch
      %26 = sbr.rel (0) target = $region17
    $region16: #{multi_stage_forward.6} parent=1 // pred_region
      _
    $region17: #{multi_stage_forward.6} parent=1 // pred_fallthru
      _
    // Predicated region
    $region18: #{multi_stage_forward.6} parent=1 // pred_check
      _
    $region19: #{multi_stage_forward.6} parent=1 // pred_check_branch
      %28 = sbr.rel (0) target = $region21
    $region20: #{multi_stage_forward.6} parent=1 // pred_region
      _
    $region21: #{multi_stage_forward.6} parent=1 // pred_fallthru
      _
    // Predicated region
    $region22: #{multi_stage_forward.6} parent=1 // pred_check
      _
    $region23: #{multi_stage_forward.6} parent=1 // pred_check_branch
      %30 = sbr.rel (0) target = $region25
    $region24: #{multi_stage_forward.6} parent=1 // pred_region
      _
    $region25: #{multi_stage_forward.6} parent=1 // pred_fallthru
      _
    // Predicated region
    $region26: #{multi_stage_forward.6} parent=1 // pred_check
      _
    $region27: #{multi_stage_forward.6} parent=1 // pred_check_branch
      %32 = sbr.rel (0) target = $region29
    $region28: #{multi_stage_forward.6} parent=1 // pred_region
      _
    $region29: #{multi_stage_forward.6} parent=1 // pred_fallthru
      _
    // Predicated region
    $region30: #{multi_stage_forward.6} parent=1 // pred_check
      _
    $region31: #{multi_stage_forward.6} parent=1 // pred_check_branch
      %34 = sbr.rel (0) target = $region33
    $region32: #{multi_stage_forward.6} parent=1 // pred_region
      _
    $region33: #{multi_stage_forward.6} parent=1 // pred_fallthru
      _
    // Predicated region
    $region34: #{multi_stage_forward.6} parent=1 // pred_check
      _
    $region35: #{multi_stage_forward.6} parent=1 // pred_check_branch
      %36 = sbr.rel (0) target = $region37
    $region36: #{multi_stage_forward.6} parent=1 // pred_region
      _
    $region37: #{multi_stage_forward.6} parent=1 // pred_fallthru
      _
    // Predicated region
    $region38: #{multi_stage_forward.6} parent=1 // pred_check
      _
    $region39: #{multi_stage_forward.6} parent=1 // pred_check_branch
      %38 = sbr.rel (0) target = $region41
    $region40: #{multi_stage_forward.6} parent=1 // pred_region
      _
    $region41: #{multi_stage_forward.6} parent=1 // pred_fallthru
      _
    // Predicated region
    $region42: #{multi_stage_forward.6} parent=1 // pred_check
      _
    $region43: #{multi_stage_forward.6} parent=1 // pred_check_branch
      %40 = sbr.rel (0) target = $region45
    $region44: #{multi_stage_forward.6} parent=1 // pred_region
      _
    $region45: #{multi_stage_forward.6} parent=1 // pred_fallthru
      _
    %v41 = vld [vmem:[%s0] sm:$0x1f]
    %v42 = vld [vmem:[%s1] sm:$0x1]
    %v43 = vld [vmem:[%s2] sm:$0x1]
    %vm44 = vcmask 1044480
    %v45 = vsel %vm44, %v41, -inf
    %v46 = vrot.slane %v45, 4
    %v47 = vmax.f32 %v45, %v46
    %v48 = vrot.slane %v47, 2
    %v49 = vmax.f32 %v47, %v48
    %v50 = vrot.slane %v49, 1
    %v51 = vmax.f32 %v49, %v50
    %v52 = vsub.f32 %v41, %v51
    %v53 = vmul.f32 %v52, 1.442695
    %v54 = vpow.pop %v53
    %v55 = vsel %vm44, %v54, 0.0
    %v56 = vrot.slane %v55, 4
    %v57 = vadd.f32 %v55, %v56
    %v58 = vrot.slane %v57, 2
    %v59 = vadd.f32 %v57, %v58
    %v60 = vrot.slane %v59, 1
    %v61 = vadd.f32 %v59, %v60
    %v62 = vrcp.pop %v61
    %v63 = vmul.f32 %v54, %v62
    %v65 = vlaneseq
    %v66 = vshrl.u32 %v65, 7
    %v67 = vsub.s32 0, %v66
    %v68 = vrot.slane %v42, %v67
    %v70 = vmul.f32 %v63, %v68
    %v71 = vld [vmem:[%s3] sm:$0xff]
    %v72 = vld [vmem:[%s4] sm:$0xff]
    %74 = vset.pattern.permute.xlu0 0
    %75 = vperm.xlu0 %74, %v72
    %v76 = vpop.permute.xlu0 %75
    %vm78 = vcmask 39936
    %v80 = vsel %vm78, %v71, 0
    %v83 = vsel %vm44, %v70, 0
    %85 = vmatprep.subr.mxu0 0.0
    %86 = vmatpush1.msra.mxu0 %v83
    %87 = vmatprep.subr.mxu0 0.0
    %88 = vmatpush1.msra.mxu0 0.0
    %89 = vmatprep.subr.mxu0 0.0
    %90 = vmatpush1.msra.mxu0 0.0
    %91 = vmatprep.subr.mxu0 0.0
    %92 = vmatpush1.msra.mxu0 0.0
    %93 = vmatprep.subr.mxu0 0.0
    %94 = vmatpush1.msra.mxu0 0.0
    %95 = vmatprep.subr.mxu0 0.0
    %96 = vmatpush1.msra.mxu0 0.0
    %97 = vmatprep.subr.mxu0 0.0
    %98 = vmatpush1.msra.mxu0 0.0
    %99 = vmatprep.subr.mxu0 0.0
    %100 = vmatpush1.msra.mxu0 0.0
    %101 = vmatprep.subr.mxu0 0.0
    %102 = vmatpush1.msra.mxu0 0.0
    %103 = vmatprep.subr.mxu0 0.0
    %104 = vmatpush1.msra.mxu0 0.0
    %105 = vmatprep.subr.mxu0 0.0
    %106 = vmatpush1.msra.mxu0 0.0
    %107 = vmatprep.subr.mxu0 0.0
    %108 = vmatpush1.msra.mxu0 0.0
    %109 = vmatprep.subr.mxu0 0.0
    %110 = vmatpush1.msra.mxu0 0.0
    %111 = vmatprep.subr.mxu0 0.0
    %112 = vmatpush1.msra.mxu0 0.0
    %113 = vmatprep.subr.mxu0 0.0
    %114 = vmatpush1.msra.mxu0 0.0
    %115 = vmatprep.subr.mxu0 0.0
    %116 = vmatpush1.msra.mxu0 0.0
    %117 = vmatprep.subr.mxu0 0.0
    %118 = vmatpush1.msra.mxu0 0.0
    %119 = vmatprep.subr.mxu0 0.0
    %120 = vmatpush1.msra.mxu0 0.0
    %121 = vmatprep.subr.mxu0 0.0
    %122 = vmatpush1.msra.mxu0 0.0
    %123 = vmatprep.subr.mxu0 0.0
    %124 = vmatpush1.msra.mxu0 0.0
    %125 = vmatprep.subr.mxu0 0.0
    %126 = vmatpush1.msra.mxu0 0.0
    %127 = vmatprep.subr.mxu0 0.0
    %128 = vmatpush1.msra.mxu0 0.0
    %129 = vmatprep.subr.mxu0 0.0
    %130 = vmatpush1.msra.mxu0 0.0
    %131 = vmatprep.subr.mxu0 0.0
    %132 = vmatpush1.msra.mxu0 0.0
    %133 = vmatprep.subr.mxu0 0.0
    %134 = vmatpush1.msra.mxu0 0.0
    %135 = vmatprep.subr.mxu0 0.0
    %136 = vmatpush1.msra.mxu0 0.0
    %137 = vmatprep.subr.mxu0 0.0
    %138 = vmatpush1.msra.mxu0 0.0
    %139 = vmatprep.subr.mxu0 0.0
    %140 = vmatpush1.msra.mxu0 0.0
    %141 = vmatprep.subr.mxu0 0.0
    %142 = vmatpush1.msra.mxu0 0.0
    %143 = vmatprep.subr.mxu0 0.0
    %144 = vmatpush1.msra.mxu0 0.0
    %145 = vmatprep.subr.mxu0 0.0
    %146 = vmatpush1.msra.mxu0 0.0
    %147 = vmatprep.subr.mxu0 0.0
    %148 = vmatpush1.msra.mxu0 0.0
    %149 = vmatprep.mubr.f32.mxu0 0.0
    %150 = vmatmul.mubr.f32.gmra.mrb[0].mxu0 %v80
    %v151 = vpop.f32.mrb[0].mxu0
    %v152 = vadd.f32 %v76, %v151
    %v153 = vpop.f32.mrb[0].mxu0
    %154 = vdwg.mxu0
    %v156 = vlaneseq
    %v157 = vshrl.u32 %v156, 7
    %v158 = vsub.s32 0, %v157
    %v159 = vrot.slane %v43, %v158
    %v161 = vmul.f32 %v152, %v159
    %162 = vrot.lane.b32.xlu0 %v161, 1
    %v163 = vpop.permute.xlu0 %162
    %164 = vrot.lane.b32.xlu0 %v161, 127
    %v165 = vpop.permute.xlu0 %164
    %v166 = vld [vmem:[%s5] sm:$0xff]
    %v167 = vld [vmem:[%s6] sm:$0xff]
    %169 = vset.pattern.permute.xlu0 0
    %170 = vperm.xlu0 %169, %v167
    %v171 = vpop.permute.xlu0 %170
    %vm173 = vcmask 195584
    %v175 = vsel %vm173, %v166, 0
    %177 = vmatprep.subr.mxu0 0.0
    %178 = vmatpush1.msra.mxu0 %v163
    %179 = vmatprep.subr.mxu0 0.0
    %180 = vmatpush1.msra.mxu0 %v161
    %181 = vmatprep.subr.mxu0 0.0
    %182 = vmatpush1.msra.mxu0 %v165
    %183 = vmatprep.subr.mxu0 0.0
    %184 = vmatpush1.msra.mxu0 0.0
    %185 = vmatprep.subr.mxu0 0.0
    %186 = vmatpush1.msra.mxu0 0.0
    %187 = vmatprep.subr.mxu0 0.0
    %188 = vmatpush1.msra.mxu0 0.0
    %189 = vmatprep.subr.mxu0 0.0
    %190 = vmatpush1.msra.mxu0 0.0
    %191 = vmatprep.subr.mxu0 0.0
    %192 = vmatpush1.msra.mxu0 0.0
    %193 = vmatprep.subr.mxu0 0.0
    %194 = vmatpush1.msra.mxu0 0.0
    %195 = vmatprep.subr.mxu0 0.0
    %196 = vmatpush1.msra.mxu0 0.0
    %197 = vmatprep.subr.mxu0 0.0
    %198 = vmatpush1.msra.mxu0 0.0
    %199 = vmatprep.subr.mxu0 0.0
    %200 = vmatpush1.msra.mxu0 0.0
    %201 = vmatprep.subr.mxu0 0.0
    %202 = vmatpush1.msra.mxu0 0.0
    %203 = vmatprep.subr.mxu0 0.0
    %204 = vmatpush1.msra.mxu0 0.0
    %205 = vmatprep.subr.mxu0 0.0
    %206 = vmatpush1.msra.mxu0 0.0
    %207 = vmatprep.subr.mxu0 0.0
    %208 = vmatpush1.msra.mxu0 0.0
    %209 = vmatprep.subr.mxu0 0.0
    %210 = vmatpush1.msra.mxu0 0.0
    %211 = vmatprep.subr.mxu0 0.0
    %212 = vmatpush1.msra.mxu0 0.0
    %213 = vmatprep.subr.mxu0 0.0
    %214 = vmatpush1.msra.mxu0 0.0
    %215 = vmatprep.subr.mxu0 0.0
    %216 = vmatpush1.msra.mxu0 0.0
    %217 = vmatprep.subr.mxu0 0.0
    %218 = vmatpush1.msra.mxu0 0.0
    %219 = vmatprep.subr.mxu0 0.0
    %220 = vmatpush1.msra.mxu0 0.0
    %221 = vmatprep.subr.mxu0 0.0
    %222 = vmatpush1.msra.mxu0 0.0
    %223 = vmatprep.subr.mxu0 0.0
    %224 = vmatpush1.msra.mxu0 0.0
    %225 = vmatprep.subr.mxu0 0.0
    %226 = vmatpush1.msra.mxu0 0.0
    %227 = vmatprep.subr.mxu0 0.0
    %228 = vmatpush1.msra.mxu0 0.0
    %229 = vmatprep.subr.mxu0 0.0
    %230 = vmatpush1.msra.mxu0 0.0
    %231 = vmatprep.subr.mxu0 0.0
    %232 = vmatpush1.msra.mxu0 0.0
    %233 = vmatprep.subr.mxu0 0.0
    %234 = vmatpush1.msra.mxu0 0.0
    %235 = vmatprep.subr.mxu0 0.0
    %236 = vmatpush1.msra.mxu0 0.0
    %237 = vmatprep.subr.mxu0 0.0
    %238 = vmatpush1.msra.mxu0 0.0
    %239 = vmatprep.subr.mxu0 0.0
    %240 = vmatpush1.msra.mxu0 0.0
    %241 = vmatprep.mubr.f32.mxu0 0.0
    %242 = vmatmul.mubr.f32.gmra.mrb[0].mxu0 %v175
    %v243 = vpop.f32.mrb[0].mxu0
    %v244 = vadd.f32 %v171, %v243
    %v245 = vpop.f32.mrb[0].mxu0
    %246 = vdwg.mxu0
    %v247 = vmax.f32 %v244, 0.0
    %v248 = vld [vmem:[%s7] sm:$0xff]
    %v249 = vld [vmem:[%s8] sm:$0xff]
    %251 = vset.pattern.permute.xlu0 0
    %252 = vperm.xlu0 %251, %v249
    %v253 = vpop.permute.xlu0 %252
    %vm255 = vcmask 64512
    %v257 = vsel %vm255, %v248, 0
    %259 = vmatprep.subr.mxu0 0.0
    %260 = vmatpush1.msra.mxu0 %v247
    %261 = vmatprep.subr.mxu0 0.0
    %262 = vmatpush1.msra.mxu0 0.0
    %263 = vmatprep.subr.mxu0 0.0
    %264 = vmatpush1.msra.mxu0 0.0
    %265 = vmatprep.subr.mxu0 0.0
    %266 = vmatpush1.msra.mxu0 0.0
    %267 = vmatprep.subr.mxu0 0.0
    %268 = vmatpush1.msra.mxu0 0.0
    %269 = vmatprep.subr.mxu0 0.0
    %270 = vmatpush1.msra.mxu0 0.0
    %271 = vmatprep.subr.mxu0 0.0
    %272 = vmatpush1.msra.mxu0 0.0
    %273 = vmatprep.subr.mxu0 0.0
    %274 = vmatpush1.msra.mxu0 0.0
    %275 = vmatprep.subr.mxu0 0.0
    %276 = vmatpush1.msra.mxu0 0.0
    %277 = vmatprep.subr.mxu0 0.0
    %278 = vmatpush1.msra.mxu0 0.0
    %279 = vmatprep.subr.mxu0 0.0
    %280 = vmatpush1.msra.mxu0 0.0
    %281 = vmatprep.subr.mxu0 0.0
    %282 = vmatpush1.msra.mxu0 0.0
    %283 = vmatprep.subr.mxu0 0.0
    %284 = vmatpush1.msra.mxu0 0.0
    %285 = vmatprep.subr.mxu0 0.0
    %286 = vmatpush1.msra.mxu0 0.0
    %287 = vmatprep.subr.mxu0 0.0
    %288 = vmatpush1.msra.mxu0 0.0
    %289 = vmatprep.subr.mxu0 0.0
    %290 = vmatpush1.msra.mxu0 0.0
    %291 = vmatprep.subr.mxu0 0.0
    %292 = vmatpush1.msra.mxu0 0.0
    %293 = vmatprep.subr.mxu0 0.0
    %294 = vmatpush1.msra.mxu0 0.0
    %295 = vmatprep.subr.mxu0 0.0
    %296 = vmatpush1.msra.mxu0 0.0
    %297 = vmatprep.subr.mxu0 0.0
    %298 = vmatpush1.msra.mxu0 0.0
    %299 = vmatprep.subr.mxu0 0.0
    %300 = vmatpush1.msra.mxu0 0.0
    %301 = vmatprep.subr.mxu0 0.0
    %302 = vmatpush1.msra.mxu0 0.0
    %303 = vmatprep.subr.mxu0 0.0
    %304 = vmatpush1.msra.mxu0 0.0
    %305 = vmatprep.subr.mxu0 0.0
    %306 = vmatpush1.msra.mxu0 0.0
    %307 = vmatprep.subr.mxu0 0.0
    %308 = vmatpush1.msra.mxu0 0.0
    %309 = vmatprep.subr.mxu0 0.0
    %310 = vmatpush1.msra.mxu0 0.0
    %311 = vmatprep.subr.mxu0 0.0
    %312 = vmatpush1.msra.mxu0 0.0
    %313 = vmatprep.subr.mxu0 0.0
    %314 = vmatpush1.msra.mxu0 0.0
    %315 = vmatprep.subr.mxu0 0.0
    %316 = vmatpush1.msra.mxu0 0.0
    %317 = vmatprep.subr.mxu0 0.0
    %318 = vmatpush1.msra.mxu0 0.0
    %319 = vmatprep.subr.mxu0 0.0
    %320 = vmatpush1.msra.mxu0 0.0
    %321 = vmatprep.subr.mxu0 0.0
    %322 = vmatpush1.msra.mxu0 0.0
    %323 = vmatprep.mubr.f32.mxu0 0.0
    %324 = vmatmul.mubr.f32.gmra.mrb[0].mxu0 %v257
    %v325 = vpop.f32.mrb[0].mxu0
    %v326 = vadd.f32 %v253, %v325
    %v327 = vpop.f32.mrb[0].mxu0
    %328 = vdwg.mxu0
    %v329 = vadd.f32 %v161, %v326
    %v330 = vmul.f32 %v329, %v68
    %331 = vrot.lane.b32.xlu0 %v330, 2
    %v332 = vpop.permute.xlu0 %331
    %333 = vrot.lane.b32.xlu0 %v330, 126
    %v334 = vpop.permute.xlu0 %333
    %s335 = scalar_lea.vmem %s5, 8
    %v336 = vld [vmem:[%s335] sm:$0xff]
    %s337 = scalar_lea.vmem %s6, 8
    %v338 = vld [vmem:[%s337] sm:$0xff]
    %340 = vset.pattern.permute.xlu0 0
    %341 = vperm.xlu0 %340, %v338
    %v342 = vpop.permute.xlu0 %341
    %v345 = vsel %vm173, %v336, 0
    %347 = vmatprep.subr.mxu0 0.0
    %348 = vmatpush1.msra.mxu0 %v332
    %349 = vmatprep.subr.mxu0 0.0
    %350 = vmatpush1.msra.mxu0 %v330
    %351 = vmatprep.subr.mxu0 0.0
    %352 = vmatpush1.msra.mxu0 %v334
    %353 = vmatprep.subr.mxu0 0.0
    %354 = vmatpush1.msra.mxu0 0.0
    %355 = vmatprep.subr.mxu0 0.0
    %356 = vmatpush1.msra.mxu0 0.0
    %357 = vmatprep.subr.mxu0 0.0
    %358 = vmatpush1.msra.mxu0 0.0
    %359 = vmatprep.subr.mxu0 0.0
    %360 = vmatpush1.msra.mxu0 0.0
    %361 = vmatprep.subr.mxu0 0.0
    %362 = vmatpush1.msra.mxu0 0.0
    %363 = vmatprep.subr.mxu0 0.0
    %364 = vmatpush1.msra.mxu0 0.0
    %365 = vmatprep.subr.mxu0 0.0
    %366 = vmatpush1.msra.mxu0 0.0
    %367 = vmatprep.subr.mxu0 0.0
    %368 = vmatpush1.msra.mxu0 0.0
    %369 = vmatprep.subr.mxu0 0.0
    %370 = vmatpush1.msra.mxu0 0.0
    %371 = vmatprep.subr.mxu0 0.0
    %372 = vmatpush1.msra.mxu0 0.0
    %373 = vmatprep.subr.mxu0 0.0
    %374 = vmatpush1.msra.mxu0 0.0
    %375 = vmatprep.subr.mxu0 0.0
    %376 = vmatpush1.msra.mxu0 0.0
    %377 = vmatprep.subr.mxu0 0.0
    %378 = vmatpush1.msra.mxu0 0.0
    %379 = vmatprep.subr.mxu0 0.0
    %380 = vmatpush1.msra.mxu0 0.0
    %381 = vmatprep.subr.mxu0 0.0
    %382 = vmatpush1.msra.mxu0 0.0
    %383 = vmatprep.subr.mxu0 0.0
    %384 = vmatpush1.msra.mxu0 0.0
    %385 = vmatprep.subr.mxu0 0.0
    %386 = vmatpush1.msra.mxu0 0.0
    %387 = vmatprep.subr.mxu0 0.0
    %388 = vmatpush1.msra.mxu0 0.0
    %389 = vmatprep.subr.mxu0 0.0
    %390 = vmatpush1.msra.mxu0 0.0
    %391 = vmatprep.subr.mxu0 0.0
    %392 = vmatpush1.msra.mxu0 0.0
    %393 = vmatprep.subr.mxu0 0.0
    %394 = vmatpush1.msra.mxu0 0.0
    %395 = vmatprep.subr.mxu0 0.0
    %396 = vmatpush1.msra.mxu0 0.0
    %397 = vmatprep.subr.mxu0 0.0
    %398 = vmatpush1.msra.mxu0 0.0
    %399 = vmatprep.subr.mxu0 0.0
    %400 = vmatpush1.msra.mxu0 0.0
    %401 = vmatprep.subr.mxu0 0.0
    %402 = vmatpush1.msra.mxu0 0.0
    %403 = vmatprep.subr.mxu0 0.0
    %404 = vmatpush1.msra.mxu0 0.0
    %405 = vmatprep.subr.mxu0 0.0
    %406 = vmatpush1.msra.mxu0 0.0
    %407 = vmatprep.subr.mxu0 0.0
    %408 = vmatpush1.msra.mxu0 0.0
    %409 = vmatprep.subr.mxu0 0.0
    %410 = vmatpush1.msra.mxu0 0.0
    %411 = vmatprep.mubr.f32.mxu0 0.0
    %412 = vmatmul.mubr.f32.gmra.mrb[0].mxu0 %v345
    %v413 = vpop.f32.mrb[0].mxu0
    %v414 = vadd.f32 %v342, %v413
    %v415 = vpop.f32.mrb[0].mxu0
    %416 = vdwg.mxu0
    %v417 = vmax.f32 %v414, 0.0
    %s418 = scalar_lea.vmem %s7, 8
    %v419 = vld [vmem:[%s418] sm:$0xff]
    %s420 = scalar_lea.vmem %s8, 8
    %v421 = vld [vmem:[%s420] sm:$0xff]
    %423 = vset.pattern.permute.xlu0 0
    %424 = vperm.xlu0 %423, %v421
    %v425 = vpop.permute.xlu0 %424
    %v428 = vsel %vm255, %v419, 0
    %430 = vmatprep.subr.mxu0 0.0
    %431 = vmatpush1.msra.mxu0 %v417
    %432 = vmatprep.subr.mxu0 0.0
    %433 = vmatpush1.msra.mxu0 0.0
    %434 = vmatprep.subr.mxu0 0.0
    %435 = vmatpush1.msra.mxu0 0.0
    %436 = vmatprep.subr.mxu0 0.0
    %437 = vmatpush1.msra.mxu0 0.0
    %438 = vmatprep.subr.mxu0 0.0
    %439 = vmatpush1.msra.mxu0 0.0
    %440 = vmatprep.subr.mxu0 0.0
    %441 = vmatpush1.msra.mxu0 0.0
    %442 = vmatprep.subr.mxu0 0.0
    %443 = vmatpush1.msra.mxu0 0.0
    %444 = vmatprep.subr.mxu0 0.0
    %445 = vmatpush1.msra.mxu0 0.0
    %446 = vmatprep.subr.mxu0 0.0
    %447 = vmatpush1.msra.mxu0 0.0
    %448 = vmatprep.subr.mxu0 0.0
    %449 = vmatpush1.msra.mxu0 0.0
    %450 = vmatprep.subr.mxu0 0.0
    %451 = vmatpush1.msra.mxu0 0.0
    %452 = vmatprep.subr.mxu0 0.0
    %453 = vmatpush1.msra.mxu0 0.0
    %454 = vmatprep.subr.mxu0 0.0
    %455 = vmatpush1.msra.mxu0 0.0
    %456 = vmatprep.subr.mxu0 0.0
    %457 = vmatpush1.msra.mxu0 0.0
    %458 = vmatprep.subr.mxu0 0.0
    %459 = vmatpush1.msra.mxu0 0.0
    %460 = vmatprep.subr.mxu0 0.0
    %461 = vmatpush1.msra.mxu0 0.0
    %462 = vmatprep.subr.mxu0 0.0
    %463 = vmatpush1.msra.mxu0 0.0
    %464 = vmatprep.subr.mxu0 0.0
    %465 = vmatpush1.msra.mxu0 0.0
    %466 = vmatprep.subr.mxu0 0.0
    %467 = vmatpush1.msra.mxu0 0.0
    %468 = vmatprep.subr.mxu0 0.0
    %469 = vmatpush1.msra.mxu0 0.0
    %470 = vmatprep.subr.mxu0 0.0
    %471 = vmatpush1.msra.mxu0 0.0
    %472 = vmatprep.subr.mxu0 0.0
    %473 = vmatpush1.msra.mxu0 0.0
    %474 = vmatprep.subr.mxu0 0.0
    %475 = vmatpush1.msra.mxu0 0.0
    %476 = vmatprep.subr.mxu0 0.0
    %477 = vmatpush1.msra.mxu0 0.0
    %478 = vmatprep.subr.mxu0 0.0
    %479 = vmatpush1.msra.mxu0 0.0
    %480 = vmatprep.subr.mxu0 0.0
    %481 = vmatpush1.msra.mxu0 0.0
    %482 = vmatprep.subr.mxu0 0.0
    %483 = vmatpush1.msra.mxu0 0.0
    %484 = vmatprep.subr.mxu0 0.0
    %485 = vmatpush1.msra.mxu0 0.0
    %486 = vmatprep.subr.mxu0 0.0
    %487 = vmatpush1.msra.mxu0 0.0
    %488 = vmatprep.subr.mxu0 0.0
    %489 = vmatpush1.msra.mxu0 0.0
    %490 = vmatprep.subr.mxu0 0.0
    %491 = vmatpush1.msra.mxu0 0.0
    %492 = vmatprep.subr.mxu0 0.0
    %493 = vmatpush1.msra.mxu0 0.0
    %494 = vmatprep.mubr.f32.mxu0 0.0
    %495 = vmatmul.mubr.f32.gmra.mrb[0].mxu0 %v428
    %v496 = vpop.f32.mrb[0].mxu0
    %v497 = vadd.f32 %v425, %v496
    %v498 = vpop.f32.mrb[0].mxu0
    %499 = vdwg.mxu0
    %v500 = vadd.f32 %v330, %v497
    %v501 = vmul.f32 %v500, %v68
    %502 = vrot.lane.b32.xlu0 %v501, 4
    %v503 = vpop.permute.xlu0 %502
    %504 = vrot.lane.b32.xlu0 %v501, 124
    %v505 = vpop.permute.xlu0 %504
    %s506 = scalar_lea.vmem %s5, 16
    %v507 = vld [vmem:[%s506] sm:$0xff]
    %s508 = scalar_lea.vmem %s6, 16
    %v509 = vld [vmem:[%s508] sm:$0xff]
    %511 = vset.pattern.permute.xlu0 0
    %512 = vperm.xlu0 %511, %v509
    %v513 = vpop.permute.xlu0 %512
    %v516 = vsel %vm173, %v507, 0
    %518 = vmatprep.subr.mxu0 0.0
    %519 = vmatpush1.msra.mxu0 %v503
    %520 = vmatprep.subr.mxu0 0.0
    %521 = vmatpush1.msra.mxu0 %v501
    %522 = vmatprep.subr.mxu0 0.0
    %523 = vmatpush1.msra.mxu0 %v505
    %524 = vmatprep.subr.mxu0 0.0
    %525 = vmatpush1.msra.mxu0 0.0
    %526 = vmatprep.subr.mxu0 0.0
    %527 = vmatpush1.msra.mxu0 0.0
    %528 = vmatprep.subr.mxu0 0.0
    %529 = vmatpush1.msra.mxu0 0.0
    %530 = vmatprep.subr.mxu0 0.0
    %531 = vmatpush1.msra.mxu0 0.0
    %532 = vmatprep.subr.mxu0 0.0
    %533 = vmatpush1.msra.mxu0 0.0
    %534 = vmatprep.subr.mxu0 0.0
    %535 = vmatpush1.msra.mxu0 0.0
    %536 = vmatprep.subr.mxu0 0.0
    %537 = vmatpush1.msra.mxu0 0.0
    %538 = vmatprep.subr.mxu0 0.0
    %539 = vmatpush1.msra.mxu0 0.0
    %540 = vmatprep.subr.mxu0 0.0
    %541 = vmatpush1.msra.mxu0 0.0
    %542 = vmatprep.subr.mxu0 0.0
    %543 = vmatpush1.msra.mxu0 0.0
    %544 = vmatprep.subr.mxu0 0.0
    %545 = vmatpush1.msra.mxu0 0.0
    %546 = vmatprep.subr.mxu0 0.0
    %547 = vmatpush1.msra.mxu0 0.0
    %548 = vmatprep.subr.mxu0 0.0
    %549 = vmatpush1.msra.mxu0 0.0
    %550 = vmatprep.subr.mxu0 0.0
    %551 = vmatpush1.msra.mxu0 0.0
    %552 = vmatprep.subr.mxu0 0.0
    %553 = vmatpush1.msra.mxu0 0.0
    %554 = vmatprep.subr.mxu0 0.0
    %555 = vmatpush1.msra.mxu0 0.0
    %556 = vmatprep.subr.mxu0 0.0
    %557 = vmatpush1.msra.mxu0 0.0
    %558 = vmatprep.subr.mxu0 0.0
    %559 = vmatpush1.msra.mxu0 0.0
    %560 = vmatprep.subr.mxu0 0.0
    %561 = vmatpush1.msra.mxu0 0.0
    %562 = vmatprep.subr.mxu0 0.0
    %563 = vmatpush1.msra.mxu0 0.0
    %564 = vmatprep.subr.mxu0 0.0
    %565 = vmatpush1.msra.mxu0 0.0
    %566 = vmatprep.subr.mxu0 0.0
    %567 = vmatpush1.msra.mxu0 0.0
    %568 = vmatprep.subr.mxu0 0.0
    %569 = vmatpush1.msra.mxu0 0.0
    %570 = vmatprep.subr.mxu0 0.0
    %571 = vmatpush1.msra.mxu0 0.0
    %572 = vmatprep.subr.mxu0 0.0
    %573 = vmatpush1.msra.mxu0 0.0
    %574 = vmatprep.subr.mxu0 0.0
    %575 = vmatpush1.msra.mxu0 0.0
    %576 = vmatprep.subr.mxu0 0.0
    %577 = vmatpush1.msra.mxu0 0.0
    %578 = vmatprep.subr.mxu0 0.0
    %579 = vmatpush1.msra.mxu0 0.0
    %580 = vmatprep.subr.mxu0 0.0
    %581 = vmatpush1.msra.mxu0 0.0
    %582 = vmatprep.mubr.f32.mxu0 0.0
    %583 = vmatmul.mubr.f32.gmra.mrb[0].mxu0 %v516
    %v584 = vpop.f32.mrb[0].mxu0
    %v585 = vadd.f32 %v513, %v584
    %v586 = vpop.f32.mrb[0].mxu0
    %587 = vdwg.mxu0
    %v588 = vmax.f32 %v585, 0.0
    %s589 = scalar_lea.vmem %s7, 16
    %v590 = vld [vmem:[%s589] sm:$0xff]
    %s591 = scalar_lea.vmem %s8, 16
    %v592 = vld [vmem:[%s591] sm:$0xff]
    %594 = vset.pattern.permute.xlu0 0
    %595 = vperm.xlu0 %594, %v592
    %v596 = vpop.permute.xlu0 %595
    %v599 = vsel %vm255, %v590, 0
    %601 = vmatprep.subr.mxu0 0.0
    %602 = vmatpush1.msra.mxu0 %v588
    %603 = vmatprep.subr.mxu0 0.0
    %604 = vmatpush1.msra.mxu0 0.0
    %605 = vmatprep.subr.mxu0 0.0
    %606 = vmatpush1.msra.mxu0 0.0
    %607 = vmatprep.subr.mxu0 0.0
    %608 = vmatpush1.msra.mxu0 0.0
    %609 = vmatprep.subr.mxu0 0.0
    %610 = vmatpush1.msra.mxu0 0.0
    %611 = vmatprep.subr.mxu0 0.0
    %612 = vmatpush1.msra.mxu0 0.0
    %613 = vmatprep.subr.mxu0 0.0
    %614 = vmatpush1.msra.mxu0 0.0
    %615 = vmatprep.subr.mxu0 0.0
    %616 = vmatpush1.msra.mxu0 0.0
    %617 = vmatprep.subr.mxu0 0.0
    %618 = vmatpush1.msra.mxu0 0.0
    %619 = vmatprep.subr.mxu0 0.0
    %620 = vmatpush1.msra.mxu0 0.0
    %621 = vmatprep.subr.mxu0 0.0
    %622 = vmatpush1.msra.mxu0 0.0
    %623 = vmatprep.subr.mxu0 0.0
    %624 = vmatpush1.msra.mxu0 0.0
    %625 = vmatprep.subr.mxu0 0.0
    %626 = vmatpush1.msra.mxu0 0.0
    %627 = vmatprep.subr.mxu0 0.0
    %628 = vmatpush1.msra.mxu0 0.0
    %629 = vmatprep.subr.mxu0 0.0
    %630 = vmatpush1.msra.mxu0 0.0
    %631 = vmatprep.subr.mxu0 0.0
    %632 = vmatpush1.msra.mxu0 0.0
    %633 = vmatprep.subr.mxu0 0.0
    %634 = vmatpush1.msra.mxu0 0.0
    %635 = vmatprep.subr.mxu0 0.0
    %636 = vmatpush1.msra.mxu0 0.0
    %637 = vmatprep.subr.mxu0 0.0
    %638 = vmatpush1.msra.mxu0 0.0
    %639 = vmatprep.subr.mxu0 0.0
    %640 = vmatpush1.msra.mxu0 0.0
    %641 = vmatprep.subr.mxu0 0.0
    %642 = vmatpush1.msra.mxu0 0.0
    %643 = vmatprep.subr.mxu0 0.0
    %644 = vmatpush1.msra.mxu0 0.0
    %645 = vmatprep.subr.mxu0 0.0
    %646 = vmatpush1.msra.mxu0 0.0
    %647 = vmatprep.subr.mxu0 0.0
    %648 = vmatpush1.msra.mxu0 0.0
    %649 = vmatprep.subr.mxu0 0.0
    %650 = vmatpush1.msra.mxu0 0.0
    %651 = vmatprep.subr.mxu0 0.0
    %652 = vmatpush1.msra.mxu0 0.0
    %653 = vmatprep.subr.mxu0 0.0
    %654 = vmatpush1.msra.mxu0 0.0
    %655 = vmatprep.subr.mxu0 0.0
    %656 = vmatpush1.msra.mxu0 0.0
    %657 = vmatprep.subr.mxu0 0.0
    %658 = vmatpush1.msra.mxu0 0.0
    %659 = vmatprep.subr.mxu0 0.0
    %660 = vmatpush1.msra.mxu0 0.0
    %661 = vmatprep.subr.mxu0 0.0
    %662 = vmatpush1.msra.mxu0 0.0
    %663 = vmatprep.subr.mxu0 0.0
    %664 = vmatpush1.msra.mxu0 0.0
    %665 = vmatprep.mubr.f32.mxu0 0.0
    %666 = vmatmul.mubr.f32.gmra.mrb[0].mxu0 %v599
    %v667 = vpop.f32.mrb[0].mxu0
    %v668 = vadd.f32 %v596, %v667
    %v669 = vpop.f32.mrb[0].mxu0
    %670 = vdwg.mxu0
    %v671 = vadd.f32 %v501, %v668
    %v672 = vmul.f32 %v671, %v68
    %v673 = vld [vmem:[%s9] sm:$0x1f]
    %v674 = vld [vmem:[%s10] sm:$0x1f]
    %676 = vset.pattern.permute.xlu0 0
    %677 = vperm.xlu0 %676, %v674
    %v678 = vpop.permute.xlu0 %677
    %v681 = vsel %vm255, %v673, 0
    %683 = vmatprep.subr.mxu0 0.0
    %684 = vmatpush1.msra.mxu0 %v672
    %685 = vmatprep.subr.mxu0 0.0
    %686 = vmatpush1.msra.mxu0 0.0
    %687 = vmatprep.subr.mxu0 0.0
    %688 = vmatpush1.msra.mxu0 0.0
    %689 = vmatprep.subr.mxu0 0.0
    %690 = vmatpush1.msra.mxu0 0.0
    %691 = vmatprep.subr.mxu0 0.0
    %692 = vmatpush1.msra.mxu0 0.0
    %693 = vmatprep.subr.mxu0 0.0
    %694 = vmatpush1.msra.mxu0 0.0
    %695 = vmatprep.subr.mxu0 0.0
    %696 = vmatpush1.msra.mxu0 0.0
    %697 = vmatprep.subr.mxu0 0.0
    %698 = vmatpush1.msra.mxu0 0.0
    %699 = vmatprep.subr.mxu0 0.0
    %700 = vmatpush1.msra.mxu0 0.0
    %701 = vmatprep.subr.mxu0 0.0
    %702 = vmatpush1.msra.mxu0 0.0
    %703 = vmatprep.subr.mxu0 0.0
    %704 = vmatpush1.msra.mxu0 0.0
    %705 = vmatprep.subr.mxu0 0.0
    %706 = vmatpush1.msra.mxu0 0.0
    %707 = vmatprep.subr.mxu0 0.0
    %708 = vmatpush1.msra.mxu0 0.0
    %709 = vmatprep.subr.mxu0 0.0
    %710 = vmatpush1.msra.mxu0 0.0
    %711 = vmatprep.subr.mxu0 0.0
    %712 = vmatpush1.msra.mxu0 0.0
    %713 = vmatprep.subr.mxu0 0.0
    %714 = vmatpush1.msra.mxu0 0.0
    %715 = vmatprep.subr.mxu0 0.0
    %716 = vmatpush1.msra.mxu0 0.0
    %717 = vmatprep.subr.mxu0 0.0
    %718 = vmatpush1.msra.mxu0 0.0
    %719 = vmatprep.subr.mxu0 0.0
    %720 = vmatpush1.msra.mxu0 0.0
    %721 = vmatprep.subr.mxu0 0.0
    %722 = vmatpush1.msra.mxu0 0.0
    %723 = vmatprep.subr.mxu0 0.0
    %724 = vmatpush1.msra.mxu0 0.0
    %725 = vmatprep.subr.mxu0 0.0
    %726 = vmatpush1.msra.mxu0 0.0
    %727 = vmatprep.subr.mxu0 0.0
    %728 = vmatpush1.msra.mxu0 0.0
    %729 = vmatprep.subr.mxu0 0.0
    %730 = vmatpush1.msra.mxu0 0.0
    %731 = vmatprep.subr.mxu0 0.0
    %732 = vmatpush1.msra.mxu0 0.0
    %733 = vmatprep.subr.mxu0 0.0
    %734 = vmatpush1.msra.mxu0 0.0
    %735 = vmatprep.subr.mxu0 0.0
    %736 = vmatpush1.msra.mxu0 0.0
    %737 = vmatprep.subr.mxu0 0.0
    %738 = vmatpush1.msra.mxu0 0.0
    %739 = vmatprep.subr.mxu0 0.0
    %740 = vmatpush1.msra.mxu0 0.0
    %741 = vmatprep.subr.mxu0 0.0
    %742 = vmatpush1.msra.mxu0 0.0
    %743 = vmatprep.subr.mxu0 0.0
    %744 = vmatpush1.msra.mxu0 0.0
    %745 = vmatprep.subr.mxu0 0.0
    %746 = vmatpush1.msra.mxu0 0.0
    %747 = vmatprep.mubr.f32.mxu0 0.0
    %748 = vmatmul.mubr.f32.gmra.mrb[0].mxu0 %v681
    %v749 = vpop.f32.mrb[0].mxu0
    %v750 = vadd.f32 %v678, %v749
    %v751 = vpop.f32.mrb[0].mxu0
    %752 = vdwg.mxu0
    %v753 = vmul.f32 %v750, %v68
    %754 = vst [vmem:[#allocation2] sm:$0xff] %v672
    %755 = vst [vmem:[%s12] sm:$0x1f] %v753
    // Predicated region
    $region46: #{multi_stage_forward.6} parent=1 // pred_check
      _
    $region47: #{multi_stage_forward.6} parent=1 // pred_check_branch
      %757 = sbr.rel (0) target = $region49
    $region48: #{multi_stage_forward.6} parent=1 // pred_region
      %s759 = ssub.s32 128, 128
      %760 = vsyncadd [#allocation3], %s759
      %s762 = sshll.u32 [#allocation2], 4
      %s763 = int_to_ptr.vmem [resolvable:$true] %s762
      %765 = dma.vmem_to_hbm [thread:$0]  %s763, 128, %s11, [#allocation3]
    $region49: #{multi_stage_forward.6} parent=1 // pred_fallthru
      _
    // Predicated region
    $region50: #{multi_stage_forward.6} parent=1 // pred_check
      _
    $region51: #{multi_stage_forward.6} parent=1 // pred_check_branch
      %767 = sbr.rel (0) target = $region53
    $region52: #{multi_stage_forward.6} parent=1 // pred_region
      _
    $region53: #{multi_stage_forward.6} parent=1 // pred_fallthru
      _
    // Predicated region
    $region54: #{multi_stage_forward.6} parent=1 // pred_check
      _
    $region55: #{multi_stage_forward.6} parent=1 // pred_check_branch
      %769 = sbr.rel (0) target = $region57
    $region56: #{multi_stage_forward.6} parent=1 // pred_region
      %770 = dma.done [#allocation3], 128
    $region57: #{multi_stage_forward.6} parent=1 // pred_fallthru
      _
    // Predicated region
    $region58: #{multi_stage_forward.6} parent=1 // pred_check
      _
    $region59: #{multi_stage_forward.6} parent=1 // pred_check_branch
      %772 = sbr.rel (0) target = $region61
    $region60: #{multi_stage_forward.6} parent=1 // pred_region
      _
    $region61: #{multi_stage_forward.6} parent=1 // pred_fallthru
      _
    %773 = vsyncpa [#allocation3], 1

// kernel: multi_stage_forward.7
$region0: #{multi_stage_forward.7}
  #allocation0 [shape = 'u32[]', space=smem, size = 0x4, offset = 0x4, fixed_abs, tag = 'smem constant byte address 0x4 - core index']
  #allocation1 [shape = 'u32[144,128]{1,0:T(1,128)}', space=vmem, size = 0x12000, scoped, tag = 'internal scratch']
  %s0 = inlined_call_operand.vmem [shape: f32[5,128], index: 0, kind: input, shape index: {}]
  %s1 = inlined_call_operand.vmem [shape: f32[1,128], index: 1, kind: input, shape index: {}]
  %s2 = inlined_call_operand.vmem [shape: f32[1,128], index: 2, kind: input, shape index: {}]
  %s3 = inlined_call_operand.vmem [shape: f32[8,5], index: 3, kind: input, shape index: {}]
  %s4 = inlined_call_operand.vmem [shape: f32[8,1], index: 4, kind: input, shape index: {}]
  %s5 = inlined_call_operand.vmem [shape: f32[3,8,24], index: 5, kind: input, shape index: {}]
  %s6 = inlined_call_operand.vmem [shape: f32[3,8,1], index: 6, kind: input, shape index: {}]
  %s7 = inlined_call_operand.vmem [shape: f32[3,8,8], index: 7, kind: input, shape index: {}]
  %s8 = inlined_call_operand.vmem [shape: f32[3,8,1], index: 8, kind: input, shape index: {}]
  %s9 = inlined_call_operand.vmem [shape: f32[5,8], index: 9, kind: input, shape index: {}]
  %s10 = inlined_call_operand.vmem [shape: f32[5,1], index: 10, kind: input, shape index: {}]
  %s11 = inlined_call_operand.vmem [shape: f32[8,128], index: 11, kind: output, shape index: {0}]
  %s12 = inlined_call_operand.vmem [shape: f32[5,128], index: 12, kind: output, shape index: {1}]
  %13 = xla_tuple %s11, %s12
  %s14 = sld [smem:[#allocation0]]
  $region62: #{multi_stage_forward.7} parent=0
    _
  %s16 = ssub.s32 1, %s14
  %s17 = scalar_select 0, %s16, %s14
  // Predicated region
  $region2: #{multi_stage_forward.7} parent=0 // pred_check
    _
  $region3: #{multi_stage_forward.7} parent=0 // pred_check_branch
    %19 = sbr.rel (0) target = $region5
  $region4: #{multi_stage_forward.7} parent=0 // pred_region
    _
  $region5: #{multi_stage_forward.7} parent=0 // pred_fallthru
    _
  // Predicated region
  $region6: #{multi_stage_forward.7} parent=0 // pred_check
    _
  $region7: #{multi_stage_forward.7} parent=0 // pred_check_branch
    %21 = sbr.rel (0) target = $region9
  $region8: #{multi_stage_forward.7} parent=0 // pred_region
    _
  $region9: #{multi_stage_forward.7} parent=0 // pred_fallthru
    _
  // Predicated region
  $region10: #{multi_stage_forward.7} parent=0 // pred_check
    _
  $region11: #{multi_stage_forward.7} parent=0 // pred_check_branch
    %23 = sbr.rel (0) target = $region13
  $region12: #{multi_stage_forward.7} parent=0 // pred_region
    _
  $region13: #{multi_stage_forward.7} parent=0 // pred_fallthru
    _
  // Predicated region
  $region14: #{multi_stage_forward.7} parent=0 // pred_check
    _
  $region15: #{multi_stage_forward.7} parent=0 // pred_check_branch
    %25 = sbr.rel (0) target = $region17
  $region16: #{multi_stage_forward.7} parent=0 // pred_region
    _
  $region17: #{multi_stage_forward.7} parent=0 // pred_fallthru
    _
  // Predicated region
  $region18: #{multi_stage_forward.7} parent=0 // pred_check
    _
  $region19: #{multi_stage_forward.7} parent=0 // pred_check_branch
    %27 = sbr.rel (0) target = $region21
  $region20: #{multi_stage_forward.7} parent=0 // pred_region
    _
  $region21: #{multi_stage_forward.7} parent=0 // pred_fallthru
    _
  // Predicated region
  $region22: #{multi_stage_forward.7} parent=0 // pred_check
    _
  $region23: #{multi_stage_forward.7} parent=0 // pred_check_branch
    %29 = sbr.rel (0) target = $region25
  $region24: #{multi_stage_forward.7} parent=0 // pred_region
    _
  $region25: #{multi_stage_forward.7} parent=0 // pred_fallthru
    _
  // Predicated region
  $region26: #{multi_stage_forward.7} parent=0 // pred_check
    _
  $region27: #{multi_stage_forward.7} parent=0 // pred_check_branch
    %31 = sbr.rel (0) target = $region29
  $region28: #{multi_stage_forward.7} parent=0 // pred_region
    _
  $region29: #{multi_stage_forward.7} parent=0 // pred_fallthru
    _
  // Predicated region
  $region30: #{multi_stage_forward.7} parent=0 // pred_check
    _
  $region31: #{multi_stage_forward.7} parent=0 // pred_check_branch
    %33 = sbr.rel (0) target = $region33
  $region32: #{multi_stage_forward.7} parent=0 // pred_region
    _
  $region33: #{multi_stage_forward.7} parent=0 // pred_fallthru
    _
  // Predicated region
  $region34: #{multi_stage_forward.7} parent=0 // pred_check
    _
  $region35: #{multi_stage_forward.7} parent=0 // pred_check_branch
    %35 = sbr.rel (0) target = $region37
  $region36: #{multi_stage_forward.7} parent=0 // pred_region
    _
  $region37: #{multi_stage_forward.7} parent=0 // pred_fallthru
    _
  // Predicated region
  $region38: #{multi_stage_forward.7} parent=0 // pred_check
    _
  $region39: #{multi_stage_forward.7} parent=0 // pred_check_branch
    %37 = sbr.rel (0) target = $region41
  $region40: #{multi_stage_forward.7} parent=0 // pred_region
    _
  $region41: #{multi_stage_forward.7} parent=0 // pred_fallthru
    _
  // Predicated region
  $region42: #{multi_stage_forward.7} parent=0 // pred_check
    _
  $region43: #{multi_stage_forward.7} parent=0 // pred_check_branch
    %39 = sbr.rel (0) target = $region45
  $region44: #{multi_stage_forward.7} parent=0 // pred_region
    _
  $region45: #{multi_stage_forward.7} parent=0 // pred_fallthru
    _
  %v40 = vld [vmem:[%s0] sm:$0x1f]
  %v41 = vld [vmem:[%s1] sm:$0x1]
  %v42 = vld [vmem:[%s2] sm:$0x1]
  %vm43 = vcmask 1044480
  %v44 = vsel %vm43, %v40, -inf
  %v45 = vrot.slane %v44, 4
  %v46 = vmax.f32 %v44, %v45
  %v47 = vrot.slane %v46, 2
  %v48 = vmax.f32 %v46, %v47
  %v49 = vrot.slane %v48, 1
  %v50 = vmax.f32 %v48, %v49
  %v51 = vsub.f32 %v40, %v50
  %v52 = vmul.f32 %v51, 1.442695
  %v53 = vpow.pop %v52
  %v54 = vsel %vm43, %v53, 0.0
  %v55 = vrot.slane %v54, 4
  %v56 = vadd.f32 %v54, %v55
  %v57 = vrot.slane %v56, 2
  %v58 = vadd.f32 %v56, %v57
  %v59 = vrot.slane %v58, 1
  %v60 = vadd.f32 %v58, %v59
  %v61 = vrcp.pop %v60
  %v62 = vmul.f32 %v53, %v61
  %v64 = vlaneseq
  %v65 = vshrl.u32 %v64, 7
  %v66 = vsub.s32 0, %v65
  %v67 = vrot.slane %v41, %v66
  %v69 = vmul.f32 %v62, %v67
  %v70 = vld [vmem:[%s3] sm:$0xff]
  %v71 = vld [vmem:[%s4] sm:$0xff]
  %73 = vset.pattern.permute.xlu0 0
  %74 = vperm.xlu0 %73, %v71
  %v75 = vpop.permute.xlu0 %74
  %vm77 = vcmask 39936
  %v79 = vsel %vm77, %v70, 0
  %v82 = vsel %vm43, %v69, 0
  %84 = vmatprep.subr.mxu0 0.0
  %85 = vmatpush1.msra.mxu0 %v82
  %86 = vmatprep.subr.mxu0 0.0
  %87 = vmatpush1.msra.mxu0 0.0
  %88 = vmatprep.subr.mxu0 0.0
  %89 = vmatpush1.msra.mxu0 0.0
  %90 = vmatprep.subr.mxu0 0.0
  %91 = vmatpush1.msra.mxu0 0.0
  %92 = vmatprep.subr.mxu0 0.0
  %93 = vmatpush1.msra.mxu0 0.0
  %94 = vmatprep.subr.mxu0 0.0
  %95 = vmatpush1.msra.mxu0 0.0
  %96 = vmatprep.subr.mxu0 0.0
  %97 = vmatpush1.msra.mxu0 0.0
  %98 = vmatprep.subr.mxu0 0.0
  %99 = vmatpush1.msra.mxu0 0.0
  %100 = vmatprep.subr.mxu0 0.0
  %101 = vmatpush1.msra.mxu0 0.0
  %102 = vmatprep.subr.mxu0 0.0
  %103 = vmatpush1.msra.mxu0 0.0
  %104 = vmatprep.subr.mxu0 0.0
  %105 = vmatpush1.msra.mxu0 0.0
  %106 = vmatprep.subr.mxu0 0.0
  %107 = vmatpush1.msra.mxu0 0.0
  %108 = vmatprep.subr.mxu0 0.0
  %109 = vmatpush1.msra.mxu0 0.0
  %110 = vmatprep.subr.mxu0 0.0
  %111 = vmatpush1.msra.mxu0 0.0
  %112 = vmatprep.subr.mxu0 0.0
  %113 = vmatpush1.msra.mxu0 0.0
  %114 = vmatprep.subr.mxu0 0.0
  %115 = vmatpush1.msra.mxu0 0.0
  %116 = vmatprep.subr.mxu0 0.0
  %117 = vmatpush1.msra.mxu0 0.0
  %118 = vmatprep.subr.mxu0 0.0
  %119 = vmatpush1.msra.mxu0 0.0
  %120 = vmatprep.subr.mxu0 0.0
  %121 = vmatpush1.msra.mxu0 0.0
  %122 = vmatprep.subr.mxu0 0.0
  %123 = vmatpush1.msra.mxu0 0.0
  %124 = vmatprep.subr.mxu0 0.0
  %125 = vmatpush1.msra.mxu0 0.0
  %126 = vmatprep.subr.mxu0 0.0
  %127 = vmatpush1.msra.mxu0 0.0
  %128 = vmatprep.subr.mxu0 0.0
  %129 = vmatpush1.msra.mxu0 0.0
  %130 = vmatprep.subr.mxu0 0.0
  %131 = vmatpush1.msra.mxu0 0.0
  %132 = vmatprep.subr.mxu0 0.0
  %133 = vmatpush1.msra.mxu0 0.0
  %134 = vmatprep.subr.mxu0 0.0
  %135 = vmatpush1.msra.mxu0 0.0
  %136 = vmatprep.subr.mxu0 0.0
  %137 = vmatpush1.msra.mxu0 0.0
  %138 = vmatprep.subr.mxu0 0.0
  %139 = vmatpush1.msra.mxu0 0.0
  %140 = vmatprep.subr.mxu0 0.0
  %141 = vmatpush1.msra.mxu0 0.0
  %142 = vmatprep.subr.mxu0 0.0
  %143 = vmatpush1.msra.mxu0 0.0
  %144 = vmatprep.subr.mxu0 0.0
  %145 = vmatpush1.msra.mxu0 0.0
  %146 = vmatprep.subr.mxu0 0.0
  %147 = vmatpush1.msra.mxu0 0.0
  %148 = vmatprep.mubr.f32.mxu0 0.0
  %149 = vmatmul.mubr.f32.gmra.mrb[0].mxu0 %v79
  %v150 = vpop.f32.mrb[0].mxu0
  %v151 = vadd.f32 %v75, %v150
  %v152 = vpop.f32.mrb[0].mxu0
  %153 = vdwg.mxu0
  %v155 = vlaneseq
  %v156 = vshrl.u32 %v155, 7
  %v157 = vsub.s32 0, %v156
  %v158 = vrot.slane %v42, %v157
  %v160 = vmul.f32 %v151, %v158
  %161 = vrot.lane.b32.xlu0 %v160, 1
  %v162 = vpop.permute.xlu0 %161
  %163 = vrot.lane.b32.xlu0 %v160, 127
  %v164 = vpop.permute.xlu0 %163
  %v165 = vld [vmem:[%s5] sm:$0xff]
  %v166 = vld [vmem:[%s6] sm:$0xff]
  %168 = vset.pattern.permute.xlu0 0
  %169 = vperm.xlu0 %168, %v166
  %v170 = vpop.permute.xlu0 %169
  %vm172 = vcmask 195584
  %v174 = vsel %vm172, %v165, 0
  %176 = vmatprep.subr.mxu0 0.0
  %177 = vmatpush1.msra.mxu0 %v162
  %178 = vmatprep.subr.mxu0 0.0
  %179 = vmatpush1.msra.mxu0 %v160
  %180 = vmatprep.subr.mxu0 0.0
  %181 = vmatpush1.msra.mxu0 %v164
  %182 = vmatprep.subr.mxu0 0.0
  %183 = vmatpush1.msra.mxu0 0.0
  %184 = vmatprep.subr.mxu0 0.0
  %185 = vmatpush1.msra.mxu0 0.0
  %186 = vmatprep.subr.mxu0 0.0
  %187 = vmatpush1.msra.mxu0 0.0
  %188 = vmatprep.subr.mxu0 0.0
  %189 = vmatpush1.msra.mxu0 0.0
  %190 = vmatprep.subr.mxu0 0.0
  %191 = vmatpush1.msra.mxu0 0.0
  %192 = vmatprep.subr.mxu0 0.0
  %193 = vmatpush1.msra.mxu0 0.0
  %194 = vmatprep.subr.mxu0 0.0
  %195 = vmatpush1.msra.mxu0 0.0
  %196 = vmatprep.subr.mxu0 0.0
  %197 = vmatpush1.msra.mxu0 0.0
  %198 = vmatprep.subr.mxu0 0.0
  %199 = vmatpush1.msra.mxu0 0.0
  %200 = vmatprep.subr.mxu0 0.0
  %201 = vmatpush1.msra.mxu0 0.0
  %202 = vmatprep.subr.mxu0 0.0
  %203 = vmatpush1.msra.mxu0 0.0
  %204 = vmatprep.subr.mxu0 0.0
  %205 = vmatpush1.msra.mxu0 0.0
  %206 = vmatprep.subr.mxu0 0.0
  %207 = vmatpush1.msra.mxu0 0.0
  %208 = vmatprep.subr.mxu0 0.0
  %209 = vmatpush1.msra.mxu0 0.0
  %210 = vmatprep.subr.mxu0 0.0
  %211 = vmatpush1.msra.mxu0 0.0
  %212 = vmatprep.subr.mxu0 0.0
  %213 = vmatpush1.msra.mxu0 0.0
  %214 = vmatprep.subr.mxu0 0.0
  %215 = vmatpush1.msra.mxu0 0.0
  %216 = vmatprep.subr.mxu0 0.0
  %217 = vmatpush1.msra.mxu0 0.0
  %218 = vmatprep.subr.mxu0 0.0
  %219 = vmatpush1.msra.mxu0 0.0
  %220 = vmatprep.subr.mxu0 0.0
  %221 = vmatpush1.msra.mxu0 0.0
  %222 = vmatprep.subr.mxu0 0.0
  %223 = vmatpush1.msra.mxu0 0.0
  %224 = vmatprep.subr.mxu0 0.0
  %225 = vmatpush1.msra.mxu0 0.0
  %226 = vmatprep.subr.mxu0 0.0
  %227 = vmatpush1.msra.mxu0 0.0
  %228 = vmatprep.subr.mxu0 0.0
  %229 = vmatpush1.msra.mxu0 0.0
  %230 = vmatprep.subr.mxu0 0.0
  %231 = vmatpush1.msra.mxu0 0.0
  %232 = vmatprep.subr.mxu0 0.0
  %233 = vmatpush1.msra.mxu0 0.0
  %234 = vmatprep.subr.mxu0 0.0
  %235 = vmatpush1.msra.mxu0 0.0
  %236 = vmatprep.subr.mxu0 0.0
  %237 = vmatpush1.msra.mxu0 0.0
  %238 = vmatprep.subr.mxu0 0.0
  %239 = vmatpush1.msra.mxu0 0.0
  %240 = vmatprep.mubr.f32.mxu0 0.0
  %241 = vmatmul.mubr.f32.gmra.mrb[0].mxu0 %v174
  %v242 = vpop.f32.mrb[0].mxu0
  %v243 = vadd.f32 %v170, %v242
  %v244 = vpop.f32.mrb[0].mxu0
  %245 = vdwg.mxu0
  %v246 = vmax.f32 %v243, 0.0
  %v247 = vld [vmem:[%s7] sm:$0xff]
  %v248 = vld [vmem:[%s8] sm:$0xff]
  %250 = vset.pattern.permute.xlu0 0
  %251 = vperm.xlu0 %250, %v248
  %v252 = vpop.permute.xlu0 %251
  %vm254 = vcmask 64512
  %v256 = vsel %vm254, %v247, 0
  %258 = vmatprep.subr.mxu0 0.0
  %259 = vmatpush1.msra.mxu0 %v246
  %260 = vmatprep.subr.mxu0 0.0
  %261 = vmatpush1.msra.mxu0 0.0
  %262 = vmatprep.subr.mxu0 0.0
  %263 = vmatpush1.msra.mxu0 0.0
  %264 = vmatprep.subr.mxu0 0.0
  %265 = vmatpush1.msra.mxu0 0.0
  %266 = vmatprep.subr.mxu0 0.0
  %267 = vmatpush1.msra.mxu0 0.0
  %268 = vmatprep.subr.mxu0 0.0
  %269 = vmatpush1.msra.mxu0 0.0
  %270 = vmatprep.subr.mxu0 0.0
  %271 = vmatpush1.msra.mxu0 0.0
  %272 = vmatprep.subr.mxu0 0.0
  %273 = vmatpush1.msra.mxu0 0.0
  %274 = vmatprep.subr.mxu0 0.0
  %275 = vmatpush1.msra.mxu0 0.0
  %276 = vmatprep.subr.mxu0 0.0
  %277 = vmatpush1.msra.mxu0 0.0
  %278 = vmatprep.subr.mxu0 0.0
  %279 = vmatpush1.msra.mxu0 0.0
  %280 = vmatprep.subr.mxu0 0.0
  %281 = vmatpush1.msra.mxu0 0.0
  %282 = vmatprep.subr.mxu0 0.0
  %283 = vmatpush1.msra.mxu0 0.0
  %284 = vmatprep.subr.mxu0 0.0
  %285 = vmatpush1.msra.mxu0 0.0
  %286 = vmatprep.subr.mxu0 0.0
  %287 = vmatpush1.msra.mxu0 0.0
  %288 = vmatprep.subr.mxu0 0.0
  %289 = vmatpush1.msra.mxu0 0.0
  %290 = vmatprep.subr.mxu0 0.0
  %291 = vmatpush1.msra.mxu0 0.0
  %292 = vmatprep.subr.mxu0 0.0
  %293 = vmatpush1.msra.mxu0 0.0
  %294 = vmatprep.subr.mxu0 0.0
  %295 = vmatpush1.msra.mxu0 0.0
  %296 = vmatprep.subr.mxu0 0.0
  %297 = vmatpush1.msra.mxu0 0.0
  %298 = vmatprep.subr.mxu0 0.0
  %299 = vmatpush1.msra.mxu0 0.0
  %300 = vmatprep.subr.mxu0 0.0
  %301 = vmatpush1.msra.mxu0 0.0
  %302 = vmatprep.subr.mxu0 0.0
  %303 = vmatpush1.msra.mxu0 0.0
  %304 = vmatprep.subr.mxu0 0.0
  %305 = vmatpush1.msra.mxu0 0.0
  %306 = vmatprep.subr.mxu0 0.0
  %307 = vmatpush1.msra.mxu0 0.0
  %308 = vmatprep.subr.mxu0 0.0
  %309 = vmatpush1.msra.mxu0 0.0
  %310 = vmatprep.subr.mxu0 0.0
  %311 = vmatpush1.msra.mxu0 0.0
  %312 = vmatprep.subr.mxu0 0.0
  %313 = vmatpush1.msra.mxu0 0.0
  %314 = vmatprep.subr.mxu0 0.0
  %315 = vmatpush1.msra.mxu0 0.0
  %316 = vmatprep.subr.mxu0 0.0
  %317 = vmatpush1.msra.mxu0 0.0
  %318 = vmatprep.subr.mxu0 0.0
  %319 = vmatpush1.msra.mxu0 0.0
  %320 = vmatprep.subr.mxu0 0.0
  %321 = vmatpush1.msra.mxu0 0.0
  %322 = vmatprep.mubr.f32.mxu0 0.0
  %323 = vmatmul.mubr.f32.gmra.mrb[0].mxu0 %v256
  %v324 = vpop.f32.mrb[0].mxu0
  %v325 = vadd.f32 %v252, %v324
  %v326 = vpop.f32.mrb[0].mxu0
  %327 = vdwg.mxu0
  %v328 = vadd.f32 %v160, %v325
  %v329 = vmul.f32 %v328, %v67
  %330 = vrot.lane.b32.xlu0 %v329, 2
  %v331 = vpop.permute.xlu0 %330
  %332 = vrot.lane.b32.xlu0 %v329, 126
  %v333 = vpop.permute.xlu0 %332
  %s334 = scalar_lea.vmem %s5, 8
  %v335 = vld [vmem:[%s334] sm:$0xff]
  %s336 = scalar_lea.vmem %s6, 8
  %v337 = vld [vmem:[%s336] sm:$0xff]
  %339 = vset.pattern.permute.xlu0 0
  %340 = vperm.xlu0 %339, %v337
  %v341 = vpop.permute.xlu0 %340
  %v344 = vsel %vm172, %v335, 0
  %346 = vmatprep.subr.mxu0 0.0
  %347 = vmatpush1.msra.mxu0 %v331
  %348 = vmatprep.subr.mxu0 0.0
  %349 = vmatpush1.msra.mxu0 %v329
  %350 = vmatprep.subr.mxu0 0.0
  %351 = vmatpush1.msra.mxu0 %v333
  %352 = vmatprep.subr.mxu0 0.0
  %353 = vmatpush1.msra.mxu0 0.0
  %354 = vmatprep.subr.mxu0 0.0
  %355 = vmatpush1.msra.mxu0 0.0
  %356 = vmatprep.subr.mxu0 0.0
  %357 = vmatpush1.msra.mxu0 0.0
  %358 = vmatprep.subr.mxu0 0.0
  %359 = vmatpush1.msra.mxu0 0.0
  %360 = vmatprep.subr.mxu0 0.0
  %361 = vmatpush1.msra.mxu0 0.0
  %362 = vmatprep.subr.mxu0 0.0
  %363 = vmatpush1.msra.mxu0 0.0
  %364 = vmatprep.subr.mxu0 0.0
  %365 = vmatpush1.msra.mxu0 0.0
  %366 = vmatprep.subr.mxu0 0.0
  %367 = vmatpush1.msra.mxu0 0.0
  %368 = vmatprep.subr.mxu0 0.0
  %369 = vmatpush1.msra.mxu0 0.0
  %370 = vmatprep.subr.mxu0 0.0
  %371 = vmatpush1.msra.mxu0 0.0
  %372 = vmatprep.subr.mxu0 0.0
  %373 = vmatpush1.msra.mxu0 0.0
  %374 = vmatprep.subr.mxu0 0.0
  %375 = vmatpush1.msra.mxu0 0.0
  %376 = vmatprep.subr.mxu0 0.0
  %377 = vmatpush1.msra.mxu0 0.0
  %378 = vmatprep.subr.mxu0 0.0
  %379 = vmatpush1.msra.mxu0 0.0
  %380 = vmatprep.subr.mxu0 0.0
  %381 = vmatpush1.msra.mxu0 0.0
  %382 = vmatprep.subr.mxu0 0.0
  %383 = vmatpush1.msra.mxu0 0.0
  %384 = vmatprep.subr.mxu0 0.0
  %385 = vmatpush1.msra.mxu0 0.0
  %386 = vmatprep.subr.mxu0 0.0
  %387 = vmatpush1.msra.mxu0 0.0
  %388 = vmatprep.subr.mxu0 0.0
  %389 = vmatpush1.msra.mxu0 0.0
  %390 = vmatprep.subr.mxu0 0.0
  %391 = vmatpush1.msra.mxu0 0.0
  %392 = vmatprep.subr.mxu0 0.0
  %393 = vmatpush1.msra.mxu0 0.0
  %394 = vmatprep.subr.mxu0 0.0
  %395 = vmatpush1.msra.mxu0 0.0
  %396 = vmatprep.subr.mxu0 0.0
  %397 = vmatpush1.msra.mxu0 0.0
  %398 = vmatprep.subr.mxu0 0.0
  %399 = vmatpush1.msra.mxu0 0.0
  %400 = vmatprep.subr.mxu0 0.0
  %401 = vmatpush1.msra.mxu0 0.0
  %402 = vmatprep.subr.mxu0 0.0
  %403 = vmatpush1.msra.mxu0 0.0
  %404 = vmatprep.subr.mxu0 0.0
  %405 = vmatpush1.msra.mxu0 0.0
  %406 = vmatprep.subr.mxu0 0.0
  %407 = vmatpush1.msra.mxu0 0.0
  %408 = vmatprep.subr.mxu0 0.0
  %409 = vmatpush1.msra.mxu0 0.0
  %410 = vmatprep.mubr.f32.mxu0 0.0
  %411 = vmatmul.mubr.f32.gmra.mrb[0].mxu0 %v344
  %v412 = vpop.f32.mrb[0].mxu0
  %v413 = vadd.f32 %v341, %v412
  %v414 = vpop.f32.mrb[0].mxu0
  %415 = vdwg.mxu0
  %v416 = vmax.f32 %v413, 0.0
  %s417 = scalar_lea.vmem %s7, 8
  %v418 = vld [vmem:[%s417] sm:$0xff]
  %s419 = scalar_lea.vmem %s8, 8
  %v420 = vld [vmem:[%s419] sm:$0xff]
  %422 = vset.pattern.permute.xlu0 0
  %423 = vperm.xlu0 %422, %v420
  %v424 = vpop.permute.xlu0 %423
  %v427 = vsel %vm254, %v418, 0
  %429 = vmatprep.subr.mxu0 0.0
  %430 = vmatpush1.msra.mxu0 %v416
  %431 = vmatprep.subr.mxu0 0.0
  %432 = vmatpush1.msra.mxu0 0.0
  %433 = vmatprep.subr.mxu0 0.0
  %434 = vmatpush1.msra.mxu0 0.0
  %435 = vmatprep.subr.mxu0 0.0
  %436 = vmatpush1.msra.mxu0 0.0
  %437 = vmatprep.subr.mxu0 0.0
  %438 = vmatpush1.msra.mxu0 0.0
  %439 = vmatprep.subr.mxu0 0.0
  %440 = vmatpush1.msra.mxu0 0.0
  %441 = vmatprep.subr.mxu0 0.0
  %442 = vmatpush1.msra.mxu0 0.0
  %443 = vmatprep.subr.mxu0 0.0
  %444 = vmatpush1.msra.mxu0 0.0
  %445 = vmatprep.subr.mxu0 0.0
  %446 = vmatpush1.msra.mxu0 0.0
  %447 = vmatprep.subr.mxu0 0.0
  %448 = vmatpush1.msra.mxu0 0.0
  %449 = vmatprep.subr.mxu0 0.0
  %450 = vmatpush1.msra.mxu0 0.0
  %451 = vmatprep.subr.mxu0 0.0
  %452 = vmatpush1.msra.mxu0 0.0
  %453 = vmatprep.subr.mxu0 0.0
  %454 = vmatpush1.msra.mxu0 0.0
  %455 = vmatprep.subr.mxu0 0.0
  %456 = vmatpush1.msra.mxu0 0.0
  %457 = vmatprep.subr.mxu0 0.0
  %458 = vmatpush1.msra.mxu0 0.0
  %459 = vmatprep.subr.mxu0 0.0
  %460 = vmatpush1.msra.mxu0 0.0
  %461 = vmatprep.subr.mxu0 0.0
  %462 = vmatpush1.msra.mxu0 0.0
  %463 = vmatprep.subr.mxu0 0.0
  %464 = vmatpush1.msra.mxu0 0.0
  %465 = vmatprep.subr.mxu0 0.0
  %466 = vmatpush1.msra.mxu0 0.0
  %467 = vmatprep.subr.mxu0 0.0
  %468 = vmatpush1.msra.mxu0 0.0
  %469 = vmatprep.subr.mxu0 0.0
  %470 = vmatpush1.msra.mxu0 0.0
  %471 = vmatprep.subr.mxu0 0.0
  %472 = vmatpush1.msra.mxu0 0.0
  %473 = vmatprep.subr.mxu0 0.0
  %474 = vmatpush1.msra.mxu0 0.0
  %475 = vmatprep.subr.mxu0 0.0
  %476 = vmatpush1.msra.mxu0 0.0
  %477 = vmatprep.subr.mxu0 0.0
  %478 = vmatpush1.msra.mxu0 0.0
  %479 = vmatprep.subr.mxu0 0.0
  %480 = vmatpush1.msra.mxu0 0.0
  %481 = vmatprep.subr.mxu0 0.0
  %482 = vmatpush1.msra.mxu0 0.0
  %483 = vmatprep.subr.mxu0 0.0
  %484 = vmatpush1.msra.mxu0 0.0
  %485 = vmatprep.subr.mxu0 0.0
  %486 = vmatpush1.msra.mxu0 0.0
  %487 = vmatprep.subr.mxu0 0.0
  %488 = vmatpush1.msra.mxu0 0.0
  %489 = vmatprep.subr.mxu0 0.0
  %490 = vmatpush1.msra.mxu0 0.0
  %491 = vmatprep.subr.mxu0 0.0
  %492 = vmatpush1.msra.mxu0 0.0
  %493 = vmatprep.mubr.f32.mxu0 0.0
  %494 = vmatmul.mubr.f32.gmra.mrb[0].mxu0 %v427
  %v495 = vpop.f32.mrb[0].mxu0
  %v496 = vadd.f32 %v424, %v495
  %v497 = vpop.f32.mrb[0].mxu0
  %498 = vdwg.mxu0
  %v499 = vadd.f32 %v329, %v496
  %v500 = vmul.f32 %v499, %v67
  %501 = vrot.lane.b32.xlu0 %v500, 4
  %v502 = vpop.permute.xlu0 %501
  %503 = vrot.lane.b32.xlu0 %v500, 124
  %v504 = vpop.permute.xlu0 %503
  %s505 = scalar_lea.vmem %s5, 16
  %v506 = vld [vmem:[%s505] sm:$0xff]
  %s507 = scalar_lea.vmem %s6, 16
  %v508 = vld [vmem:[%s507] sm:$0xff]
  %510 = vset.pattern.permute.xlu0 0
  %511 = vperm.xlu0 %510, %v508
  %v512 = vpop.permute.xlu0 %511
  %v515 = vsel %vm172, %v506, 0
  %517 = vmatprep.subr.mxu0 0.0
  %518 = vmatpush1.msra.mxu0 %v502
  %519 = vmatprep.subr.mxu0 0.0
  %520 = vmatpush1.msra.mxu0 %v500
  %521 = vmatprep.subr.mxu0 0.0
  %522 = vmatpush1.msra.mxu0 %v504
  %523 = vmatprep.subr.mxu0 0.0
  %524 = vmatpush1.msra.mxu0 0.0
  %525 = vmatprep.subr.mxu0 0.0
  %526 = vmatpush1.msra.mxu0 0.0
  %527 = vmatprep.subr.mxu0 0.0
  %528 = vmatpush1.msra.mxu0 0.0
  %529 = vmatprep.subr.mxu0 0.0
  %530 = vmatpush1.msra.mxu0 0.0
  %531 = vmatprep.subr.mxu0 0.0
  %532 = vmatpush1.msra.mxu0 0.0
  %533 = vmatprep.subr.mxu0 0.0
  %534 = vmatpush1.msra.mxu0 0.0
  %535 = vmatprep.subr.mxu0 0.0
  %536 = vmatpush1.msra.mxu0 0.0
  %537 = vmatprep.subr.mxu0 0.0
  %538 = vmatpush1.msra.mxu0 0.0
  %539 = vmatprep.subr.mxu0 0.0
  %540 = vmatpush1.msra.mxu0 0.0
  %541 = vmatprep.subr.mxu0 0.0
  %542 = vmatpush1.msra.mxu0 0.0
  %543 = vmatprep.subr.mxu0 0.0
  %544 = vmatpush1.msra.mxu0 0.0
  %545 = vmatprep.subr.mxu0 0.0
  %546 = vmatpush1.msra.mxu0 0.0
  %547 = vmatprep.subr.mxu0 0.0
  %548 = vmatpush1.msra.mxu0 0.0
  %549 = vmatprep.subr.mxu0 0.0
  %550 = vmatpush1.msra.mxu0 0.0
  %551 = vmatprep.subr.mxu0 0.0
  %552 = vmatpush1.msra.mxu0 0.0
  %553 = vmatprep.subr.mxu0 0.0
  %554 = vmatpush1.msra.mxu0 0.0
  %555 = vmatprep.subr.mxu0 0.0
  %556 = vmatpush1.msra.mxu0 0.0
  %557 = vmatprep.subr.mxu0 0.0
  %558 = vmatpush1.msra.mxu0 0.0
  %559 = vmatprep.subr.mxu0 0.0
  %560 = vmatpush1.msra.mxu0 0.0
  %561 = vmatprep.subr.mxu0 0.0
  %562 = vmatpush1.msra.mxu0 0.0
  %563 = vmatprep.subr.mxu0 0.0
  %564 = vmatpush1.msra.mxu0 0.0
  %565 = vmatprep.subr.mxu0 0.0
  %566 = vmatpush1.msra.mxu0 0.0
  %567 = vmatprep.subr.mxu0 0.0
  %568 = vmatpush1.msra.mxu0 0.0
  %569 = vmatprep.subr.mxu0 0.0
  %570 = vmatpush1.msra.mxu0 0.0
  %571 = vmatprep.subr.mxu0 0.0
  %572 = vmatpush1.msra.mxu0 0.0
  %573 = vmatprep.subr.mxu0 0.0
  %574 = vmatpush1.msra.mxu0 0.0
  %575 = vmatprep.subr.mxu0 0.0
  %576 = vmatpush1.msra.mxu0 0.0
  %577 = vmatprep.subr.mxu0 0.0
  %578 = vmatpush1.msra.mxu0 0.0
  %579 = vmatprep.subr.mxu0 0.0
  %580 = vmatpush1.msra.mxu0 0.0
  %581 = vmatprep.mubr.f32.mxu0 0.0
  %582 = vmatmul.mubr.f32.gmra.mrb[0].mxu0 %v515
  %v583 = vpop.f32.mrb[0].mxu0
  %v584 = vadd.f32 %v512, %v583
  %v585 = vpop.f32.mrb[0].mxu0
  %586 = vdwg.mxu0
  %v587 = vmax.f32 %v584, 0.0
  %s588 = scalar_lea.vmem %s7, 16
  %v589 = vld [vmem:[%s588] sm:$0xff]
  %s590 = scalar_lea.vmem %s8, 16
  %v591 = vld [vmem:[%s590] sm:$0xff]
  %593 = vset.pattern.permute.xlu0 0
  %594 = vperm.xlu0 %593, %v591
  %v595 = vpop.permute.xlu0 %594
  %v598 = vsel %vm254, %v589, 0
  %600 = vmatprep.subr.mxu0 0.0
  %601 = vmatpush1.msra.mxu0 %v587
  %602 = vmatprep.subr.mxu0 0.0
  %603 = vmatpush1.msra.mxu0 0.0
  %604 = vmatprep.subr.mxu0 0.0
  %605 = vmatpush1.msra.mxu0 0.0
  %606 = vmatprep.subr.mxu0 0.0
  %607 = vmatpush1.msra.mxu0 0.0
  %608 = vmatprep.subr.mxu0 0.0
  %609 = vmatpush1.msra.mxu0 0.0
  %610 = vmatprep.subr.mxu0 0.0
  %611 = vmatpush1.msra.mxu0 0.0
  %612 = vmatprep.subr.mxu0 0.0
  %613 = vmatpush1.msra.mxu0 0.0
  %614 = vmatprep.subr.mxu0 0.0
  %615 = vmatpush1.msra.mxu0 0.0
  %616 = vmatprep.subr.mxu0 0.0
  %617 = vmatpush1.msra.mxu0 0.0
  %618 = vmatprep.subr.mxu0 0.0
  %619 = vmatpush1.msra.mxu0 0.0
  %620 = vmatprep.subr.mxu0 0.0
  %621 = vmatpush1.msra.mxu0 0.0
  %622 = vmatprep.subr.mxu0 0.0
  %623 = vmatpush1.msra.mxu0 0.0
  %624 = vmatprep.subr.mxu0 0.0
  %625 = vmatpush1.msra.mxu0 0.0
  %626 = vmatprep.subr.mxu0 0.0
  %627 = vmatpush1.msra.mxu0 0.0
  %628 = vmatprep.subr.mxu0 0.0
  %629 = vmatpush1.msra.mxu0 0.0
  %630 = vmatprep.subr.mxu0 0.0
  %631 = vmatpush1.msra.mxu0 0.0
  %632 = vmatprep.subr.mxu0 0.0
  %633 = vmatpush1.msra.mxu0 0.0
  %634 = vmatprep.subr.mxu0 0.0
  %635 = vmatpush1.msra.mxu0 0.0
  %636 = vmatprep.subr.mxu0 0.0
  %637 = vmatpush1.msra.mxu0 0.0
  %638 = vmatprep.subr.mxu0 0.0
  %639 = vmatpush1.msra.mxu0 0.0
  %640 = vmatprep.subr.mxu0 0.0
  %641 = vmatpush1.msra.mxu0 0.0
  %642 = vmatprep.subr.mxu0 0.0
  %643 = vmatpush1.msra.mxu0 0.0
  %644 = vmatprep.subr.mxu0 0.0
  %645 = vmatpush1.msra.mxu0 0.0
  %646 = vmatprep.subr.mxu0 0.0
  %647 = vmatpush1.msra.mxu0 0.0
  %648 = vmatprep.subr.mxu0 0.0
  %649 = vmatpush1.msra.mxu0 0.0
  %650 = vmatprep.subr.mxu0 0.0
  %651 = vmatpush1.msra.mxu0 0.0
  %652 = vmatprep.subr.mxu0 0.0
  %653 = vmatpush1.msra.mxu0 0.0
  %654 = vmatprep.subr.mxu0 0.0
  %655 = vmatpush1.msra.mxu0 0.0
  %656 = vmatprep.subr.mxu0 0.0
  %657 = vmatpush1.msra.mxu0 0.0
  %658 = vmatprep.subr.mxu0 0.0
  %659 = vmatpush1.msra.mxu0 0.0
  %660 = vmatprep.subr.mxu0 0.0
  %661 = vmatpush1.msra.mxu0 0.0
  %662 = vmatprep.subr.mxu0 0.0
  %663 = vmatpush1.msra.mxu0 0.0
  %664 = vmatprep.mubr.f32.mxu0 0.0
  %665 = vmatmul.mubr.f32.gmra.mrb[0].mxu0 %v598
  %v666 = vpop.f32.mrb[0].mxu0
  %v667 = vadd.f32 %v595, %v666
  %v668 = vpop.f32.mrb[0].mxu0
  %669 = vdwg.mxu0
  %v670 = vadd.f32 %v500, %v667
  %v671 = vmul.f32 %v670, %v67
  %v672 = vld [vmem:[%s9] sm:$0x1f]
  %v673 = vld [vmem:[%s10] sm:$0x1f]
  %675 = vset.pattern.permute.xlu0 0
  %676 = vperm.xlu0 %675, %v673
  %v677 = vpop.permute.xlu0 %676
  %v680 = vsel %vm254, %v672, 0
  %682 = vmatprep.subr.mxu0 0.0
  %683 = vmatpush1.msra.mxu0 %v671
  %684 = vmatprep.subr.mxu0 0.0
  %685 = vmatpush1.msra.mxu0 0.0
  %686 = vmatprep.subr.mxu0 0.0
  %687 = vmatpush1.msra.mxu0 0.0
  %688 = vmatprep.subr.mxu0 0.0
  %689 = vmatpush1.msra.mxu0 0.0
  %690 = vmatprep.subr.mxu0 0.0
  %691 = vmatpush1.msra.mxu0 0.0
  %692 = vmatprep.subr.mxu0 0.0
  %693 = vmatpush1.msra.mxu0 0.0
  %694 = vmatprep.subr.mxu0 0.0
  %695 = vmatpush1.msra.mxu0 0.0
  %696 = vmatprep.subr.mxu0 0.0
  %697 = vmatpush1.msra.mxu0 0.0
  %698 = vmatprep.subr.mxu0 0.0
  %699 = vmatpush1.msra.mxu0 0.0
  %700 = vmatprep.subr.mxu0 0.0
  %701 = vmatpush1.msra.mxu0 0.0
  %702 = vmatprep.subr.mxu0 0.0
  %703 = vmatpush1.msra.mxu0 0.0
  %704 = vmatprep.subr.mxu0 0.0
  %705 = vmatpush1.msra.mxu0 0.0
  %706 = vmatprep.subr.mxu0 0.0
  %707 = vmatpush1.msra.mxu0 0.0
  %708 = vmatprep.subr.mxu0 0.0
  %709 = vmatpush1.msra.mxu0 0.0
  %710 = vmatprep.subr.mxu0 0.0
  %711 = vmatpush1.msra.mxu0 0.0
  %712 = vmatprep.subr.mxu0 0.0
  %713 = vmatpush1.msra.mxu0 0.0
  %714 = vmatprep.subr.mxu0 0.0
  %715 = vmatpush1.msra.mxu0 0.0
  %716 = vmatprep.subr.mxu0 0.0
  %717 = vmatpush1.msra.mxu0 0.0
  %718 = vmatprep.subr.mxu0 0.0
  %719 = vmatpush1.msra.mxu0 0.0
  %720 = vmatprep.subr.mxu0 0.0
  %721 = vmatpush1.msra.mxu0 0.0
  %722 = vmatprep.subr.mxu0 0.0
  %723 = vmatpush1.msra.mxu0 0.0
  %724 = vmatprep.subr.mxu0 0.0
  %725 = vmatpush1.msra.mxu0 0.0
  %726 = vmatprep.subr.mxu0 0.0
  %727 = vmatpush1.msra.mxu0 0.0
  %728 = vmatprep.subr.mxu0 0.0
  %729 = vmatpush1.msra.mxu0 0.0
  %730 = vmatprep.subr.mxu0 0.0
  %731 = vmatpush1.msra.mxu0 0.0
  %732 = vmatprep.subr.mxu0 0.0
  %733 = vmatpush1.msra.mxu0 0.0
  %734 = vmatprep.subr.mxu0 0.0
  %735 = vmatpush1.msra.mxu0 0.0
  %736 = vmatprep.subr.mxu0 0.0
  %737 = vmatpush1.msra.mxu0 0.0
  %738 = vmatprep.subr.mxu0 0.0
  %739 = vmatpush1.msra.mxu0 0.0
  %740 = vmatprep.subr.mxu0 0.0
  %741 = vmatpush1.msra.mxu0 0.0
  %742 = vmatprep.subr.mxu0 0.0
  %743 = vmatpush1.msra.mxu0 0.0
  %744 = vmatprep.subr.mxu0 0.0
  %745 = vmatpush1.msra.mxu0 0.0
  %746 = vmatprep.mubr.f32.mxu0 0.0
  %747 = vmatmul.mubr.f32.gmra.mrb[0].mxu0 %v680
  %v748 = vpop.f32.mrb[0].mxu0
  %v749 = vadd.f32 %v677, %v748
  %v750 = vpop.f32.mrb[0].mxu0
  %751 = vdwg.mxu0
  %v752 = vmul.f32 %v749, %v67
  %753 = vst [vmem:[%s11] sm:$0xff] %v671
  %754 = vst [vmem:[%s12] sm:$0x1f] %v752
  // Predicated region
  $region46: #{multi_stage_forward.7} parent=0 // pred_check
    _
  $region47: #{multi_stage_forward.7} parent=0 // pred_check_branch
    %756 = sbr.rel (0) target = $region49
  $region48: #{multi_stage_forward.7} parent=0 // pred_region
    _
  $region49: #{multi_stage_forward.7} parent=0 // pred_fallthru
    _
  // Predicated region
  $region50: #{multi_stage_forward.7} parent=0 // pred_check
    _
  $region51: #{multi_stage_forward.7} parent=0 // pred_check_branch
    %758 = sbr.rel (0) target = $region53
  $region52: #{multi_stage_forward.7} parent=0 // pred_region
    _
  $region53: #{multi_stage_forward.7} parent=0 // pred_fallthru
    _
  // Predicated region
  $region54: #{multi_stage_forward.7} parent=0 // pred_check
    _
  $region55: #{multi_stage_forward.7} parent=0 // pred_check_branch
    %760 = sbr.rel (0) target = $region57
  $region56: #{multi_stage_forward.7} parent=0 // pred_region
    _
  $region57: #{multi_stage_forward.7} parent=0 // pred_fallthru
    _
  // Predicated region
  $region58: #{multi_stage_forward.7} parent=0 // pred_check
    _
  $region59: #{multi_stage_forward.7} parent=0 // pred_check_branch
    %762 = sbr.rel (0) target = $region61
  $region60: #{multi_stage_forward.7} parent=0 // pred_region
    _
  $region61: #{multi_stage_forward.7} parent=0 // pred_fallthru
    _

</llo_original>
